<compile_context>
chip_gen: v7x
topology: tpu7x:2x2x1
jax: 0.10.0
libtpu: 0.0.40
codegen_flags: <defaults>
</compile_context>

<pallas_src>
import math

import numpy as np
import jax
import jax.numpy as jnp
from jax.experimental import pallas as pl
from jax.experimental.pallas import tpu as pltpu


# -------------------- the single fused Pallas kernel --------------------

def _ffno_fused_kernel(x_ref, win_ref, bin_ref, mw_ref, lh_ref, rh_ref,
                       w0_ref, b0_ref, w1_ref, b1_ref,
                       h1w_ref, h1b_ref, h2w_ref, h2b_ref, o_ref):
    f32 = jnp.float32
    n_layers = mw_ref.shape[0]
    n_terms = lh_ref.shape[0]          # 2 * modes  (re/im per mode)
    L = mw_ref.shape[1]                # W * width

    # in_proj (input Normalizer + position features folded offline)
    h = jnp.dot(x_ref[...], win_ref[...],
                preferred_element_type=f32) + bin_ref[...]

    b = h
    for l in range(n_layers):
        # W-axis spectral operator: one fully-composed right matmul.
        xy = jnp.dot(h, mw_ref[l], preferred_element_type=f32)

        # H-axis spectral operator as a sum of Kronecker-factored terms:
        #   xx = sum_j (I_B (x) A_j^T) @ h @ (I_W (x) w_j)
        # -> one wide right matmul producing all per-term channel mixes, then
        #    2*modes small left matmuls; no relayout / transpose needed.
        v = jnp.dot(h, rh_ref[l], preferred_element_type=f32)  # (R, n_terms*L)
        xx = jnp.zeros_like(xy)
        for j in range(n_terms):
            xx = xx + jnp.dot(lh_ref[j], v[:, j * L:(j + 1) * L],
                              preferred_element_type=f32)
        y = xy + xx

        # backcast FeedForward (linear -> ReLU -> linear) + residual
        t = jnp.dot(y, w0_ref[l], preferred_element_type=f32) + b0_ref[l]
        t = jnp.maximum(t, 0.0)
        b = jnp.dot(t, w1_ref[l], preferred_element_type=f32) + b1_ref[l]
        h = h + b

    # output head (width -> 128 -> out_ch) with Normalizer.inverse folded in;
    # kept lane-dense in the (B*H, W*channels) row layout.
    t = jnp.dot(b, h1w_ref[...], preferred_element_type=f32) + h1b_ref[...]
    o_ref[...] = jnp.dot(t, h2w_ref[...],
                         preferred_element_type=f32) + h2b_ref[...]


def ffno_forward(x, params):
    """x: (B, T, H, W, C) -> (B, H, W, time_future * out_field_channels)."""
    B, T, H, W, C = x.shape
    out_cols = params['h2w'].shape[1]
    out_ch = out_cols // W

    # _build_features layout: 'b t h w c -> b h w (t c)'; row layout
    # (B*H, W*T*C) is lane-dense (128 wide here).  Normalization / position
    # features are folded into the kernel's in_proj weights.
    x_rows = jnp.transpose(x, (0, 2, 3, 1, 4)).reshape(B * H, W * T * C)

    vmem = lambda: pl.BlockSpec(memory_space=pltpu.MemorySpace.VMEM)
    fn = pl.pallas_call(
        _ffno_fused_kernel,
        out_shape=jax.ShapeDtypeStruct((B * H, out_cols), jnp.float32),
        in_specs=[vmem() for _ in range(14)],
        out_specs=vmem(),
    )
    out_rows = fn(x_rows, params['win'], params['bin'], params['mw'],
                  params['lh'], params['rh'],
                  params['ff_w0'], params['ff_b0'],
                  params['ff_w1'], params['ff_b1'],
                  params['h1w'], params['h1b'], params['h2w'], params['h2b'])

    # The reference's final permute/reshape chain is the identity on
    # (B, H, W, out_ch); only the free reshape remains.
    return out_rows.reshape(B, H, W, out_ch)


# -------------------- offline spectral-operator construction --------------------
# torch.fft.rfft(..., norm='ortho') truncated to the first K modes.

def make_rfft_mats(N, K):
    n = np.arange(N)[:, None]
    k = np.arange(K)[None, :]
    ang = 2.0 * np.pi * n * k / N
    Fr = np.cos(ang) / np.sqrt(N)
    Fi = -np.sin(ang) / np.sqrt(N)
    return Fr, Fi                                 # (N, K) float64


# torch.fft.irfft(out_ft, n=N, norm='ortho') where only the first K modes are
# non-zero.  irfft ignores the imaginary parts of the DC (and Nyquist) bins —
# encoded by zeroing those rows of Gi.
def make_irfft_mats(N, K):
    k = np.arange(K)[:, None]
    n = np.arange(N)[None, :]
    ang = 2.0 * np.pi * k * n / N
    special = (k == 0) | ((N % 2 == 0) & (k == N // 2))
    c = np.where(special, 1.0, 2.0)
    Gr = c * np.cos(ang) / np.sqrt(N)
    Gi = np.where(special, 0.0, -c * np.sin(ang) / np.sqrt(N))
    return Gr, Gi                                 # (K, N) float64


def compose_spectral_operator(Fr, Fi, wr, wi, Gr, Gi):
    """rfft (K modes) -> complex channel mix -> irfft composed into one real
    matrix of shape (L*I, L*O) acting on rows laid out position-major /
    channel-minor."""
    M = (np.einsum('nk,kio,kp->nipo', Fr, wr, Gr)
         + np.einsum('nk,kio,kp->nipo', Fr, wi, Gi)
         - np.einsum('nk,kio,kp->nipo', Fi, wi, Gr)
         + np.einsum('nk,kio,kp->nipo', Fi, wr, Gi))
    L, I, L2, O = M.shape
    return M.reshape(L * I, L2 * O)


# -------------------- deterministic parameter construction --------------------

def init_params(key, *, time_history, field_channels, out_channels, width,
                modes, n_layers, factor, B, H, W):
    T, C = time_history, field_channels
    in_channels = T * C + 2                       # use_position=True
    keys = iter(jax.random.split(key, 8 * n_layers + 16))
    p = {}

    def linear_init(in_f, out_f):
        kw, kb = next(keys), next(keys)
        bound = 1.0 / math.sqrt(in_f)
        w = np.asarray(jax.random.uniform(kw, (in_f, out_f), jnp.float32,
                                          -bound, bound), np.float64)
        b = np.asarray(jax.random.uniform(kb, (out_f,), jnp.float32,
                                          -bound, bound), np.float64)
        return w, b

    eyeW = np.eye(W)
    eyeB = np.eye(B)

    # Normalizer buffers of a fresh module in eval: mean = 0, std = 1e-8.
    mean = np.zeros((C,), np.float64)
    std = np.full((C,), 1e-8, np.float64)

    # position grid, standardized (torch.std is unbiased)
    gh = np.linspace(0.0, 1.0, H)
    gw = np.linspace(0.0, 1.0, W)
    pos = np.stack(np.meshgrid(gh, gw, indexing='ij'), axis=-1)   # (H, W, 2)
    flat = pos.reshape(-1, 2)
    pos_std = (pos - flat.mean(axis=0)) / flat.std(axis=0, ddof=1)

    # in_proj with the Normalizer and position features folded in:
    #   feats = [ (x - mean)/std  (T*C cols),  pos_std (2 cols) ]
    #   in_proj(feats) = x @ (W_f/std) + [b_in + pos_std@W_p - (mean/std)@W_f]
    w_in, b_in = linear_init(in_channels, width)
    W_f, W_p = w_in[:T * C], w_in[T * C:]
    std_rep = np.tile(std, T)
    mean_rep = np.tile(mean, T)
    W_f_eff = W_f / std_rep[:, None]
    bias_pix = (b_in[None, None, :] + pos_std @ W_p
                - (mean_rep / std_rep) @ W_f)                     # (H, W, width)
    p['win'] = jnp.asarray(np.kron(eyeW, W_f_eff), jnp.float32)   # (W*T*C, W*width)
    p['bin'] = jnp.asarray(np.tile(bias_pix.reshape(H, W * width), (B, 1)),
                           jnp.float32)                           # (B*H, W*width)

    # DFT / inverse-DFT matrices (float64, offline only)
    FrW, FiW = make_rfft_mats(W, modes)
    GrW, GiW = make_irfft_mats(W, modes)
    FrH, FiH = make_rfft_mats(H, modes)
    GrH, GiH = make_irfft_mats(H, modes)

    # H-axis spatial factors per (mode, re/im) -- layer independent:
    #   MH[(h,i),(h',o)] = sum_k A_k^r[h,h'] wr_k[i,o] + A_k^i[h,h'] wi_k[i,o]
    A_list = []
    for k in range(modes):
        A_r = np.outer(FrH[:, k], GrH[k, :]) + np.outer(FiH[:, k], GiH[k, :])
        A_i = np.outer(FrH[:, k], GiH[k, :]) - np.outer(FiH[:, k], GrH[k, :])
        A_list += [A_r, A_i]
    p['lh'] = jnp.asarray(np.stack([np.kron(eyeB, A.T) for A in A_list]),
                          jnp.float32)                 # (2*modes, B*H, B*H)

    # xavier_normal_ fan computation on the torch shape (I, O, modes, 2)
    fstd = math.sqrt(2.0 / (width * modes * 2 + width * modes * 2))

    mw_l, rh_l, w0_l, b0_l, w1_l, b1_l = [], [], [], [], [], []
    for _ in range(n_layers):
        # fourier_weight[0] -> W axis (last dim), fourier_weight[1] -> H axis
        wW = fstd * np.asarray(jax.random.normal(
            next(keys), (width, width, modes, 2), jnp.float32), np.float64)
        wH = fstd * np.asarray(jax.random.normal(
            next(keys), (width, width, modes, 2), jnp.float32), np.float64)
        wrW = wW[..., 0].transpose(2, 0, 1)            # (K, I, O)
        wiW = wW[..., 1].transpose(2, 0, 1)
        wrH = wH[..., 0].transpose(2, 0, 1)
        wiH = wH[..., 1].transpose(2, 0, 1)

        # W axis: fully composed single right-matmul operator
        mw_l.append(compose_spectral_operator(FrW, FiW, wrW, wiW, GrW, GiW))

        # H axis: per-(mode, re/im) channel factors, kron'd over W, concatenated
        ch_list = []
        for k in range(modes):
            ch_list += [wrH[k], wiH[k]]
        # offline consistency check of the Kronecker regrouping
        mh_full = compose_spectral_operator(FrH, FiH, wrH, wiH, GrH, GiH)
        mh_sum = sum(np.kron(A_list[j], ch_list[j]) for j in range(2 * modes))
        assert np.allclose(mh_full, mh_sum), "H-axis decomposition mismatch"
        rh_l.append(np.concatenate([np.kron(eyeW, c) for c in ch_list], axis=1))

        # backcast FeedForward (n_ff_layers=2, layer_norm=False, dropout=0),
        # block-diagonal in the (B*H, W*width) row layout.
        w0, b0 = linear_init(width, width * factor)
        w1, b1 = linear_init(width * factor, width)
        w0_l.append(np.kron(eyeW, w0))
        b0_l.append(np.tile(b0, W)[None])
        w1_l.append(np.kron(eyeW, w1))
        b1_l.append(np.tile(b1, W)[None])

    p['mw'] = jnp.asarray(np.stack(mw_l), jnp.float32)      # (nl, L, L)
    p['rh'] = jnp.asarray(np.stack(rh_l), jnp.float32)      # (nl, L, 2*modes*L)
    p['ff_w0'] = jnp.asarray(np.stack(w0_l), jnp.float32)   # (nl, L, L*factor)
    p['ff_b0'] = jnp.asarray(np.stack(b0_l), jnp.float32)   # (nl, 1, L*factor)
    p['ff_w1'] = jnp.asarray(np.stack(w1_l), jnp.float32)   # (nl, L*factor, L)
    p['ff_b1'] = jnp.asarray(np.stack(b1_l), jnp.float32)   # (nl, 1, L)

    # output head (width -> 128 -> out_ch) with Normalizer.inverse folded in,
    # kron'd over W so the head stays lane-dense in the row layout.
    out1_w, out1_b = linear_init(width, 128)
    out2_w, out2_b = linear_init(128, out_channels)
    out2_w_eff = out2_w * std[None, :]           # requires out_channels == C
    out2_b_eff = out2_b * std + mean
    p['h1w'] = jnp.asarray(np.kron(eyeW, out1_w), jnp.float32)      # (L, W*128)
    p['h1b'] = jnp.asarray(np.tile(out1_b, W)[None], jnp.float32)   # (1, W*128)
    p['h2w'] = jnp.asarray(np.kron(eyeW, out2_w_eff), jnp.float32)  # (W*128, W*out_ch)
    p['h2b'] = jnp.asarray(np.tile(out2_b_eff, W)[None], jnp.float32)
    return p


# -------------------- main --------------------

if __name__ == "__main__":
    B, T, Hs, Ws = 2, 2, 16, 16
    n_in_s, n_in_v = 2, 1
    n_out_s, n_out_v = 2, 1
    time_future = 1
    C = n_in_s + 2 * n_in_v                                  # 4 field channels
    out_channels = time_future * (n_out_s + 2 * n_out_v)     # 4
    assert out_channels == C   # required by Normalizer.inverse channel indexing
    modes, width, n_layers, factor = 4, 8, 2, 2

    key = jax.random.PRNGKey(0)
    kx, kp = jax.random.split(key)
    x = jax.random.normal(kx, (B, T, Hs, Ws, C), dtype=jnp.float32)

    params = init_params(kp, time_history=T, field_channels=C,
                         out_channels=out_channels, width=width, modes=modes,
                         n_layers=n_layers, factor=factor, B=B, H=Hs, W=Ws)

    out = jax.jit(ffno_forward)(x, params)
    out = jax.block_until_ready(out)
    assert out.shape == (B, Hs, Ws, out_channels), out.shape
    assert bool(jnp.all(jnp.isfinite(out)))
    print("KERNEL_OK")
</pallas_src>

<mosaic_0001>
module attributes {stable_mosaic.version = 11 : i64} {
  func.func @_ffno_fused_kernel(%arg0: memref<32x128xf32, #tpu.memory_space<vmem>>, %arg1: memref<128x128xf32, #tpu.memory_space<vmem>>, %arg2: memref<32x128xf32, #tpu.memory_space<vmem>>, %arg3: memref<2x128x128xf32, #tpu.memory_space<vmem>>, %arg4: memref<8x32x32xf32, #tpu.memory_space<vmem>>, %arg5: memref<2x128x1024xf32, #tpu.memory_space<vmem>>, %arg6: memref<2x128x256xf32, #tpu.memory_space<vmem>>, %arg7: memref<2x1x256xf32, #tpu.memory_space<vmem>>, %arg8: memref<2x256x128xf32, #tpu.memory_space<vmem>>, %arg9: memref<2x1x128xf32, #tpu.memory_space<vmem>>, %arg10: memref<128x2048xf32, #tpu.memory_space<vmem>>, %arg11: memref<1x2048xf32, #tpu.memory_space<vmem>>, %arg12: memref<2048x64xf32, #tpu.memory_space<vmem>>, %arg13: memref<1x64xf32, #tpu.memory_space<vmem>>, %arg14: memref<32x64xf32, #tpu.memory_space<vmem>>) attributes {dimension_semantics = [], scalar_prefetch = 0 : i64, scratch_operands = 0 : i64, tpu.core_type = #tpu.core_type<tc>} {
    %c0 = arith.constant 0 : index
    %c0_0 = arith.constant 0 : index
    %0 = vector.load %arg0[%c0, %c0_0] : memref<32x128xf32, #tpu.memory_space<vmem>>, vector<32x128xf32>
    %c0_1 = arith.constant 0 : index
    %c0_2 = arith.constant 0 : index
    %1 = vector.load %arg1[%c0_1, %c0_2] : memref<128x128xf32, #tpu.memory_space<vmem>>, vector<128x128xf32>
    %cst = arith.constant dense<0.000000e+00> : vector<32x128xf32>
    %2 = tpu.matmul %0, %1, %cst {dimension_numbers = #tpu.dot_dimension_numbers<[1], [0], [0], [1], [0, 0, 1, 1], [], []>} : vector<32x128xf32>, vector<128x128xf32>, vector<32x128xf32> -> vector<32x128xf32>
    %c0_3 = arith.constant 0 : index
    %c0_4 = arith.constant 0 : index
    %3 = vector.load %arg2[%c0_3, %c0_4] : memref<32x128xf32, #tpu.memory_space<vmem>>, vector<32x128xf32>
    %4 = arith.addf %2, %3 : vector<32x128xf32>
    %c0_5 = arith.constant 0 : index
    %c0_6 = arith.constant 0 : index
    %c0_7 = arith.constant 0 : index
    %5 = vector.load %arg3[%c0_5, %c0_6, %c0_7] : memref<2x128x128xf32, #tpu.memory_space<vmem>>, vector<1x128x128xf32>
    %6 = vector.shape_cast %5 : vector<1x128x128xf32> to vector<128x128xf32>
    %cst_8 = arith.constant dense<0.000000e+00> : vector<32x128xf32>
    %7 = tpu.matmul %4, %6, %cst_8 {dimension_numbers = #tpu.dot_dimension_numbers<[1], [0], [0], [1], [0, 0, 1, 1], [], []>} : vector<32x128xf32>, vector<128x128xf32>, vector<32x128xf32> -> vector<32x128xf32>
    %c0_9 = arith.constant 0 : index
    %c0_10 = arith.constant 0 : index
    %c0_11 = arith.constant 0 : index
    %8 = vector.load %arg5[%c0_9, %c0_10, %c0_11] : memref<2x128x1024xf32, #tpu.memory_space<vmem>>, vector<1x128x1024xf32>
    %9 = vector.shape_cast %8 : vector<1x128x1024xf32> to vector<128x1024xf32>
    %cst_12 = arith.constant dense<0.000000e+00> : vector<32x1024xf32>
    %10 = tpu.matmul %4, %9, %cst_12 {dimension_numbers = #tpu.dot_dimension_numbers<[1], [0], [0], [1], [0, 0, 1, 1], [], []>} : vector<32x128xf32>, vector<128x1024xf32>, vector<32x1024xf32> -> vector<32x1024xf32>
    %cst_13 = arith.constant 0.000000e+00 : f32
    %11 = vector.broadcast %cst_13 : f32 to vector<32x128xf32>
    %c0_14 = arith.constant 0 : index
    %c0_15 = arith.constant 0 : index
    %c0_16 = arith.constant 0 : index
    %12 = vector.load %arg4[%c0_14, %c0_15, %c0_16] : memref<8x32x32xf32, #tpu.memory_space<vmem>>, vector<1x32x32xf32>
    %13 = vector.shape_cast %12 : vector<1x32x32xf32> to vector<32x32xf32>
    %14 = vector.extract_strided_slice %10 {offsets = [0, 0], sizes = [32, 128], strides = [1, 1]} : vector<32x1024xf32> to vector<32x128xf32>
    %cst_17 = arith.constant dense<0.000000e+00> : vector<32x128xf32>
    %15 = tpu.matmul %13, %14, %cst_17 {dimension_numbers = #tpu.dot_dimension_numbers<[1], [0], [0], [1], [0, 0, 1, 1], [], []>} : vector<32x32xf32>, vector<32x128xf32>, vector<32x128xf32> -> vector<32x128xf32>
    %16 = arith.addf %11, %15 : vector<32x128xf32>
    %c1 = arith.constant 1 : index
    %c0_18 = arith.constant 0 : index
    %c0_19 = arith.constant 0 : index
    %17 = vector.load %arg4[%c1, %c0_18, %c0_19] : memref<8x32x32xf32, #tpu.memory_space<vmem>>, vector<1x32x32xf32>
    %18 = vector.shape_cast %17 : vector<1x32x32xf32> to vector<32x32xf32>
    %19 = vector.extract_strided_slice %10 {offsets = [0, 128], sizes = [32, 128], strides = [1, 1]} : vector<32x1024xf32> to vector<32x128xf32>
    %cst_20 = arith.constant dense<0.000000e+00> : vector<32x128xf32>
    %20 = tpu.matmul %18, %19, %cst_20 {dimension_numbers = #tpu.dot_dimension_numbers<[1], [0], [0], [1], [0, 0, 1, 1], [], []>} : vector<32x32xf32>, vector<32x128xf32>, vector<32x128xf32> -> vector<32x128xf32>
    %21 = arith.addf %16, %20 : vector<32x128xf32>
    %c2 = arith.constant 2 : index
    %c0_21 = arith.constant 0 : index
    %c0_22 = arith.constant 0 : index
    %22 = vector.load %arg4[%c2, %c0_21, %c0_22] : memref<8x32x32xf32, #tpu.memory_space<vmem>>, vector<1x32x32xf32>
    %23 = vector.shape_cast %22 : vector<1x32x32xf32> to vector<32x32xf32>
    %24 = vector.extract_strided_slice %10 {offsets = [0, 256], sizes = [32, 128], strides = [1, 1]} : vector<32x1024xf32> to vector<32x128xf32>
    %cst_23 = arith.constant dense<0.000000e+00> : vector<32x128xf32>
    %25 = tpu.matmul %23, %24, %cst_23 {dimension_numbers = #tpu.dot_dimension_numbers<[1], [0], [0], [1], [0, 0, 1, 1], [], []>} : vector<32x32xf32>, vector<32x128xf32>, vector<32x128xf32> -> vector<32x128xf32>
    %26 = arith.addf %21, %25 : vector<32x128xf32>
    %c3 = arith.constant 3 : index
    %c0_24 = arith.constant 0 : index
    %c0_25 = arith.constant 0 : index
    %27 = vector.load %arg4[%c3, %c0_24, %c0_25] : memref<8x32x32xf32, #tpu.memory_space<vmem>>, vector<1x32x32xf32>
    %28 = vector.shape_cast %27 : vector<1x32x32xf32> to vector<32x32xf32>
    %29 = vector.extract_strided_slice %10 {offsets = [0, 384], sizes = [32, 128], strides = [1, 1]} : vector<32x1024xf32> to vector<32x128xf32>
    %cst_26 = arith.constant dense<0.000000e+00> : vector<32x128xf32>
    %30 = tpu.matmul %28, %29, %cst_26 {dimension_numbers = #tpu.dot_dimension_numbers<[1], [0], [0], [1], [0, 0, 1, 1], [], []>} : vector<32x32xf32>, vector<32x128xf32>, vector<32x128xf32> -> vector<32x128xf32>
    %31 = arith.addf %26, %30 : vector<32x128xf32>
    %c4 = arith.constant 4 : index
    %c0_27 = arith.constant 0 : index
    %c0_28 = arith.constant 0 : index
    %32 = vector.load %arg4[%c4, %c0_27, %c0_28] : memref<8x32x32xf32, #tpu.memory_space<vmem>>, vector<1x32x32xf32>
    %33 = vector.shape_cast %32 : vector<1x32x32xf32> to vector<32x32xf32>
    %34 = vector.extract_strided_slice %10 {offsets = [0, 512], sizes = [32, 128], strides = [1, 1]} : vector<32x1024xf32> to vector<32x128xf32>
    %cst_29 = arith.constant dense<0.000000e+00> : vector<32x128xf32>
    %35 = tpu.matmul %33, %34, %cst_29 {dimension_numbers = #tpu.dot_dimension_numbers<[1], [0], [0], [1], [0, 0, 1, 1], [], []>} : vector<32x32xf32>, vector<32x128xf32>, vector<32x128xf32> -> vector<32x128xf32>
    %36 = arith.addf %31, %35 : vector<32x128xf32>
    %c5 = arith.constant 5 : index
    %c0_30 = arith.constant 0 : index
    %c0_31 = arith.constant 0 : index
    %37 = vector.load %arg4[%c5, %c0_30, %c0_31] : memref<8x32x32xf32, #tpu.memory_space<vmem>>, vector<1x32x32xf32>
    %38 = vector.shape_cast %37 : vector<1x32x32xf32> to vector<32x32xf32>
    %39 = vector.extract_strided_slice %10 {offsets = [0, 640], sizes = [32, 128], strides = [1, 1]} : vector<32x1024xf32> to vector<32x128xf32>
    %cst_32 = arith.constant dense<0.000000e+00> : vector<32x128xf32>
    %40 = tpu.matmul %38, %39, %cst_32 {dimension_numbers = #tpu.dot_dimension_numbers<[1], [0], [0], [1], [0, 0, 1, 1], [], []>} : vector<32x32xf32>, vector<32x128xf32>, vector<32x128xf32> -> vector<32x128xf32>
    %41 = arith.addf %36, %40 : vector<32x128xf32>
    %c6 = arith.constant 6 : index
    %c0_33 = arith.constant 0 : index
    %c0_34 = arith.constant 0 : index
    %42 = vector.load %arg4[%c6, %c0_33, %c0_34] : memref<8x32x32xf32, #tpu.memory_space<vmem>>, vector<1x32x32xf32>
    %43 = vector.shape_cast %42 : vector<1x32x32xf32> to vector<32x32xf32>
    %44 = vector.extract_strided_slice %10 {offsets = [0, 768], sizes = [32, 128], strides = [1, 1]} : vector<32x1024xf32> to vector<32x128xf32>
    %cst_35 = arith.constant dense<0.000000e+00> : vector<32x128xf32>
    %45 = tpu.matmul %43, %44, %cst_35 {dimension_numbers = #tpu.dot_dimension_numbers<[1], [0], [0], [1], [0, 0, 1, 1], [], []>} : vector<32x32xf32>, vector<32x128xf32>, vector<32x128xf32> -> vector<32x128xf32>
    %46 = arith.addf %41, %45 : vector<32x128xf32>
    %c7 = arith.constant 7 : index
    %c0_36 = arith.constant 0 : index
    %c0_37 = arith.constant 0 : index
    %47 = vector.load %arg4[%c7, %c0_36, %c0_37] : memref<8x32x32xf32, #tpu.memory_space<vmem>>, vector<1x32x32xf32>
    %48 = vector.shape_cast %47 : vector<1x32x32xf32> to vector<32x32xf32>
    %49 = vector.extract_strided_slice %10 {offsets = [0, 896], sizes = [32, 128], strides = [1, 1]} : vector<32x1024xf32> to vector<32x128xf32>
    %cst_38 = arith.constant dense<0.000000e+00> : vector<32x128xf32>
    %50 = tpu.matmul %48, %49, %cst_38 {dimension_numbers = #tpu.dot_dimension_numbers<[1], [0], [0], [1], [0, 0, 1, 1], [], []>} : vector<32x32xf32>, vector<32x128xf32>, vector<32x128xf32> -> vector<32x128xf32>
    %51 = arith.addf %46, %50 : vector<32x128xf32>
    %52 = arith.addf %7, %51 : vector<32x128xf32>
    %c0_39 = arith.constant 0 : index
    %c0_40 = arith.constant 0 : index
    %c0_41 = arith.constant 0 : index
    %53 = vector.load %arg6[%c0_39, %c0_40, %c0_41] : memref<2x128x256xf32, #tpu.memory_space<vmem>>, vector<1x128x256xf32>
    %54 = vector.shape_cast %53 : vector<1x128x256xf32> to vector<128x256xf32>
    %cst_42 = arith.constant dense<0.000000e+00> : vector<32x256xf32>
    %55 = tpu.matmul %52, %54, %cst_42 {dimension_numbers = #tpu.dot_dimension_numbers<[1], [0], [0], [1], [0, 0, 1, 1], [], []>} : vector<32x128xf32>, vector<128x256xf32>, vector<32x256xf32> -> vector<32x256xf32>
    %c0_43 = arith.constant 0 : index
    %c0_44 = arith.constant 0 : index
    %c0_45 = arith.constant 0 : index
    %56 = vector.load %arg7[%c0_43, %c0_44, %c0_45] : memref<2x1x256xf32, #tpu.memory_space<vmem>>, vector<1x1x256xf32>
    %57 = vector.shape_cast %56 : vector<1x1x256xf32> to vector<1x256xf32>
    %58 = vector.broadcast %57 : vector<1x256xf32> to vector<32x256xf32>
    %59 = arith.addf %55, %58 : vector<32x256xf32>
    %cst_46 = arith.constant 0.000000e+00 : f32
    %60 = vector.broadcast %cst_46 : f32 to vector<32x256xf32>
    %61 = arith.maximumf %59, %60 : vector<32x256xf32>
    %c0_47 = arith.constant 0 : index
    %c0_48 = arith.constant 0 : index
    %c0_49 = arith.constant 0 : index
    %62 = vector.load %arg8[%c0_47, %c0_48, %c0_49] : memref<2x256x128xf32, #tpu.memory_space<vmem>>, vector<1x256x128xf32>
    %63 = vector.shape_cast %62 : vector<1x256x128xf32> to vector<256x128xf32>
    %cst_50 = arith.constant dense<0.000000e+00> : vector<32x128xf32>
    %64 = tpu.matmul %61, %63, %cst_50 {dimension_numbers = #tpu.dot_dimension_numbers<[1], [0], [0], [1], [0, 0, 1, 1], [], []>} : vector<32x256xf32>, vector<256x128xf32>, vector<32x128xf32> -> vector<32x128xf32>
    %c0_51 = arith.constant 0 : index
    %c0_52 = arith.constant 0 : index
    %c0_53 = arith.constant 0 : index
    %65 = vector.load %arg9[%c0_51, %c0_52, %c0_53] : memref<2x1x128xf32, #tpu.memory_space<vmem>>, vector<1x1x128xf32>
    %66 = vector.shape_cast %65 : vector<1x1x128xf32> to vector<1x128xf32>
    %67 = vector.broadcast %66 : vector<1x128xf32> to vector<32x128xf32>
    %68 = arith.addf %64, %67 : vector<32x128xf32>
    %69 = arith.addf %4, %68 : vector<32x128xf32>
    %c1_54 = arith.constant 1 : index
    %c0_55 = arith.constant 0 : index
    %c0_56 = arith.constant 0 : index
    %70 = vector.load %arg3[%c1_54, %c0_55, %c0_56] : memref<2x128x128xf32, #tpu.memory_space<vmem>>, vector<1x128x128xf32>
    %71 = vector.shape_cast %70 : vector<1x128x128xf32> to vector<128x128xf32>
    %cst_57 = arith.constant dense<0.000000e+00> : vector<32x128xf32>
    %72 = tpu.matmul %69, %71, %cst_57 {dimension_numbers = #tpu.dot_dimension_numbers<[1], [0], [0], [1], [0, 0, 1, 1], [], []>} : vector<32x128xf32>, vector<128x128xf32>, vector<32x128xf32> -> vector<32x128xf32>
    %c1_58 = arith.constant 1 : index
    %c0_59 = arith.constant 0 : index
    %c0_60 = arith.constant 0 : index
    %73 = vector.load %arg5[%c1_58, %c0_59, %c0_60] : memref<2x128x1024xf32, #tpu.memory_space<vmem>>, vector<1x128x1024xf32>
    %74 = vector.shape_cast %73 : vector<1x128x1024xf32> to vector<128x1024xf32>
    %cst_61 = arith.constant dense<0.000000e+00> : vector<32x1024xf32>
    %75 = tpu.matmul %69, %74, %cst_61 {dimension_numbers = #tpu.dot_dimension_numbers<[1], [0], [0], [1], [0, 0, 1, 1], [], []>} : vector<32x128xf32>, vector<128x1024xf32>, vector<32x1024xf32> -> vector<32x1024xf32>
    %cst_62 = arith.constant 0.000000e+00 : f32
    %76 = vector.broadcast %cst_62 : f32 to vector<32x128xf32>
    %c0_63 = arith.constant 0 : index
    %c0_64 = arith.constant 0 : index
    %c0_65 = arith.constant 0 : index
    %77 = vector.load %arg4[%c0_63, %c0_64, %c0_65] : memref<8x32x32xf32, #tpu.memory_space<vmem>>, vector<1x32x32xf32>
    %78 = vector.shape_cast %77 : vector<1x32x32xf32> to vector<32x32xf32>
    %79 = vector.extract_strided_slice %75 {offsets = [0, 0], sizes = [32, 128], strides = [1, 1]} : vector<32x1024xf32> to vector<32x128xf32>
    %cst_66 = arith.constant dense<0.000000e+00> : vector<32x128xf32>
    %80 = tpu.matmul %78, %79, %cst_66 {dimension_numbers = #tpu.dot_dimension_numbers<[1], [0], [0], [1], [0, 0, 1, 1], [], []>} : vector<32x32xf32>, vector<32x128xf32>, vector<32x128xf32> -> vector<32x128xf32>
    %81 = arith.addf %76, %80 : vector<32x128xf32>
    %c1_67 = arith.constant 1 : index
    %c0_68 = arith.constant 0 : index
    %c0_69 = arith.constant 0 : index
    %82 = vector.load %arg4[%c1_67, %c0_68, %c0_69] : memref<8x32x32xf32, #tpu.memory_space<vmem>>, vector<1x32x32xf32>
    %83 = vector.shape_cast %82 : vector<1x32x32xf32> to vector<32x32xf32>
    %84 = vector.extract_strided_slice %75 {offsets = [0, 128], sizes = [32, 128], strides = [1, 1]} : vector<32x1024xf32> to vector<32x128xf32>
    %cst_70 = arith.constant dense<0.000000e+00> : vector<32x128xf32>
    %85 = tpu.matmul %83, %84, %cst_70 {dimension_numbers = #tpu.dot_dimension_numbers<[1], [0], [0], [1], [0, 0, 1, 1], [], []>} : vector<32x32xf32>, vector<32x128xf32>, vector<32x128xf32> -> vector<32x128xf32>
    %86 = arith.addf %81, %85 : vector<32x128xf32>
    %c2_71 = arith.constant 2 : index
    %c0_72 = arith.constant 0 : index
    %c0_73 = arith.constant 0 : index
    %87 = vector.load %arg4[%c2_71, %c0_72, %c0_73] : memref<8x32x32xf32, #tpu.memory_space<vmem>>, vector<1x32x32xf32>
    %88 = vector.shape_cast %87 : vector<1x32x32xf32> to vector<32x32xf32>
    %89 = vector.extract_strided_slice %75 {offsets = [0, 256], sizes = [32, 128], strides = [1, 1]} : vector<32x1024xf32> to vector<32x128xf32>
    %cst_74 = arith.constant dense<0.000000e+00> : vector<32x128xf32>
    %90 = tpu.matmul %88, %89, %cst_74 {dimension_numbers = #tpu.dot_dimension_numbers<[1], [0], [0], [1], [0, 0, 1, 1], [], []>} : vector<32x32xf32>, vector<32x128xf32>, vector<32x128xf32> -> vector<32x128xf32>
    %91 = arith.addf %86, %90 : vector<32x128xf32>
    %c3_75 = arith.constant 3 : index
    %c0_76 = arith.constant 0 : index
    %c0_77 = arith.constant 0 : index
    %92 = vector.load %arg4[%c3_75, %c0_76, %c0_77] : memref<8x32x32xf32, #tpu.memory_space<vmem>>, vector<1x32x32xf32>
    %93 = vector.shape_cast %92 : vector<1x32x32xf32> to vector<32x32xf32>
    %94 = vector.extract_strided_slice %75 {offsets = [0, 384], sizes = [32, 128], strides = [1, 1]} : vector<32x1024xf32> to vector<32x128xf32>
    %cst_78 = arith.constant dense<0.000000e+00> : vector<32x128xf32>
    %95 = tpu.matmul %93, %94, %cst_78 {dimension_numbers = #tpu.dot_dimension_numbers<[1], [0], [0], [1], [0, 0, 1, 1], [], []>} : vector<32x32xf32>, vector<32x128xf32>, vector<32x128xf32> -> vector<32x128xf32>
    %96 = arith.addf %91, %95 : vector<32x128xf32>
    %c4_79 = arith.constant 4 : index
    %c0_80 = arith.constant 0 : index
    %c0_81 = arith.constant 0 : index
    %97 = vector.load %arg4[%c4_79, %c0_80, %c0_81] : memref<8x32x32xf32, #tpu.memory_space<vmem>>, vector<1x32x32xf32>
    %98 = vector.shape_cast %97 : vector<1x32x32xf32> to vector<32x32xf32>
    %99 = vector.extract_strided_slice %75 {offsets = [0, 512], sizes = [32, 128], strides = [1, 1]} : vector<32x1024xf32> to vector<32x128xf32>
    %cst_82 = arith.constant dense<0.000000e+00> : vector<32x128xf32>
    %100 = tpu.matmul %98, %99, %cst_82 {dimension_numbers = #tpu.dot_dimension_numbers<[1], [0], [0], [1], [0, 0, 1, 1], [], []>} : vector<32x32xf32>, vector<32x128xf32>, vector<32x128xf32> -> vector<32x128xf32>
    %101 = arith.addf %96, %100 : vector<32x128xf32>
    %c5_83 = arith.constant 5 : index
    %c0_84 = arith.constant 0 : index
    %c0_85 = arith.constant 0 : index
    %102 = vector.load %arg4[%c5_83, %c0_84, %c0_85] : memref<8x32x32xf32, #tpu.memory_space<vmem>>, vector<1x32x32xf32>
    %103 = vector.shape_cast %102 : vector<1x32x32xf32> to vector<32x32xf32>
    %104 = vector.extract_strided_slice %75 {offsets = [0, 640], sizes = [32, 128], strides = [1, 1]} : vector<32x1024xf32> to vector<32x128xf32>
    %cst_86 = arith.constant dense<0.000000e+00> : vector<32x128xf32>
    %105 = tpu.matmul %103, %104, %cst_86 {dimension_numbers = #tpu.dot_dimension_numbers<[1], [0], [0], [1], [0, 0, 1, 1], [], []>} : vector<32x32xf32>, vector<32x128xf32>, vector<32x128xf32> -> vector<32x128xf32>
    %106 = arith.addf %101, %105 : vector<32x128xf32>
    %c6_87 = arith.constant 6 : index
    %c0_88 = arith.constant 0 : index
    %c0_89 = arith.constant 0 : index
    %107 = vector.load %arg4[%c6_87, %c0_88, %c0_89] : memref<8x32x32xf32, #tpu.memory_space<vmem>>, vector<1x32x32xf32>
    %108 = vector.shape_cast %107 : vector<1x32x32xf32> to vector<32x32xf32>
    %109 = vector.extract_strided_slice %75 {offsets = [0, 768], sizes = [32, 128], strides = [1, 1]} : vector<32x1024xf32> to vector<32x128xf32>
    %cst_90 = arith.constant dense<0.000000e+00> : vector<32x128xf32>
    %110 = tpu.matmul %108, %109, %cst_90 {dimension_numbers = #tpu.dot_dimension_numbers<[1], [0], [0], [1], [0, 0, 1, 1], [], []>} : vector<32x32xf32>, vector<32x128xf32>, vector<32x128xf32> -> vector<32x128xf32>
    %111 = arith.addf %106, %110 : vector<32x128xf32>
    %c7_91 = arith.constant 7 : index
    %c0_92 = arith.constant 0 : index
    %c0_93 = arith.constant 0 : index
    %112 = vector.load %arg4[%c7_91, %c0_92, %c0_93] : memref<8x32x32xf32, #tpu.memory_space<vmem>>, vector<1x32x32xf32>
    %113 = vector.shape_cast %112 : vector<1x32x32xf32> to vector<32x32xf32>
    %114 = vector.extract_strided_slice %75 {offsets = [0, 896], sizes = [32, 128], strides = [1, 1]} : vector<32x1024xf32> to vector<32x128xf32>
    %cst_94 = arith.constant dense<0.000000e+00> : vector<32x128xf32>
    %115 = tpu.matmul %113, %114, %cst_94 {dimension_numbers = #tpu.dot_dimension_numbers<[1], [0], [0], [1], [0, 0, 1, 1], [], []>} : vector<32x32xf32>, vector<32x128xf32>, vector<32x128xf32> -> vector<32x128xf32>
    %116 = arith.addf %111, %115 : vector<32x128xf32>
    %117 = arith.addf %72, %116 : vector<32x128xf32>
    %c1_95 = arith.constant 1 : index
    %c0_96 = arith.constant 0 : index
    %c0_97 = arith.constant 0 : index
    %118 = vector.load %arg6[%c1_95, %c0_96, %c0_97] : memref<2x128x256xf32, #tpu.memory_space<vmem>>, vector<1x128x256xf32>
    %119 = vector.shape_cast %118 : vector<1x128x256xf32> to vector<128x256xf32>
    %cst_98 = arith.constant dense<0.000000e+00> : vector<32x256xf32>
    %120 = tpu.matmul %117, %119, %cst_98 {dimension_numbers = #tpu.dot_dimension_numbers<[1], [0], [0], [1], [0, 0, 1, 1], [], []>} : vector<32x128xf32>, vector<128x256xf32>, vector<32x256xf32> -> vector<32x256xf32>
    %c1_99 = arith.constant 1 : index
    %c0_100 = arith.constant 0 : index
    %c0_101 = arith.constant 0 : index
    %121 = vector.load %arg7[%c1_99, %c0_100, %c0_101] : memref<2x1x256xf32, #tpu.memory_space<vmem>>, vector<1x1x256xf32>
    %122 = vector.shape_cast %121 : vector<1x1x256xf32> to vector<1x256xf32>
    %123 = vector.broadcast %122 : vector<1x256xf32> to vector<32x256xf32>
    %124 = arith.addf %120, %123 : vector<32x256xf32>
    %cst_102 = arith.constant 0.000000e+00 : f32
    %125 = vector.broadcast %cst_102 : f32 to vector<32x256xf32>
    %126 = arith.maximumf %124, %125 : vector<32x256xf32>
    %c1_103 = arith.constant 1 : index
    %c0_104 = arith.constant 0 : index
    %c0_105 = arith.constant 0 : index
    %127 = vector.load %arg8[%c1_103, %c0_104, %c0_105] : memref<2x256x128xf32, #tpu.memory_space<vmem>>, vector<1x256x128xf32>
    %128 = vector.shape_cast %127 : vector<1x256x128xf32> to vector<256x128xf32>
    %cst_106 = arith.constant dense<0.000000e+00> : vector<32x128xf32>
    %129 = tpu.matmul %126, %128, %cst_106 {dimension_numbers = #tpu.dot_dimension_numbers<[1], [0], [0], [1], [0, 0, 1, 1], [], []>} : vector<32x256xf32>, vector<256x128xf32>, vector<32x128xf32> -> vector<32x128xf32>
    %c1_107 = arith.constant 1 : index
    %c0_108 = arith.constant 0 : index
    %c0_109 = arith.constant 0 : index
    %130 = vector.load %arg9[%c1_107, %c0_108, %c0_109] : memref<2x1x128xf32, #tpu.memory_space<vmem>>, vector<1x1x128xf32>
    %131 = vector.shape_cast %130 : vector<1x1x128xf32> to vector<1x128xf32>
    %132 = vector.broadcast %131 : vector<1x128xf32> to vector<32x128xf32>
    %133 = arith.addf %129, %132 : vector<32x128xf32>
    %c0_110 = arith.constant 0 : index
    %c0_111 = arith.constant 0 : index
    %134 = vector.load %arg10[%c0_110, %c0_111] : memref<128x2048xf32, #tpu.memory_space<vmem>>, vector<128x2048xf32>
    %cst_112 = arith.constant dense<0.000000e+00> : vector<32x2048xf32>
    %135 = tpu.matmul %133, %134, %cst_112 {dimension_numbers = #tpu.dot_dimension_numbers<[1], [0], [0], [1], [0, 0, 1, 1], [], []>} : vector<32x128xf32>, vector<128x2048xf32>, vector<32x2048xf32> -> vector<32x2048xf32>
    %c0_113 = arith.constant 0 : index
    %c0_114 = arith.constant 0 : index
    %136 = vector.load %arg11[%c0_113, %c0_114] : memref<1x2048xf32, #tpu.memory_space<vmem>>, vector<1x2048xf32>
    %137 = vector.broadcast %136 : vector<1x2048xf32> to vector<32x2048xf32>
    %138 = arith.addf %135, %137 : vector<32x2048xf32>
    %c0_115 = arith.constant 0 : index
    %c0_116 = arith.constant 0 : index
    %139 = vector.load %arg12[%c0_115, %c0_116] : memref<2048x64xf32, #tpu.memory_space<vmem>>, vector<2048x64xf32>
    %cst_117 = arith.constant dense<0.000000e+00> : vector<32x64xf32>
    %140 = tpu.matmul %138, %139, %cst_117 {dimension_numbers = #tpu.dot_dimension_numbers<[1], [0], [0], [1], [0, 0, 1, 1], [], []>} : vector<32x2048xf32>, vector<2048x64xf32>, vector<32x64xf32> -> vector<32x64xf32>
    %c0_118 = arith.constant 0 : index
    %c0_119 = arith.constant 0 : index
    %141 = vector.load %arg13[%c0_118, %c0_119] : memref<1x64xf32, #tpu.memory_space<vmem>>, vector<1x64xf32>
    %142 = vector.broadcast %141 : vector<1x64xf32> to vector<32x64xf32>
    %143 = arith.addf %140, %142 : vector<32x64xf32>
    %c0_120 = arith.constant 0 : index
    %c0_121 = arith.constant 0 : index
    %144 = vector.load %arg14[%c0_120, %c0_121] : memref<32x64xf32, #tpu.memory_space<vmem>>, vector<32x64xf32>
    tpu.vector_store %arg14[%c0_120, %c0_121], %143 {strides = array<i32>} : memref<32x64xf32, #tpu.memory_space<vmem>>, vector<32x64xf32>,
    return
  }
}

</mosaic_0001>

<llo_original>
// kernel: ffno_forward.1
$region0: #{ffno_forward.1}
  #allocation0 [shape = 'u32[]', space=smem, size = 0x4, offset = 0x4, fixed_abs, tag = 'smem constant byte address 0x4 - core index']
  #allocation1 [shape = 'u32[144,128]{1,0:T(1,128)}', space=vmem, size = 0x12000, scoped, tag = 'internal scratch']
  %s0 = inlined_call_operand.vmem [shape: f32[32,128], index: 0, kind: input, shape index: {}]
  %s1 = inlined_call_operand.hbm [shape: f32[128,128], index: 1, kind: input, shape index: {}]
  %s2 = inlined_call_operand.hbm [shape: f32[32,128], index: 2, kind: input, shape index: {}]
  %s3 = inlined_call_operand.hbm [shape: f32[2,128,128], index: 3, kind: input, shape index: {}]
  %s4 = inlined_call_operand.hbm [shape: f32[8,32,32], index: 4, kind: input, shape index: {}]
  %s5 = inlined_call_operand.vmem [shape: f32[2,128,1024], index: 5, kind: input, shape index: {}]
  %s6 = inlined_call_operand.hbm [shape: f32[2,128,256], index: 6, kind: input, shape index: {}]
  %s7 = inlined_call_operand.vmem [shape: f32[2,1,256], index: 7, kind: input, shape index: {}]
  %s8 = inlined_call_operand.hbm [shape: f32[2,256,128], index: 8, kind: input, shape index: {}]
  %s9 = inlined_call_operand.vmem [shape: f32[2,1,128], index: 9, kind: input, shape index: {}]
  %s10 = inlined_call_operand.vmem [shape: f32[128,2048], index: 10, kind: input, shape index: {}]
  %s11 = inlined_call_operand.vmem [shape: f32[1,2048], index: 11, kind: input, shape index: {}]
  %s12 = inlined_call_operand.vmem [shape: f32[2048,64], index: 12, kind: input, shape index: {}]
  %s13 = inlined_call_operand.vmem [shape: f32[1,64], index: 13, kind: input, shape index: {}]
  %s14 = inlined_call_operand.vmem [shape: f32[32,64], index: 14, kind: output, shape index: {}]
  %s15 = sld [smem:[#allocation0]]
  $region90: #{ffno_forward.1} parent=0
    _
  %s17 = ssub.s32 1, %s15
  %s18 = scalar_select 0, %s17, %s15
  $region1: #{ffno_forward.1} parent=0
    #allocation2 [shape = 'u8[65536]{0}', space=vmem, size = 0x10000, scoped, tag = 'input window, operand 1, single buffered']
    #allocation3 [shape = 's32[1]{0}', space=sflag, size = 0x4, scoped, tag = 'scoped memory for ffno_forward.1']
    #allocation4 [shape = 'u8[16384]{0}', space=vmem, size = 0x4000, scoped, tag = 'input window, operand 2, single buffered']
    #allocation5 [shape = 's32[1]{0}', space=sflag, size = 0x4, scoped, tag = 'scoped memory for ffno_forward.1']
    #allocation6 [shape = 'u8[131072]{0}', space=vmem, size = 0x20000, scoped, tag = 'input window, operand 3, single buffered']
    #allocation7 [shape = 'u8[131072]{0}', space=vmem, size = 0x20000, scoped, tag = 'input window, operand 4, single buffered']
    #allocation8 [shape = 's32[1]{0}', space=sflag, size = 0x4, scoped, tag = 'scoped memory for ffno_forward.1']
    #allocation9 [shape = 'u8[262144]{0}', space=vmem, size = 0x40000, scoped, tag = 'input window, operand 6, single buffered']
    #allocation10 [shape = 'u8[262144]{0}', space=vmem, size = 0x40000, scoped, tag = 'input window, operand 8, single buffered']
    #allocation11 [shape = 's32[1]{0}', space=sflag, size = 0x4, scoped, tag = 'scoped memory for ffno_forward.1']
    %19 = vsyncpa [#allocation3], 0
    %20 = vsyncpa [#allocation5], 0
    %21 = vsyncpa [#allocation8], 0
    %22 = vsyncpa [#allocation11], 0
    // Predicated region
    $region2: #{ffno_forward.1} parent=1 // pred_check
      _
    $region3: #{ffno_forward.1} parent=1 // pred_check_branch
      %24 = sbr.rel (0) target = $region5
    $region4: #{ffno_forward.1} parent=1 // pred_region
      _
    $region5: #{ffno_forward.1} parent=1 // pred_fallthru
      _
    // Predicated region
    $region6: #{ffno_forward.1} parent=1 // pred_check
      _
    $region7: #{ffno_forward.1} parent=1 // pred_check_branch
      %26 = sbr.rel (0) target = $region9
    $region8: #{ffno_forward.1} parent=1 // pred_region
      %s28 = ssub.s32 2048, 2048
      %29 = vsyncadd [#allocation3], %s28
      %s30 = sshll.u32 [#allocation2], 4
      %s31 = int_to_ptr.vmem [resolvable:$true] %s30
      %36 = dma.hbm_to_vmem [thread:$0]  %s1, 2048, %s31, [#allocation3], 128, 128, 8
    $region9: #{ffno_forward.1} parent=1 // pred_fallthru
      _
    // Predicated region
    $region10: #{ffno_forward.1} parent=1 // pred_check
      _
    $region11: #{ffno_forward.1} parent=1 // pred_check_branch
      %38 = sbr.rel (0) target = $region13
    $region12: #{ffno_forward.1} parent=1 // pred_region
      %s40 = ssub.s32 512, 512
      %41 = vsyncadd [#allocation5], %s40
      %s42 = sshll.u32 [#allocation4], 4
      %s43 = int_to_ptr.vmem [resolvable:$true] %s42
      %48 = dma.hbm_to_vmem [thread:$0]  %s2, 512, %s43, [#allocation5], 128, 128, 8
    $region13: #{ffno_forward.1} parent=1 // pred_fallthru
      _
    // Predicated region
    $region14: #{ffno_forward.1} parent=1 // pred_check
      _
    $region15: #{ffno_forward.1} parent=1 // pred_check_branch
      %50 = sbr.rel (0) target = $region17
    $region16: #{ffno_forward.1} parent=1 // pred_region
      %s52 = ssub.s32 4096, 4096
      %53 = vsyncadd [#allocation5], %s52
      %s54 = sshll.u32 [#allocation6], 4
      %s55 = int_to_ptr.vmem [resolvable:$true] %s54
      %60 = dma.hbm_to_vmem [thread:$0]  %s3, 4096, %s55, [#allocation5], 128, 128, 8
    $region17: #{ffno_forward.1} parent=1 // pred_fallthru
      _
    // Predicated region
    $region18: #{ffno_forward.1} parent=1 // pred_check
      _
    $region19: #{ffno_forward.1} parent=1 // pred_check_branch
      %62 = sbr.rel (0) target = $region21
    $region20: #{ffno_forward.1} parent=1 // pred_region
      %s64 = ssub.s32 4096, 4096
      %65 = vsyncadd [#allocation8], %s64
      %s66 = sshll.u32 [#allocation7], 4
      %s67 = int_to_ptr.vmem [resolvable:$true] %s66
      %72 = dma.hbm_to_vmem [thread:$0]  %s4, 4096, %s67, [#allocation8], 128, 128, 8
    $region21: #{ffno_forward.1} parent=1 // pred_fallthru
      _
    // Predicated region
    $region22: #{ffno_forward.1} parent=1 // pred_check
      _
    $region23: #{ffno_forward.1} parent=1 // pred_check_branch
      %74 = sbr.rel (0) target = $region25
    $region24: #{ffno_forward.1} parent=1 // pred_region
      _
    $region25: #{ffno_forward.1} parent=1 // pred_fallthru
      _
    // Predicated region
    $region26: #{ffno_forward.1} parent=1 // pred_check
      _
    $region27: #{ffno_forward.1} parent=1 // pred_check_branch
      %76 = sbr.rel (0) target = $region29
    $region28: #{ffno_forward.1} parent=1 // pred_region
      %s78 = ssub.s32 8192, 8192
      %79 = vsyncadd [#allocation8], %s78
      %s80 = sshll.u32 [#allocation9], 4
      %s81 = int_to_ptr.vmem [resolvable:$true] %s80
      %86 = dma.hbm_to_vmem [thread:$0]  %s6, 8192, %s81, [#allocation8], 256, 256, 16
    $region29: #{ffno_forward.1} parent=1 // pred_fallthru
      _
    // Predicated region
    $region30: #{ffno_forward.1} parent=1 // pred_check
      _
    $region31: #{ffno_forward.1} parent=1 // pred_check_branch
      %88 = sbr.rel (0) target = $region33
    $region32: #{ffno_forward.1} parent=1 // pred_region
      _
    $region33: #{ffno_forward.1} parent=1 // pred_fallthru
      _
    // Predicated region
    $region34: #{ffno_forward.1} parent=1 // pred_check
      _
    $region35: #{ffno_forward.1} parent=1 // pred_check_branch
      %90 = sbr.rel (0) target = $region37
    $region36: #{ffno_forward.1} parent=1 // pred_region
      %s92 = ssub.s32 8192, 8192
      %93 = vsyncadd [#allocation11], %s92
      %s94 = sshll.u32 [#allocation10], 4
      %s95 = int_to_ptr.vmem [resolvable:$true] %s94
      %100 = dma.hbm_to_vmem [thread:$0]  %s8, 8192, %s95, [#allocation11], 128, 128, 8
    $region37: #{ffno_forward.1} parent=1 // pred_fallthru
      _
    // Predicated region
    $region38: #{ffno_forward.1} parent=1 // pred_check
      _
    $region39: #{ffno_forward.1} parent=1 // pred_check_branch
      %102 = sbr.rel (0) target = $region41
    $region40: #{ffno_forward.1} parent=1 // pred_region
      _
    $region41: #{ffno_forward.1} parent=1 // pred_fallthru
      _
    // Predicated region
    $region42: #{ffno_forward.1} parent=1 // pred_check
      _
    $region43: #{ffno_forward.1} parent=1 // pred_check_branch
      %104 = sbr.rel (0) target = $region45
    $region44: #{ffno_forward.1} parent=1 // pred_region
      _
    $region45: #{ffno_forward.1} parent=1 // pred_fallthru
      _
    // Predicated region
    $region46: #{ffno_forward.1} parent=1 // pred_check
      _
    $region47: #{ffno_forward.1} parent=1 // pred_check_branch
      %106 = sbr.rel (0) target = $region49
    $region48: #{ffno_forward.1} parent=1 // pred_region
      _
    $region49: #{ffno_forward.1} parent=1 // pred_fallthru
      _
    // Predicated region
    $region50: #{ffno_forward.1} parent=1 // pred_check
      _
    $region51: #{ffno_forward.1} parent=1 // pred_check_branch
      %108 = sbr.rel (0) target = $region53
    $region52: #{ffno_forward.1} parent=1 // pred_region
      _
    $region53: #{ffno_forward.1} parent=1 // pred_fallthru
      _
    // Predicated region
    $region54: #{ffno_forward.1} parent=1 // pred_check
      _
    $region55: #{ffno_forward.1} parent=1 // pred_check_branch
      %110 = sbr.rel (0) target = $region57
    $region56: #{ffno_forward.1} parent=1 // pred_region
      _
    $region57: #{ffno_forward.1} parent=1 // pred_fallthru
      _
    // Predicated region
    $region58: #{ffno_forward.1} parent=1 // pred_check
      _
    $region59: #{ffno_forward.1} parent=1 // pred_check_branch
      %112 = sbr.rel (0) target = $region61
    $region60: #{ffno_forward.1} parent=1 // pred_region
      %113 = dma.done [#allocation3], 2048
    $region61: #{ffno_forward.1} parent=1 // pred_fallthru
      _
    // Predicated region
    $region62: #{ffno_forward.1} parent=1 // pred_check
      _
    $region63: #{ffno_forward.1} parent=1 // pred_check_branch
      %115 = sbr.rel (0) target = $region65
    $region64: #{ffno_forward.1} parent=1 // pred_region
      %116 = dma.done [#allocation5], 512
    $region65: #{ffno_forward.1} parent=1 // pred_fallthru
      _
    // Predicated region
    $region66: #{ffno_forward.1} parent=1 // pred_check
      _
    $region67: #{ffno_forward.1} parent=1 // pred_check_branch
      %118 = sbr.rel (0) target = $region69
    $region68: #{ffno_forward.1} parent=1 // pred_region
      %119 = dma.done [#allocation5], 4096
    $region69: #{ffno_forward.1} parent=1 // pred_fallthru
      _
    // Predicated region
    $region70: #{ffno_forward.1} parent=1 // pred_check
      _
    $region71: #{ffno_forward.1} parent=1 // pred_check_branch
      %121 = sbr.rel (0) target = $region73
    $region72: #{ffno_forward.1} parent=1 // pred_region
      %122 = dma.done [#allocation8], 4096
    $region73: #{ffno_forward.1} parent=1 // pred_fallthru
      _
    // Predicated region
    $region74: #{ffno_forward.1} parent=1 // pred_check
      _
    $region75: #{ffno_forward.1} parent=1 // pred_check_branch
      %124 = sbr.rel (0) target = $region77
    $region76: #{ffno_forward.1} parent=1 // pred_region
      %125 = dma.done [#allocation8], 8192
    $region77: #{ffno_forward.1} parent=1 // pred_fallthru
      _
    // Predicated region
    $region78: #{ffno_forward.1} parent=1 // pred_check
      _
    $region79: #{ffno_forward.1} parent=1 // pred_check_branch
      %127 = sbr.rel (0) target = $region81
    $region80: #{ffno_forward.1} parent=1 // pred_region
      %128 = dma.done [#allocation11], 8192
    $region81: #{ffno_forward.1} parent=1 // pred_fallthru
      _
    %v129 = vld [vmem:[%s0] sm:$0xff]
    %v130 = vld [vmem:[%s0 + $0x8] sm:$0xff]
    %v131 = vld [vmem:[%s0 + $0x10] sm:$0xff]
    %v132 = vld [vmem:[%s0 + $0x18] sm:$0xff]
    %v133 = vld [vmem:[#allocation2] sm:$0xff]
    %v134 = vld [vmem:[#allocation2 + $0x8] sm:$0xff]
    %v135 = vld [vmem:[#allocation2 + $0x10] sm:$0xff]
    %v136 = vld [vmem:[#allocation2 + $0x18] sm:$0xff]
    %v137 = vld [vmem:[#allocation2 + $0x20] sm:$0xff]
    %v138 = vld [vmem:[#allocation2 + $0x28] sm:$0xff]
    %v139 = vld [vmem:[#allocation2 + $0x30] sm:$0xff]
    %v140 = vld [vmem:[#allocation2 + $0x38] sm:$0xff]
    %v141 = vld [vmem:[#allocation2 + $0x40] sm:$0xff]
    %v142 = vld [vmem:[#allocation2 + $0x48] sm:$0xff]
    %v143 = vld [vmem:[#allocation2 + $0x50] sm:$0xff]
    %v144 = vld [vmem:[#allocation2 + $0x58] sm:$0xff]
    %v145 = vld [vmem:[#allocation2 + $0x60] sm:$0xff]
    %v146 = vld [vmem:[#allocation2 + $0x68] sm:$0xff]
    %v147 = vld [vmem:[#allocation2 + $0x70] sm:$0xff]
    %v148 = vld [vmem:[#allocation2 + $0x78] sm:$0xff]
    %v149 = vld [vmem:[#allocation4] sm:$0xff]
    %v150 = vld [vmem:[#allocation4 + $0x8] sm:$0xff]
    %v151 = vld [vmem:[#allocation4 + $0x10] sm:$0xff]
    %v152 = vld [vmem:[#allocation4 + $0x18] sm:$0xff]
    %153 = vmatprep.subr.mxu0 0.0
    %154 = vmatpush1.msra.mxu0 %v133
    %155 = vmatprep.subr.mxu0 0.0
    %156 = vmatpush1.msra.mxu0 %v134
    %157 = vmatprep.subr.mxu0 0.0
    %158 = vmatpush1.msra.mxu0 %v135
    %159 = vmatprep.subr.mxu0 0.0
    %160 = vmatpush1.msra.mxu0 %v136
    %161 = vmatprep.subr.mxu0 0.0
    %162 = vmatpush1.msra.mxu0 %v137
    %163 = vmatprep.subr.mxu0 0.0
    %164 = vmatpush1.msra.mxu0 %v138
    %165 = vmatprep.subr.mxu0 0.0
    %166 = vmatpush1.msra.mxu0 %v139
    %167 = vmatprep.subr.mxu0 0.0
    %168 = vmatpush1.msra.mxu0 %v140
    %169 = vmatprep.subr.mxu0 0.0
    %170 = vmatpush1.msra.mxu0 %v141
    %171 = vmatprep.subr.mxu0 0.0
    %172 = vmatpush1.msra.mxu0 %v142
    %173 = vmatprep.subr.mxu0 0.0
    %174 = vmatpush1.msra.mxu0 %v143
    %175 = vmatprep.subr.mxu0 0.0
    %176 = vmatpush1.msra.mxu0 %v144
    %177 = vmatprep.subr.mxu0 0.0
    %178 = vmatpush1.msra.mxu0 %v145
    %179 = vmatprep.subr.mxu0 0.0
    %180 = vmatpush1.msra.mxu0 %v146
    %181 = vmatprep.subr.mxu0 0.0
    %182 = vmatpush1.msra.mxu0 %v147
    %183 = vmatprep.subr.mxu0 0.0
    %184 = vmatpush1.msra.mxu0 %v148
    %185 = vmatprep.subr.mxu0 0.0
    %186 = vmatpush1.msra.mxu0 0.0
    %187 = vmatprep.subr.mxu0 0.0
    %188 = vmatpush1.msra.mxu0 0.0
    %189 = vmatprep.subr.mxu0 0.0
    %190 = vmatpush1.msra.mxu0 0.0
    %191 = vmatprep.subr.mxu0 0.0
    %192 = vmatpush1.msra.mxu0 0.0
    %193 = vmatprep.subr.mxu0 0.0
    %194 = vmatpush1.msra.mxu0 0.0
    %195 = vmatprep.subr.mxu0 0.0
    %196 = vmatpush1.msra.mxu0 0.0
    %197 = vmatprep.subr.mxu0 0.0
    %198 = vmatpush1.msra.mxu0 0.0
    %199 = vmatprep.subr.mxu0 0.0
    %200 = vmatpush1.msra.mxu0 0.0
    %201 = vmatprep.subr.mxu0 0.0
    %202 = vmatpush1.msra.mxu0 0.0
    %203 = vmatprep.subr.mxu0 0.0
    %204 = vmatpush1.msra.mxu0 0.0
    %205 = vmatprep.subr.mxu0 0.0
    %206 = vmatpush1.msra.mxu0 0.0
    %207 = vmatprep.subr.mxu0 0.0
    %208 = vmatpush1.msra.mxu0 0.0
    %209 = vmatprep.subr.mxu0 0.0
    %210 = vmatpush1.msra.mxu0 0.0
    %211 = vmatprep.subr.mxu0 0.0
    %212 = vmatpush1.msra.mxu0 0.0
    %213 = vmatprep.subr.mxu0 0.0
    %214 = vmatpush1.msra.mxu0 0.0
    %215 = vmatprep.subr.mxu0 0.0
    %216 = vmatpush1.msra.mxu0 0.0
    %217 = vmatprep.mubr.f32.mxu0 0.0
    %218 = vmatmul.mubr.f32.gmra.mrb[0].mxu0 %v129
    %v219 = vpop.f32.mrb[0].mxu0
    %v220 = vadd.f32 %v149, %v219
    %v221 = vpop.f32.mrb[0].mxu0
    %222 = vmatprep.mubr.f32.mxu0 0.0
    %223 = vmatmul.mubr.f32.gmra.mrb[0].mxu0 %v130
    %v224 = vpop.f32.mrb[0].mxu0
    %v225 = vadd.f32 %v150, %v224
    %v226 = vpop.f32.mrb[0].mxu0
    %227 = vmatprep.mubr.f32.mxu0 0.0
    %228 = vmatmul.mubr.f32.gmra.mrb[0].mxu0 %v131
    %v229 = vpop.f32.mrb[0].mxu0
    %v230 = vadd.f32 %v151, %v229
    %v231 = vpop.f32.mrb[0].mxu0
    %232 = vmatprep.mubr.f32.mxu0 0.0
    %233 = vmatmul.mubr.f32.gmra.mrb[0].mxu0 %v132
    %v234 = vpop.f32.mrb[0].mxu0
    %v235 = vadd.f32 %v152, %v234
    %v236 = vpop.f32.mrb[0].mxu0
    %237 = vdwg.mxu0
    %v238 = vld [vmem:[#allocation6] sm:$0xff]
    %v239 = vld [vmem:[#allocation6 + $0x8] sm:$0xff]
    %v240 = vld [vmem:[#allocation6 + $0x10] sm:$0xff]
    %v241 = vld [vmem:[#allocation6 + $0x18] sm:$0xff]
    %v242 = vld [vmem:[#allocation6 + $0x20] sm:$0xff]
    %v243 = vld [vmem:[#allocation6 + $0x28] sm:$0xff]
    %v244 = vld [vmem:[#allocation6 + $0x30] sm:$0xff]
    %v245 = vld [vmem:[#allocation6 + $0x38] sm:$0xff]
    %v246 = vld [vmem:[#allocation6 + $0x40] sm:$0xff]
    %v247 = vld [vmem:[#allocation6 + $0x48] sm:$0xff]
    %v248 = vld [vmem:[#allocation6 + $0x50] sm:$0xff]
    %v249 = vld [vmem:[#allocation6 + $0x58] sm:$0xff]
    %v250 = vld [vmem:[#allocation6 + $0x60] sm:$0xff]
    %v251 = vld [vmem:[#allocation6 + $0x68] sm:$0xff]
    %v252 = vld [vmem:[#allocation6 + $0x70] sm:$0xff]
    %v253 = vld [vmem:[#allocation6 + $0x78] sm:$0xff]
    %v254 = vld [vmem:[%s5] sm:$0xff]
    %v255 = vld [vmem:[%s5 + $0x8] sm:$0xff]
    %v256 = vld [vmem:[%s5 + $0x10] sm:$0xff]
    %v257 = vld [vmem:[%s5 + $0x18] sm:$0xff]
    %v258 = vld [vmem:[%s5 + $0x20] sm:$0xff]
    %v259 = vld [vmem:[%s5 + $0x28] sm:$0xff]
    %v260 = vld [vmem:[%s5 + $0x30] sm:$0xff]
    %v261 = vld [vmem:[%s5 + $0x38] sm:$0xff]
    %v262 = vld [vmem:[%s5 + $0x40] sm:$0xff]
    %v263 = vld [vmem:[%s5 + $0x48] sm:$0xff]
    %v264 = vld [vmem:[%s5 + $0x50] sm:$0xff]
    %v265 = vld [vmem:[%s5 + $0x58] sm:$0xff]
    %v266 = vld [vmem:[%s5 + $0x60] sm:$0xff]
    %v267 = vld [vmem:[%s5 + $0x68] sm:$0xff]
    %v268 = vld [vmem:[%s5 + $0x70] sm:$0xff]
    %v269 = vld [vmem:[%s5 + $0x78] sm:$0xff]
    %v270 = vld [vmem:[%s5 + $0x80] sm:$0xff]
    %v271 = vld [vmem:[%s5 + $0x88] sm:$0xff]
    %v272 = vld [vmem:[%s5 + $0x90] sm:$0xff]
    %v273 = vld [vmem:[%s5 + $0x98] sm:$0xff]
    %v274 = vld [vmem:[%s5 + $0xa0] sm:$0xff]
    %v275 = vld [vmem:[%s5 + $0xa8] sm:$0xff]
    %v276 = vld [vmem:[%s5 + $0xb0] sm:$0xff]
    %v277 = vld [vmem:[%s5 + $0xb8] sm:$0xff]
    %v278 = vld [vmem:[%s5 + $0xc0] sm:$0xff]
    %v279 = vld [vmem:[%s5 + $0xc8] sm:$0xff]
    %v280 = vld [vmem:[%s5 + $0xd0] sm:$0xff]
    %v281 = vld [vmem:[%s5 + $0xd8] sm:$0xff]
    %v282 = vld [vmem:[%s5 + $0xe0] sm:$0xff]
    %v283 = vld [vmem:[%s5 + $0xe8] sm:$0xff]
    %v284 = vld [vmem:[%s5 + $0xf0] sm:$0xff]
    %v285 = vld [vmem:[%s5 + $0xf8] sm:$0xff]
    %v286 = vld [vmem:[%s5 + $0x100] sm:$0xff]
    %v287 = vld [vmem:[%s5 + $0x108] sm:$0xff]
    %v288 = vld [vmem:[%s5 + $0x110] sm:$0xff]
    %v289 = vld [vmem:[%s5 + $0x118] sm:$0xff]
    %v290 = vld [vmem:[%s5 + $0x120] sm:$0xff]
    %v291 = vld [vmem:[%s5 + $0x128] sm:$0xff]
    %v292 = vld [vmem:[%s5 + $0x130] sm:$0xff]
    %v293 = vld [vmem:[%s5 + $0x138] sm:$0xff]
    %v294 = vld [vmem:[%s5 + $0x140] sm:$0xff]
    %v295 = vld [vmem:[%s5 + $0x148] sm:$0xff]
    %v296 = vld [vmem:[%s5 + $0x150] sm:$0xff]
    %v297 = vld [vmem:[%s5 + $0x158] sm:$0xff]
    %v298 = vld [vmem:[%s5 + $0x160] sm:$0xff]
    %v299 = vld [vmem:[%s5 + $0x168] sm:$0xff]
    %v300 = vld [vmem:[%s5 + $0x170] sm:$0xff]
    %v301 = vld [vmem:[%s5 + $0x178] sm:$0xff]
    %v302 = vld [vmem:[%s5 + $0x180] sm:$0xff]
    %v303 = vld [vmem:[%s5 + $0x188] sm:$0xff]
    %v304 = vld [vmem:[%s5 + $0x190] sm:$0xff]
    %v305 = vld [vmem:[%s5 + $0x198] sm:$0xff]
    %v306 = vld [vmem:[%s5 + $0x1a0] sm:$0xff]
    %v307 = vld [vmem:[%s5 + $0x1a8] sm:$0xff]
    %v308 = vld [vmem:[%s5 + $0x1b0] sm:$0xff]
    %v309 = vld [vmem:[%s5 + $0x1b8] sm:$0xff]
    %v310 = vld [vmem:[%s5 + $0x1c0] sm:$0xff]
    %v311 = vld [vmem:[%s5 + $0x1c8] sm:$0xff]
    %v312 = vld [vmem:[%s5 + $0x1d0] sm:$0xff]
    %v313 = vld [vmem:[%s5 + $0x1d8] sm:$0xff]
    %v314 = vld [vmem:[%s5 + $0x1e0] sm:$0xff]
    %v315 = vld [vmem:[%s5 + $0x1e8] sm:$0xff]
    %v316 = vld [vmem:[%s5 + $0x1f0] sm:$0xff]
    %v317 = vld [vmem:[%s5 + $0x1f8] sm:$0xff]
    %v318 = vld [vmem:[%s5 + $0x200] sm:$0xff]
    %v319 = vld [vmem:[%s5 + $0x208] sm:$0xff]
    %v320 = vld [vmem:[%s5 + $0x210] sm:$0xff]
    %v321 = vld [vmem:[%s5 + $0x218] sm:$0xff]
    %v322 = vld [vmem:[%s5 + $0x220] sm:$0xff]
    %v323 = vld [vmem:[%s5 + $0x228] sm:$0xff]
    %v324 = vld [vmem:[%s5 + $0x230] sm:$0xff]
    %v325 = vld [vmem:[%s5 + $0x238] sm:$0xff]
    %v326 = vld [vmem:[%s5 + $0x240] sm:$0xff]
    %v327 = vld [vmem:[%s5 + $0x248] sm:$0xff]
    %v328 = vld [vmem:[%s5 + $0x250] sm:$0xff]
    %v329 = vld [vmem:[%s5 + $0x258] sm:$0xff]
    %v330 = vld [vmem:[%s5 + $0x260] sm:$0xff]
    %v331 = vld [vmem:[%s5 + $0x268] sm:$0xff]
    %v332 = vld [vmem:[%s5 + $0x270] sm:$0xff]
    %v333 = vld [vmem:[%s5 + $0x278] sm:$0xff]
    %v334 = vld [vmem:[%s5 + $0x280] sm:$0xff]
    %v335 = vld [vmem:[%s5 + $0x288] sm:$0xff]
    %v336 = vld [vmem:[%s5 + $0x290] sm:$0xff]
    %v337 = vld [vmem:[%s5 + $0x298] sm:$0xff]
    %v338 = vld [vmem:[%s5 + $0x2a0] sm:$0xff]
    %v339 = vld [vmem:[%s5 + $0x2a8] sm:$0xff]
    %v340 = vld [vmem:[%s5 + $0x2b0] sm:$0xff]
    %v341 = vld [vmem:[%s5 + $0x2b8] sm:$0xff]
    %v342 = vld [vmem:[%s5 + $0x2c0] sm:$0xff]
    %v343 = vld [vmem:[%s5 + $0x2c8] sm:$0xff]
    %v344 = vld [vmem:[%s5 + $0x2d0] sm:$0xff]
    %v345 = vld [vmem:[%s5 + $0x2d8] sm:$0xff]
    %v346 = vld [vmem:[%s5 + $0x2e0] sm:$0xff]
    %v347 = vld [vmem:[%s5 + $0x2e8] sm:$0xff]
    %v348 = vld [vmem:[%s5 + $0x2f0] sm:$0xff]
    %v349 = vld [vmem:[%s5 + $0x2f8] sm:$0xff]
    %v350 = vld [vmem:[%s5 + $0x300] sm:$0xff]
    %v351 = vld [vmem:[%s5 + $0x308] sm:$0xff]
    %v352 = vld [vmem:[%s5 + $0x310] sm:$0xff]
    %v353 = vld [vmem:[%s5 + $0x318] sm:$0xff]
    %v354 = vld [vmem:[%s5 + $0x320] sm:$0xff]
    %v355 = vld [vmem:[%s5 + $0x328] sm:$0xff]
    %v356 = vld [vmem:[%s5 + $0x330] sm:$0xff]
    %v357 = vld [vmem:[%s5 + $0x338] sm:$0xff]
    %v358 = vld [vmem:[%s5 + $0x340] sm:$0xff]
    %v359 = vld [vmem:[%s5 + $0x348] sm:$0xff]
    %v360 = vld [vmem:[%s5 + $0x350] sm:$0xff]
    %v361 = vld [vmem:[%s5 + $0x358] sm:$0xff]
    %v362 = vld [vmem:[%s5 + $0x360] sm:$0xff]
    %v363 = vld [vmem:[%s5 + $0x368] sm:$0xff]
    %v364 = vld [vmem:[%s5 + $0x370] sm:$0xff]
    %v365 = vld [vmem:[%s5 + $0x378] sm:$0xff]
    %v366 = vld [vmem:[%s5 + $0x380] sm:$0xff]
    %v367 = vld [vmem:[%s5 + $0x388] sm:$0xff]
    %v368 = vld [vmem:[%s5 + $0x390] sm:$0xff]
    %v369 = vld [vmem:[%s5 + $0x398] sm:$0xff]
    %v370 = vld [vmem:[%s5 + $0x3a0] sm:$0xff]
    %v371 = vld [vmem:[%s5 + $0x3a8] sm:$0xff]
    %v372 = vld [vmem:[%s5 + $0x3b0] sm:$0xff]
    %v373 = vld [vmem:[%s5 + $0x3b8] sm:$0xff]
    %v374 = vld [vmem:[%s5 + $0x3c0] sm:$0xff]
    %v375 = vld [vmem:[%s5 + $0x3c8] sm:$0xff]
    %v376 = vld [vmem:[%s5 + $0x3d0] sm:$0xff]
    %v377 = vld [vmem:[%s5 + $0x3d8] sm:$0xff]
    %v378 = vld [vmem:[%s5 + $0x3e0] sm:$0xff]
    %v379 = vld [vmem:[%s5 + $0x3e8] sm:$0xff]
    %v380 = vld [vmem:[%s5 + $0x3f0] sm:$0xff]
    %v381 = vld [vmem:[%s5 + $0x3f8] sm:$0xff]
    %382 = vmatprep.subr.mxu0 %v255
    %383 = vmatpush1.msra.mxu0 %v254
    %384 = vmatprep.subr.mxu0 %v263
    %385 = vmatpush1.msra.mxu0 %v262
    %386 = vmatprep.subr.mxu0 %v271
    %387 = vmatpush1.msra.mxu0 %v270
    %388 = vmatprep.subr.mxu0 %v279
    %389 = vmatpush1.msra.mxu0 %v278
    %390 = vmatprep.subr.mxu0 %v287
    %391 = vmatpush1.msra.mxu0 %v286
    %392 = vmatprep.subr.mxu0 %v295
    %393 = vmatpush1.msra.mxu0 %v294
    %394 = vmatprep.subr.mxu0 %v303
    %395 = vmatpush1.msra.mxu0 %v302
    %396 = vmatprep.subr.mxu0 %v311
    %397 = vmatpush1.msra.mxu0 %v310
    %398 = vmatprep.subr.mxu0 %v319
    %399 = vmatpush1.msra.mxu0 %v318
    %400 = vmatprep.subr.mxu0 %v327
    %401 = vmatpush1.msra.mxu0 %v326
    %402 = vmatprep.subr.mxu0 %v335
    %403 = vmatpush1.msra.mxu0 %v334
    %404 = vmatprep.subr.mxu0 %v343
    %405 = vmatpush1.msra.mxu0 %v342
    %406 = vmatprep.subr.mxu0 %v351
    %407 = vmatpush1.msra.mxu0 %v350
    %408 = vmatprep.subr.mxu0 %v359
    %409 = vmatpush1.msra.mxu0 %v358
    %410 = vmatprep.subr.mxu0 %v367
    %411 = vmatpush1.msra.mxu0 %v366
    %412 = vmatprep.subr.mxu0 %v375
    %413 = vmatpush1.msra.mxu0 %v374
    %414 = vmatprep.subr.mxu0 0.0
    %415 = vmatpush1.msra.mxu0 0.0
    %416 = vmatprep.subr.mxu0 0.0
    %417 = vmatpush1.msra.mxu0 0.0
    %418 = vmatprep.subr.mxu0 0.0
    %419 = vmatpush1.msra.mxu0 0.0
    %420 = vmatprep.subr.mxu0 0.0
    %421 = vmatpush1.msra.mxu0 0.0
    %422 = vmatprep.subr.mxu0 0.0
    %423 = vmatpush1.msra.mxu0 0.0
    %424 = vmatprep.subr.mxu0 0.0
    %425 = vmatpush1.msra.mxu0 0.0
    %426 = vmatprep.subr.mxu0 0.0
    %427 = vmatpush1.msra.mxu0 0.0
    %428 = vmatprep.subr.mxu0 0.0
    %429 = vmatpush1.msra.mxu0 0.0
    %430 = vmatprep.subr.mxu0 0.0
    %431 = vmatpush1.msra.mxu0 0.0
    %432 = vmatprep.subr.mxu0 0.0
    %433 = vmatpush1.msra.mxu0 0.0
    %434 = vmatprep.subr.mxu0 0.0
    %435 = vmatpush1.msra.mxu0 0.0
    %436 = vmatprep.subr.mxu0 0.0
    %437 = vmatpush1.msra.mxu0 0.0
    %438 = vmatprep.subr.mxu0 0.0
    %439 = vmatpush1.msra.mxu0 0.0
    %440 = vmatprep.subr.mxu0 0.0
    %441 = vmatpush1.msra.mxu0 0.0
    %442 = vmatprep.subr.mxu0 0.0
    %443 = vmatpush1.msra.mxu0 0.0
    %444 = vmatprep.subr.mxu0 0.0
    %445 = vmatpush1.msra.mxu0 0.0
    %446 = vmatprep.mubr.f32.mxu0 0.0
    %447 = vmatmul.mubr.f32.gmra.mrb[0].mxu0 %v220
    %v448 = vpop.f32.mrb[0].mxu0
    %v449 = vadd.f32 0.0, %v448
    %v450 = vpop.f32.mrb[0].mxu0
    %v451 = vadd.f32 0.0, %v450
    %452 = vmatprep.mubr.f32.mxu0 0.0
    %453 = vmatmul.mubr.f32.gmra.mrb[0].mxu0 %v225
    %v454 = vpop.f32.mrb[0].mxu0
    %v455 = vadd.f32 0.0, %v454
    %v456 = vpop.f32.mrb[0].mxu0
    %v457 = vadd.f32 0.0, %v456
    %458 = vmatprep.mubr.f32.mxu0 0.0
    %459 = vmatmul.mubr.f32.gmra.mrb[0].mxu0 %v230
    %v460 = vpop.f32.mrb[0].mxu0
    %v461 = vadd.f32 0.0, %v460
    %v462 = vpop.f32.mrb[0].mxu0
    %v463 = vadd.f32 0.0, %v462
    %464 = vmatprep.mubr.f32.mxu0 0.0
    %465 = vmatmul.mubr.f32.gmra.mrb[0].mxu0 %v235
    %v466 = vpop.f32.mrb[0].mxu0
    %v467 = vadd.f32 0.0, %v466
    %v468 = vpop.f32.mrb[0].mxu0
    %v469 = vadd.f32 0.0, %v468
    %470 = vdwg.mxu0
    %471 = vmatprep.subr.mxu0 %v257
    %472 = vmatpush1.msra.mxu0 %v256
    %473 = vmatprep.subr.mxu0 %v265
    %474 = vmatpush1.msra.mxu0 %v264
    %475 = vmatprep.subr.mxu0 %v273
    %476 = vmatpush1.msra.mxu0 %v272
    %477 = vmatprep.subr.mxu0 %v281
    %478 = vmatpush1.msra.mxu0 %v280
    %479 = vmatprep.subr.mxu0 %v289
    %480 = vmatpush1.msra.mxu0 %v288
    %481 = vmatprep.subr.mxu0 %v297
    %482 = vmatpush1.msra.mxu0 %v296
    %483 = vmatprep.subr.mxu0 %v305
    %484 = vmatpush1.msra.mxu0 %v304
    %485 = vmatprep.subr.mxu0 %v313
    %486 = vmatpush1.msra.mxu0 %v312
    %487 = vmatprep.subr.mxu0 %v321
    %488 = vmatpush1.msra.mxu0 %v320
    %489 = vmatprep.subr.mxu0 %v329
    %490 = vmatpush1.msra.mxu0 %v328
    %491 = vmatprep.subr.mxu0 %v337
    %492 = vmatpush1.msra.mxu0 %v336
    %493 = vmatprep.subr.mxu0 %v345
    %494 = vmatpush1.msra.mxu0 %v344
    %495 = vmatprep.subr.mxu0 %v353
    %496 = vmatpush1.msra.mxu0 %v352
    %497 = vmatprep.subr.mxu0 %v361
    %498 = vmatpush1.msra.mxu0 %v360
    %499 = vmatprep.subr.mxu0 %v369
    %500 = vmatpush1.msra.mxu0 %v368
    %501 = vmatprep.subr.mxu0 %v377
    %502 = vmatpush1.msra.mxu0 %v376
    %503 = vmatprep.subr.mxu0 0.0
    %504 = vmatpush1.msra.mxu0 0.0
    %505 = vmatprep.subr.mxu0 0.0
    %506 = vmatpush1.msra.mxu0 0.0
    %507 = vmatprep.subr.mxu0 0.0
    %508 = vmatpush1.msra.mxu0 0.0
    %509 = vmatprep.subr.mxu0 0.0
    %510 = vmatpush1.msra.mxu0 0.0
    %511 = vmatprep.subr.mxu0 0.0
    %512 = vmatpush1.msra.mxu0 0.0
    %513 = vmatprep.subr.mxu0 0.0
    %514 = vmatpush1.msra.mxu0 0.0
    %515 = vmatprep.subr.mxu0 0.0
    %516 = vmatpush1.msra.mxu0 0.0
    %517 = vmatprep.subr.mxu0 0.0
    %518 = vmatpush1.msra.mxu0 0.0
    %519 = vmatprep.subr.mxu0 0.0
    %520 = vmatpush1.msra.mxu0 0.0
    %521 = vmatprep.subr.mxu0 0.0
    %522 = vmatpush1.msra.mxu0 0.0
    %523 = vmatprep.subr.mxu0 0.0
    %524 = vmatpush1.msra.mxu0 0.0
    %525 = vmatprep.subr.mxu0 0.0
    %526 = vmatpush1.msra.mxu0 0.0
    %527 = vmatprep.subr.mxu0 0.0
    %528 = vmatpush1.msra.mxu0 0.0
    %529 = vmatprep.subr.mxu0 0.0
    %530 = vmatpush1.msra.mxu0 0.0
    %531 = vmatprep.subr.mxu0 0.0
    %532 = vmatpush1.msra.mxu0 0.0
    %533 = vmatprep.subr.mxu0 0.0
    %534 = vmatpush1.msra.mxu0 0.0
    %535 = vmatprep.mubr.f32.mxu0 0.0
    %536 = vmatmul.mubr.f32.gmra.mrb[0].mxu0 %v220
    %v537 = vpop.f32.mrb[0].mxu0
    %v538 = vadd.f32 0.0, %v537
    %v539 = vpop.f32.mrb[0].mxu0
    %v540 = vadd.f32 0.0, %v539
    %541 = vmatprep.mubr.f32.mxu0 0.0
    %542 = vmatmul.mubr.f32.gmra.mrb[0].mxu0 %v225
    %v543 = vpop.f32.mrb[0].mxu0
    %v544 = vadd.f32 0.0, %v543
    %v545 = vpop.f32.mrb[0].mxu0
    %v546 = vadd.f32 0.0, %v545
    %547 = vmatprep.mubr.f32.mxu0 0.0
    %548 = vmatmul.mubr.f32.gmra.mrb[0].mxu0 %v230
    %v549 = vpop.f32.mrb[0].mxu0
    %v550 = vadd.f32 0.0, %v549
    %v551 = vpop.f32.mrb[0].mxu0
    %v552 = vadd.f32 0.0, %v551
    %553 = vmatprep.mubr.f32.mxu0 0.0
    %554 = vmatmul.mubr.f32.gmra.mrb[0].mxu0 %v235
    %v555 = vpop.f32.mrb[0].mxu0
    %v556 = vadd.f32 0.0, %v555
    %v557 = vpop.f32.mrb[0].mxu0
    %v558 = vadd.f32 0.0, %v557
    %559 = vdwg.mxu0
    %560 = vmatprep.subr.mxu0 %v259
    %561 = vmatpush1.msra.mxu0 %v258
    %562 = vmatprep.subr.mxu0 %v267
    %563 = vmatpush1.msra.mxu0 %v266
    %564 = vmatprep.subr.mxu0 %v275
    %565 = vmatpush1.msra.mxu0 %v274
    %566 = vmatprep.subr.mxu0 %v283
    %567 = vmatpush1.msra.mxu0 %v282
    %568 = vmatprep.subr.mxu0 %v291
    %569 = vmatpush1.msra.mxu0 %v290
    %570 = vmatprep.subr.mxu0 %v299
    %571 = vmatpush1.msra.mxu0 %v298
    %572 = vmatprep.subr.mxu0 %v307
    %573 = vmatpush1.msra.mxu0 %v306
    %574 = vmatprep.subr.mxu0 %v315
    %575 = vmatpush1.msra.mxu0 %v314
    %576 = vmatprep.subr.mxu0 %v323
    %577 = vmatpush1.msra.mxu0 %v322
    %578 = vmatprep.subr.mxu0 %v331
    %579 = vmatpush1.msra.mxu0 %v330
    %580 = vmatprep.subr.mxu0 %v339
    %581 = vmatpush1.msra.mxu0 %v338
    %582 = vmatprep.subr.mxu0 %v347
    %583 = vmatpush1.msra.mxu0 %v346
    %584 = vmatprep.subr.mxu0 %v355
    %585 = vmatpush1.msra.mxu0 %v354
    %586 = vmatprep.subr.mxu0 %v363
    %587 = vmatpush1.msra.mxu0 %v362
    %588 = vmatprep.subr.mxu0 %v371
    %589 = vmatpush1.msra.mxu0 %v370
    %590 = vmatprep.subr.mxu0 %v379
    %591 = vmatpush1.msra.mxu0 %v378
    %592 = vmatprep.subr.mxu0 0.0
    %593 = vmatpush1.msra.mxu0 0.0
    %594 = vmatprep.subr.mxu0 0.0
    %595 = vmatpush1.msra.mxu0 0.0
    %596 = vmatprep.subr.mxu0 0.0
    %597 = vmatpush1.msra.mxu0 0.0
    %598 = vmatprep.subr.mxu0 0.0
    %599 = vmatpush1.msra.mxu0 0.0
    %600 = vmatprep.subr.mxu0 0.0
    %601 = vmatpush1.msra.mxu0 0.0
    %602 = vmatprep.subr.mxu0 0.0
    %603 = vmatpush1.msra.mxu0 0.0
    %604 = vmatprep.subr.mxu0 0.0
    %605 = vmatpush1.msra.mxu0 0.0
    %606 = vmatprep.subr.mxu0 0.0
    %607 = vmatpush1.msra.mxu0 0.0
    %608 = vmatprep.subr.mxu0 0.0
    %609 = vmatpush1.msra.mxu0 0.0
    %610 = vmatprep.subr.mxu0 0.0
    %611 = vmatpush1.msra.mxu0 0.0
    %612 = vmatprep.subr.mxu0 0.0
    %613 = vmatpush1.msra.mxu0 0.0
    %614 = vmatprep.subr.mxu0 0.0
    %615 = vmatpush1.msra.mxu0 0.0
    %616 = vmatprep.subr.mxu0 0.0
    %617 = vmatpush1.msra.mxu0 0.0
    %618 = vmatprep.subr.mxu0 0.0
    %619 = vmatpush1.msra.mxu0 0.0
    %620 = vmatprep.subr.mxu0 0.0
    %621 = vmatpush1.msra.mxu0 0.0
    %622 = vmatprep.subr.mxu0 0.0
    %623 = vmatpush1.msra.mxu0 0.0
    %624 = vmatprep.mubr.f32.mxu0 0.0
    %625 = vmatmul.mubr.f32.gmra.mrb[0].mxu0 %v220
    %v626 = vpop.f32.mrb[0].mxu0
    %v627 = vadd.f32 0.0, %v626
    %v628 = vpop.f32.mrb[0].mxu0
    %v629 = vadd.f32 0.0, %v628
    %630 = vmatprep.mubr.f32.mxu0 0.0
    %631 = vmatmul.mubr.f32.gmra.mrb[0].mxu0 %v225
    %v632 = vpop.f32.mrb[0].mxu0
    %v633 = vadd.f32 0.0, %v632
    %v634 = vpop.f32.mrb[0].mxu0
    %v635 = vadd.f32 0.0, %v634
    %636 = vmatprep.mubr.f32.mxu0 0.0
    %637 = vmatmul.mubr.f32.gmra.mrb[0].mxu0 %v230
    %v638 = vpop.f32.mrb[0].mxu0
    %v639 = vadd.f32 0.0, %v638
    %v640 = vpop.f32.mrb[0].mxu0
    %v641 = vadd.f32 0.0, %v640
    %642 = vmatprep.mubr.f32.mxu0 0.0
    %643 = vmatmul.mubr.f32.gmra.mrb[0].mxu0 %v235
    %v644 = vpop.f32.mrb[0].mxu0
    %v645 = vadd.f32 0.0, %v644
    %v646 = vpop.f32.mrb[0].mxu0
    %v647 = vadd.f32 0.0, %v646
    %648 = vdwg.mxu0
    %649 = vmatprep.subr.mxu0 %v261
    %650 = vmatpush1.msra.mxu0 %v260
    %651 = vmatprep.subr.mxu0 %v269
    %652 = vmatpush1.msra.mxu0 %v268
    %653 = vmatprep.subr.mxu0 %v277
    %654 = vmatpush1.msra.mxu0 %v276
    %655 = vmatprep.subr.mxu0 %v285
    %656 = vmatpush1.msra.mxu0 %v284
    %657 = vmatprep.subr.mxu0 %v293
    %658 = vmatpush1.msra.mxu0 %v292
    %659 = vmatprep.subr.mxu0 %v301
    %660 = vmatpush1.msra.mxu0 %v300
    %661 = vmatprep.subr.mxu0 %v309
    %662 = vmatpush1.msra.mxu0 %v308
    %663 = vmatprep.subr.mxu0 %v317
    %664 = vmatpush1.msra.mxu0 %v316
    %665 = vmatprep.subr.mxu0 %v325
    %666 = vmatpush1.msra.mxu0 %v324
    %667 = vmatprep.subr.mxu0 %v333
    %668 = vmatpush1.msra.mxu0 %v332
    %669 = vmatprep.subr.mxu0 %v341
    %670 = vmatpush1.msra.mxu0 %v340
    %671 = vmatprep.subr.mxu0 %v349
    %672 = vmatpush1.msra.mxu0 %v348
    %673 = vmatprep.subr.mxu0 %v357
    %674 = vmatpush1.msra.mxu0 %v356
    %675 = vmatprep.subr.mxu0 %v365
    %676 = vmatpush1.msra.mxu0 %v364
    %677 = vmatprep.subr.mxu0 %v373
    %678 = vmatpush1.msra.mxu0 %v372
    %679 = vmatprep.subr.mxu0 %v381
    %680 = vmatpush1.msra.mxu0 %v380
    %681 = vmatprep.subr.mxu0 0.0
    %682 = vmatpush1.msra.mxu0 0.0
    %683 = vmatprep.subr.mxu0 0.0
    %684 = vmatpush1.msra.mxu0 0.0
    %685 = vmatprep.subr.mxu0 0.0
    %686 = vmatpush1.msra.mxu0 0.0
    %687 = vmatprep.subr.mxu0 0.0
    %688 = vmatpush1.msra.mxu0 0.0
    %689 = vmatprep.subr.mxu0 0.0
    %690 = vmatpush1.msra.mxu0 0.0
    %691 = vmatprep.subr.mxu0 0.0
    %692 = vmatpush1.msra.mxu0 0.0
    %693 = vmatprep.subr.mxu0 0.0
    %694 = vmatpush1.msra.mxu0 0.0
    %695 = vmatprep.subr.mxu0 0.0
    %696 = vmatpush1.msra.mxu0 0.0
    %697 = vmatprep.subr.mxu0 0.0
    %698 = vmatpush1.msra.mxu0 0.0
    %699 = vmatprep.subr.mxu0 0.0
    %700 = vmatpush1.msra.mxu0 0.0
    %701 = vmatprep.subr.mxu0 0.0
    %702 = vmatpush1.msra.mxu0 0.0
    %703 = vmatprep.subr.mxu0 0.0
    %704 = vmatpush1.msra.mxu0 0.0
    %705 = vmatprep.subr.mxu0 0.0
    %706 = vmatpush1.msra.mxu0 0.0
    %707 = vmatprep.subr.mxu0 0.0
    %708 = vmatpush1.msra.mxu0 0.0
    %709 = vmatprep.subr.mxu0 0.0
    %710 = vmatpush1.msra.mxu0 0.0
    %711 = vmatprep.subr.mxu0 0.0
    %712 = vmatpush1.msra.mxu0 0.0
    %713 = vmatprep.mubr.f32.mxu0 0.0
    %714 = vmatmul.mubr.f32.gmra.mrb[0].mxu0 %v220
    %v715 = vpop.f32.mrb[0].mxu0
    %v716 = vadd.f32 0.0, %v715
    %v717 = vpop.f32.mrb[0].mxu0
    %v718 = vadd.f32 0.0, %v717
    %719 = vmatprep.mubr.f32.mxu0 0.0
    %720 = vmatmul.mubr.f32.gmra.mrb[0].mxu0 %v225
    %v721 = vpop.f32.mrb[0].mxu0
    %v722 = vadd.f32 0.0, %v721
    %v723 = vpop.f32.mrb[0].mxu0
    %v724 = vadd.f32 0.0, %v723
    %725 = vmatprep.mubr.f32.mxu0 0.0
    %726 = vmatmul.mubr.f32.gmra.mrb[0].mxu0 %v230
    %v727 = vpop.f32.mrb[0].mxu0
    %v728 = vadd.f32 0.0, %v727
    %v729 = vpop.f32.mrb[0].mxu0
    %v730 = vadd.f32 0.0, %v729
    %731 = vmatprep.mubr.f32.mxu0 0.0
    %732 = vmatmul.mubr.f32.gmra.mrb[0].mxu0 %v235
    %v733 = vpop.f32.mrb[0].mxu0
    %v734 = vadd.f32 0.0, %v733
    %v735 = vpop.f32.mrb[0].mxu0
    %v736 = vadd.f32 0.0, %v735
    %737 = vdwg.mxu0
    %v738 = vld [vmem:[#allocation7] sm:$0xff]
    %v739 = vld [vmem:[#allocation7 + $0x8] sm:$0xff]
    %v740 = vld [vmem:[#allocation7 + $0x10] sm:$0xff]
    %v741 = vld [vmem:[#allocation7 + $0x18] sm:$0xff]
    %s742 = scalar_lea.vmem [#allocation7], 32
    %v743 = vld [vmem:[%s742] sm:$0xff]
    %v744 = vld [vmem:[%s742 + $0x8] sm:$0xff]
    %v745 = vld [vmem:[%s742 + $0x10] sm:$0xff]
    %v746 = vld [vmem:[%s742 + $0x18] sm:$0xff]
    %vm747 = vcmask 261120
    %v749 = vsel %vm747, %v743, 0
    %v752 = vsel %vm747, %v744, 0
    %v755 = vsel %vm747, %v745, 0
    %v758 = vsel %vm747, %v746, 0
    %760 = vmatprep.subr.mxu0 0.0
    %761 = vmatpush1.msra.mxu0 %v451
    %762 = vmatprep.subr.mxu0 0.0
    %763 = vmatpush1.msra.mxu0 %v457
    %764 = vmatprep.subr.mxu0 0.0
    %765 = vmatpush1.msra.mxu0 %v463
    %766 = vmatprep.subr.mxu0 0.0
    %767 = vmatpush1.msra.mxu0 %v469
    %768 = vmatprep.subr.mxu0 0.0
    %769 = vmatpush1.msra.mxu0 0.0
    %770 = vmatprep.subr.mxu0 0.0
    %771 = vmatpush1.msra.mxu0 0.0
    %772 = vmatprep.subr.mxu0 0.0
    %773 = vmatpush1.msra.mxu0 0.0
    %774 = vmatprep.subr.mxu0 0.0
    %775 = vmatpush1.msra.mxu0 0.0
    %776 = vmatprep.subr.mxu0 0.0
    %777 = vmatpush1.msra.mxu0 0.0
    %778 = vmatprep.subr.mxu0 0.0
    %779 = vmatpush1.msra.mxu0 0.0
    %780 = vmatprep.subr.mxu0 0.0
    %781 = vmatpush1.msra.mxu0 0.0
    %782 = vmatprep.subr.mxu0 0.0
    %783 = vmatpush1.msra.mxu0 0.0
    %784 = vmatprep.subr.mxu0 0.0
    %785 = vmatpush1.msra.mxu0 0.0
    %786 = vmatprep.subr.mxu0 0.0
    %787 = vmatpush1.msra.mxu0 0.0
    %788 = vmatprep.subr.mxu0 0.0
    %789 = vmatpush1.msra.mxu0 0.0
    %790 = vmatprep.subr.mxu0 0.0
    %791 = vmatpush1.msra.mxu0 0.0
    %792 = vmatprep.subr.mxu0 0.0
    %793 = vmatpush1.msra.mxu0 0.0
    %794 = vmatprep.subr.mxu0 0.0
    %795 = vmatpush1.msra.mxu0 0.0
    %796 = vmatprep.subr.mxu0 0.0
    %797 = vmatpush1.msra.mxu0 0.0
    %798 = vmatprep.subr.mxu0 0.0
    %799 = vmatpush1.msra.mxu0 0.0
    %800 = vmatprep.subr.mxu0 0.0
    %801 = vmatpush1.msra.mxu0 0.0
    %802 = vmatprep.subr.mxu0 0.0
    %803 = vmatpush1.msra.mxu0 0.0
    %804 = vmatprep.subr.mxu0 0.0
    %805 = vmatpush1.msra.mxu0 0.0
    %806 = vmatprep.subr.mxu0 0.0
    %807 = vmatpush1.msra.mxu0 0.0
    %808 = vmatprep.subr.mxu0 0.0
    %809 = vmatpush1.msra.mxu0 0.0
    %810 = vmatprep.subr.mxu0 0.0
    %811 = vmatpush1.msra.mxu0 0.0
    %812 = vmatprep.subr.mxu0 0.0
    %813 = vmatpush1.msra.mxu0 0.0
    %814 = vmatprep.subr.mxu0 0.0
    %815 = vmatpush1.msra.mxu0 0.0
    %816 = vmatprep.subr.mxu0 0.0
    %817 = vmatpush1.msra.mxu0 0.0
    %818 = vmatprep.subr.mxu0 0.0
    %819 = vmatpush1.msra.mxu0 0.0
    %820 = vmatprep.subr.mxu0 0.0
    %821 = vmatpush1.msra.mxu0 0.0
    %822 = vmatprep.subr.mxu0 0.0
    %823 = vmatpush1.msra.mxu0 0.0
    %824 = vmatprep.mubr.f32.mxu0 0.0
    %825 = vmatmul.mubr.f32.gmra.mrb[0].mxu0 %v749
    %v826 = vpop.f32.mrb[0].mxu0
    %v827 = vadd.f32 0.0, %v826
    %v828 = vpop.f32.mrb[0].mxu0
    %829 = vmatprep.mubr.f32.mxu0 0.0
    %830 = vmatmul.mubr.f32.gmra.mrb[0].mxu0 %v752
    %v831 = vpop.f32.mrb[0].mxu0
    %v832 = vadd.f32 0.0, %v831
    %v833 = vpop.f32.mrb[0].mxu0
    %834 = vmatprep.mubr.f32.mxu0 0.0
    %835 = vmatmul.mubr.f32.gmra.mrb[0].mxu0 %v755
    %v836 = vpop.f32.mrb[0].mxu0
    %v837 = vadd.f32 0.0, %v836
    %v838 = vpop.f32.mrb[0].mxu0
    %839 = vmatprep.mubr.f32.mxu0 0.0
    %840 = vmatmul.mubr.f32.gmra.mrb[0].mxu0 %v758
    %v841 = vpop.f32.mrb[0].mxu0
    %v842 = vadd.f32 0.0, %v841
    %v843 = vpop.f32.mrb[0].mxu0
    %844 = vdwg.mxu0
    %v846 = vsel %vm747, %v738, 0
    %v849 = vsel %vm747, %v739, 0
    %v852 = vsel %vm747, %v740, 0
    %v855 = vsel %vm747, %v741, 0
    %857 = vmatprep.subr.mxu0 0.0
    %858 = vmatpush1.msra.mxu0 %v449
    %859 = vmatprep.subr.mxu0 0.0
    %860 = vmatpush1.msra.mxu0 %v455
    %861 = vmatprep.subr.mxu0 0.0
    %862 = vmatpush1.msra.mxu0 %v461
    %863 = vmatprep.subr.mxu0 0.0
    %864 = vmatpush1.msra.mxu0 %v467
    %865 = vmatprep.subr.mxu0 0.0
    %866 = vmatpush1.msra.mxu0 0.0
    %867 = vmatprep.subr.mxu0 0.0
    %868 = vmatpush1.msra.mxu0 0.0
    %869 = vmatprep.subr.mxu0 0.0
    %870 = vmatpush1.msra.mxu0 0.0
    %871 = vmatprep.subr.mxu0 0.0
    %872 = vmatpush1.msra.mxu0 0.0
    %873 = vmatprep.subr.mxu0 0.0
    %874 = vmatpush1.msra.mxu0 0.0
    %875 = vmatprep.subr.mxu0 0.0
    %876 = vmatpush1.msra.mxu0 0.0
    %877 = vmatprep.subr.mxu0 0.0
    %878 = vmatpush1.msra.mxu0 0.0
    %879 = vmatprep.subr.mxu0 0.0
    %880 = vmatpush1.msra.mxu0 0.0
    %881 = vmatprep.subr.mxu0 0.0
    %882 = vmatpush1.msra.mxu0 0.0
    %883 = vmatprep.subr.mxu0 0.0
    %884 = vmatpush1.msra.mxu0 0.0
    %885 = vmatprep.subr.mxu0 0.0
    %886 = vmatpush1.msra.mxu0 0.0
    %887 = vmatprep.subr.mxu0 0.0
    %888 = vmatpush1.msra.mxu0 0.0
    %889 = vmatprep.subr.mxu0 0.0
    %890 = vmatpush1.msra.mxu0 0.0
    %891 = vmatprep.subr.mxu0 0.0
    %892 = vmatpush1.msra.mxu0 0.0
    %893 = vmatprep.subr.mxu0 0.0
    %894 = vmatpush1.msra.mxu0 0.0
    %895 = vmatprep.subr.mxu0 0.0
    %896 = vmatpush1.msra.mxu0 0.0
    %897 = vmatprep.subr.mxu0 0.0
    %898 = vmatpush1.msra.mxu0 0.0
    %899 = vmatprep.subr.mxu0 0.0
    %900 = vmatpush1.msra.mxu0 0.0
    %901 = vmatprep.subr.mxu0 0.0
    %902 = vmatpush1.msra.mxu0 0.0
    %903 = vmatprep.subr.mxu0 0.0
    %904 = vmatpush1.msra.mxu0 0.0
    %905 = vmatprep.subr.mxu0 0.0
    %906 = vmatpush1.msra.mxu0 0.0
    %907 = vmatprep.subr.mxu0 0.0
    %908 = vmatpush1.msra.mxu0 0.0
    %909 = vmatprep.subr.mxu0 0.0
    %910 = vmatpush1.msra.mxu0 0.0
    %911 = vmatprep.subr.mxu0 0.0
    %912 = vmatpush1.msra.mxu0 0.0
    %913 = vmatprep.subr.mxu0 0.0
    %914 = vmatpush1.msra.mxu0 0.0
    %915 = vmatprep.subr.mxu0 0.0
    %916 = vmatpush1.msra.mxu0 0.0
    %917 = vmatprep.subr.mxu0 0.0
    %918 = vmatpush1.msra.mxu0 0.0
    %919 = vmatprep.subr.mxu0 0.0
    %920 = vmatpush1.msra.mxu0 0.0
    %921 = vmatprep.mubr.f32.mxu0 0.0
    %922 = vmatmul.mubr.f32.gmra.mrb[0].mxu0 %v846
    %v923 = vpop.f32.mrb[0].mxu0
    %v924 = vadd.f32 %v827, %v923
    %v925 = vpop.f32.mrb[0].mxu0
    %926 = vmatprep.mubr.f32.mxu0 0.0
    %927 = vmatmul.mubr.f32.gmra.mrb[0].mxu0 %v849
    %v928 = vpop.f32.mrb[0].mxu0
    %v929 = vadd.f32 %v832, %v928
    %v930 = vpop.f32.mrb[0].mxu0
    %931 = vmatprep.mubr.f32.mxu0 0.0
    %932 = vmatmul.mubr.f32.gmra.mrb[0].mxu0 %v852
    %v933 = vpop.f32.mrb[0].mxu0
    %v934 = vadd.f32 %v837, %v933
    %v935 = vpop.f32.mrb[0].mxu0
    %936 = vmatprep.mubr.f32.mxu0 0.0
    %937 = vmatmul.mubr.f32.gmra.mrb[0].mxu0 %v855
    %v938 = vpop.f32.mrb[0].mxu0
    %v939 = vadd.f32 %v842, %v938
    %v940 = vpop.f32.mrb[0].mxu0
    %941 = vdwg.mxu0
    %s942 = scalar_lea.vmem [#allocation7], 64
    %v943 = vld [vmem:[%s942] sm:$0xff]
    %v944 = vld [vmem:[%s942 + $0x8] sm:$0xff]
    %v945 = vld [vmem:[%s942 + $0x10] sm:$0xff]
    %v946 = vld [vmem:[%s942 + $0x18] sm:$0xff]
    %v948 = vsel %vm747, %v943, 0
    %v951 = vsel %vm747, %v944, 0
    %v954 = vsel %vm747, %v945, 0
    %v957 = vsel %vm747, %v946, 0
    %959 = vmatprep.subr.mxu0 0.0
    %960 = vmatpush1.msra.mxu0 %v538
    %961 = vmatprep.subr.mxu0 0.0
    %962 = vmatpush1.msra.mxu0 %v544
    %963 = vmatprep.subr.mxu0 0.0
    %964 = vmatpush1.msra.mxu0 %v550
    %965 = vmatprep.subr.mxu0 0.0
    %966 = vmatpush1.msra.mxu0 %v556
    %967 = vmatprep.subr.mxu0 0.0
    %968 = vmatpush1.msra.mxu0 0.0
    %969 = vmatprep.subr.mxu0 0.0
    %970 = vmatpush1.msra.mxu0 0.0
    %971 = vmatprep.subr.mxu0 0.0
    %972 = vmatpush1.msra.mxu0 0.0
    %973 = vmatprep.subr.mxu0 0.0
    %974 = vmatpush1.msra.mxu0 0.0
    %975 = vmatprep.subr.mxu0 0.0
    %976 = vmatpush1.msra.mxu0 0.0
    %977 = vmatprep.subr.mxu0 0.0
    %978 = vmatpush1.msra.mxu0 0.0
    %979 = vmatprep.subr.mxu0 0.0
    %980 = vmatpush1.msra.mxu0 0.0
    %981 = vmatprep.subr.mxu0 0.0
    %982 = vmatpush1.msra.mxu0 0.0
    %983 = vmatprep.subr.mxu0 0.0
    %984 = vmatpush1.msra.mxu0 0.0
    %985 = vmatprep.subr.mxu0 0.0
    %986 = vmatpush1.msra.mxu0 0.0
    %987 = vmatprep.subr.mxu0 0.0
    %988 = vmatpush1.msra.mxu0 0.0
    %989 = vmatprep.subr.mxu0 0.0
    %990 = vmatpush1.msra.mxu0 0.0
    %991 = vmatprep.subr.mxu0 0.0
    %992 = vmatpush1.msra.mxu0 0.0
    %993 = vmatprep.subr.mxu0 0.0
    %994 = vmatpush1.msra.mxu0 0.0
    %995 = vmatprep.subr.mxu0 0.0
    %996 = vmatpush1.msra.mxu0 0.0
    %997 = vmatprep.subr.mxu0 0.0
    %998 = vmatpush1.msra.mxu0 0.0
    %999 = vmatprep.subr.mxu0 0.0
    %1000 = vmatpush1.msra.mxu0 0.0
    %1001 = vmatprep.subr.mxu0 0.0
    %1002 = vmatpush1.msra.mxu0 0.0
    %1003 = vmatprep.subr.mxu0 0.0
    %1004 = vmatpush1.msra.mxu0 0.0
    %1005 = vmatprep.subr.mxu0 0.0
    %1006 = vmatpush1.msra.mxu0 0.0
    %1007 = vmatprep.subr.mxu0 0.0
    %1008 = vmatpush1.msra.mxu0 0.0
    %1009 = vmatprep.subr.mxu0 0.0
    %1010 = vmatpush1.msra.mxu0 0.0
    %1011 = vmatprep.subr.mxu0 0.0
    %1012 = vmatpush1.msra.mxu0 0.0
    %1013 = vmatprep.subr.mxu0 0.0
    %1014 = vmatpush1.msra.mxu0 0.0
    %1015 = vmatprep.subr.mxu0 0.0
    %1016 = vmatpush1.msra.mxu0 0.0
    %1017 = vmatprep.subr.mxu0 0.0
    %1018 = vmatpush1.msra.mxu0 0.0
    %1019 = vmatprep.subr.mxu0 0.0
    %1020 = vmatpush1.msra.mxu0 0.0
    %1021 = vmatprep.subr.mxu0 0.0
    %1022 = vmatpush1.msra.mxu0 0.0
    %1023 = vmatprep.mubr.f32.mxu0 0.0
    %1024 = vmatmul.mubr.f32.gmra.mrb[0].mxu0 %v948
    %v1025 = vpop.f32.mrb[0].mxu0
    %v1026 = vadd.f32 0.0, %v1025
    %v1027 = vpop.f32.mrb[0].mxu0
    %1028 = vmatprep.mubr.f32.mxu0 0.0
    %1029 = vmatmul.mubr.f32.gmra.mrb[0].mxu0 %v951
    %v1030 = vpop.f32.mrb[0].mxu0
    %v1031 = vadd.f32 0.0, %v1030
    %v1032 = vpop.f32.mrb[0].mxu0
    %1033 = vmatprep.mubr.f32.mxu0 0.0
    %1034 = vmatmul.mubr.f32.gmra.mrb[0].mxu0 %v954
    %v1035 = vpop.f32.mrb[0].mxu0
    %v1036 = vadd.f32 0.0, %v1035
    %v1037 = vpop.f32.mrb[0].mxu0
    %1038 = vmatprep.mubr.f32.mxu0 0.0
    %1039 = vmatmul.mubr.f32.gmra.mrb[0].mxu0 %v957
    %v1040 = vpop.f32.mrb[0].mxu0
    %v1041 = vadd.f32 0.0, %v1040
    %v1042 = vpop.f32.mrb[0].mxu0
    %1043 = vdwg.mxu0
    %v1044 = vadd.f32 %v924, %v1026
    %v1045 = vadd.f32 %v929, %v1031
    %v1046 = vadd.f32 %v934, %v1036
    %v1047 = vadd.f32 %v939, %v1041
    %s1048 = scalar_lea.vmem [#allocation7], 96
    %v1049 = vld [vmem:[%s1048] sm:$0xff]
    %v1050 = vld [vmem:[%s1048 + $0x8] sm:$0xff]
    %v1051 = vld [vmem:[%s1048 + $0x10] sm:$0xff]
    %v1052 = vld [vmem:[%s1048 + $0x18] sm:$0xff]
    %v1054 = vsel %vm747, %v1049, 0
    %v1057 = vsel %vm747, %v1050, 0
    %v1060 = vsel %vm747, %v1051, 0
    %v1063 = vsel %vm747, %v1052, 0
    %1065 = vmatprep.subr.mxu0 0.0
    %1066 = vmatpush1.msra.mxu0 %v540
    %1067 = vmatprep.subr.mxu0 0.0
    %1068 = vmatpush1.msra.mxu0 %v546
    %1069 = vmatprep.subr.mxu0 0.0
    %1070 = vmatpush1.msra.mxu0 %v552
    %1071 = vmatprep.subr.mxu0 0.0
    %1072 = vmatpush1.msra.mxu0 %v558
    %1073 = vmatprep.subr.mxu0 0.0
    %1074 = vmatpush1.msra.mxu0 0.0
    %1075 = vmatprep.subr.mxu0 0.0
    %1076 = vmatpush1.msra.mxu0 0.0
    %1077 = vmatprep.subr.mxu0 0.0
    %1078 = vmatpush1.msra.mxu0 0.0
    %1079 = vmatprep.subr.mxu0 0.0
    %1080 = vmatpush1.msra.mxu0 0.0
    %1081 = vmatprep.subr.mxu0 0.0
    %1082 = vmatpush1.msra.mxu0 0.0
    %1083 = vmatprep.subr.mxu0 0.0
    %1084 = vmatpush1.msra.mxu0 0.0
    %1085 = vmatprep.subr.mxu0 0.0
    %1086 = vmatpush1.msra.mxu0 0.0
    %1087 = vmatprep.subr.mxu0 0.0
    %1088 = vmatpush1.msra.mxu0 0.0
    %1089 = vmatprep.subr.mxu0 0.0
    %1090 = vmatpush1.msra.mxu0 0.0
    %1091 = vmatprep.subr.mxu0 0.0
    %1092 = vmatpush1.msra.mxu0 0.0
    %1093 = vmatprep.subr.mxu0 0.0
    %1094 = vmatpush1.msra.mxu0 0.0
    %1095 = vmatprep.subr.mxu0 0.0
    %1096 = vmatpush1.msra.mxu0 0.0
    %1097 = vmatprep.subr.mxu0 0.0
    %1098 = vmatpush1.msra.mxu0 0.0
    %1099 = vmatprep.subr.mxu0 0.0
    %1100 = vmatpush1.msra.mxu0 0.0
    %1101 = vmatprep.subr.mxu0 0.0
    %1102 = vmatpush1.msra.mxu0 0.0
    %1103 = vmatprep.subr.mxu0 0.0
    %1104 = vmatpush1.msra.mxu0 0.0
    %1105 = vmatprep.subr.mxu0 0.0
    %1106 = vmatpush1.msra.mxu0 0.0
    %1107 = vmatprep.subr.mxu0 0.0
    %1108 = vmatpush1.msra.mxu0 0.0
    %1109 = vmatprep.subr.mxu0 0.0
    %1110 = vmatpush1.msra.mxu0 0.0
    %1111 = vmatprep.subr.mxu0 0.0
    %1112 = vmatpush1.msra.mxu0 0.0
    %1113 = vmatprep.subr.mxu0 0.0
    %1114 = vmatpush1.msra.mxu0 0.0
    %1115 = vmatprep.subr.mxu0 0.0
    %1116 = vmatpush1.msra.mxu0 0.0
    %1117 = vmatprep.subr.mxu0 0.0
    %1118 = vmatpush1.msra.mxu0 0.0
    %1119 = vmatprep.subr.mxu0 0.0
    %1120 = vmatpush1.msra.mxu0 0.0
    %1121 = vmatprep.subr.mxu0 0.0
    %1122 = vmatpush1.msra.mxu0 0.0
    %1123 = vmatprep.subr.mxu0 0.0
    %1124 = vmatpush1.msra.mxu0 0.0
    %1125 = vmatprep.subr.mxu0 0.0
    %1126 = vmatpush1.msra.mxu0 0.0
    %1127 = vmatprep.subr.mxu0 0.0
    %1128 = vmatpush1.msra.mxu0 0.0
    %1129 = vmatprep.mubr.f32.mxu0 0.0
    %1130 = vmatmul.mubr.f32.gmra.mrb[0].mxu0 %v1054
    %v1131 = vpop.f32.mrb[0].mxu0
    %v1132 = vadd.f32 0.0, %v1131
    %v1133 = vpop.f32.mrb[0].mxu0
    %1134 = vmatprep.mubr.f32.mxu0 0.0
    %1135 = vmatmul.mubr.f32.gmra.mrb[0].mxu0 %v1057
    %v1136 = vpop.f32.mrb[0].mxu0
    %v1137 = vadd.f32 0.0, %v1136
    %v1138 = vpop.f32.mrb[0].mxu0
    %1139 = vmatprep.mubr.f32.mxu0 0.0
    %1140 = vmatmul.mubr.f32.gmra.mrb[0].mxu0 %v1060
    %v1141 = vpop.f32.mrb[0].mxu0
    %v1142 = vadd.f32 0.0, %v1141
    %v1143 = vpop.f32.mrb[0].mxu0
    %1144 = vmatprep.mubr.f32.mxu0 0.0
    %1145 = vmatmul.mubr.f32.gmra.mrb[0].mxu0 %v1063
    %v1146 = vpop.f32.mrb[0].mxu0
    %v1147 = vadd.f32 0.0, %v1146
    %v1148 = vpop.f32.mrb[0].mxu0
    %1149 = vdwg.mxu0
    %v1150 = vadd.f32 %v1044, %v1132
    %v1151 = vadd.f32 %v1045, %v1137
    %v1152 = vadd.f32 %v1046, %v1142
    %v1153 = vadd.f32 %v1047, %v1147
    %s1154 = scalar_lea.vmem [#allocation7], 128
    %v1155 = vld [vmem:[%s1154] sm:$0xff]
    %v1156 = vld [vmem:[%s1154 + $0x8] sm:$0xff]
    %v1157 = vld [vmem:[%s1154 + $0x10] sm:$0xff]
    %v1158 = vld [vmem:[%s1154 + $0x18] sm:$0xff]
    %v1160 = vsel %vm747, %v1155, 0
    %v1163 = vsel %vm747, %v1156, 0
    %v1166 = vsel %vm747, %v1157, 0
    %v1169 = vsel %vm747, %v1158, 0
    %1171 = vmatprep.subr.mxu0 0.0
    %1172 = vmatpush1.msra.mxu0 %v627
    %1173 = vmatprep.subr.mxu0 0.0
    %1174 = vmatpush1.msra.mxu0 %v633
    %1175 = vmatprep.subr.mxu0 0.0
    %1176 = vmatpush1.msra.mxu0 %v639
    %1177 = vmatprep.subr.mxu0 0.0
    %1178 = vmatpush1.msra.mxu0 %v645
    %1179 = vmatprep.subr.mxu0 0.0
    %1180 = vmatpush1.msra.mxu0 0.0
    %1181 = vmatprep.subr.mxu0 0.0
    %1182 = vmatpush1.msra.mxu0 0.0
    %1183 = vmatprep.subr.mxu0 0.0
    %1184 = vmatpush1.msra.mxu0 0.0
    %1185 = vmatprep.subr.mxu0 0.0
    %1186 = vmatpush1.msra.mxu0 0.0
    %1187 = vmatprep.subr.mxu0 0.0
    %1188 = vmatpush1.msra.mxu0 0.0
    %1189 = vmatprep.subr.mxu0 0.0
    %1190 = vmatpush1.msra.mxu0 0.0
    %1191 = vmatprep.subr.mxu0 0.0
    %1192 = vmatpush1.msra.mxu0 0.0
    %1193 = vmatprep.subr.mxu0 0.0
    %1194 = vmatpush1.msra.mxu0 0.0
    %1195 = vmatprep.subr.mxu0 0.0
    %1196 = vmatpush1.msra.mxu0 0.0
    %1197 = vmatprep.subr.mxu0 0.0
    %1198 = vmatpush1.msra.mxu0 0.0
    %1199 = vmatprep.subr.mxu0 0.0
    %1200 = vmatpush1.msra.mxu0 0.0
    %1201 = vmatprep.subr.mxu0 0.0
    %1202 = vmatpush1.msra.mxu0 0.0
    %1203 = vmatprep.subr.mxu0 0.0
    %1204 = vmatpush1.msra.mxu0 0.0
    %1205 = vmatprep.subr.mxu0 0.0
    %1206 = vmatpush1.msra.mxu0 0.0
    %1207 = vmatprep.subr.mxu0 0.0
    %1208 = vmatpush1.msra.mxu0 0.0
    %1209 = vmatprep.subr.mxu0 0.0
    %1210 = vmatpush1.msra.mxu0 0.0
    %1211 = vmatprep.subr.mxu0 0.0
    %1212 = vmatpush1.msra.mxu0 0.0
    %1213 = vmatprep.subr.mxu0 0.0
    %1214 = vmatpush1.msra.mxu0 0.0
    %1215 = vmatprep.subr.mxu0 0.0
    %1216 = vmatpush1.msra.mxu0 0.0
    %1217 = vmatprep.subr.mxu0 0.0
    %1218 = vmatpush1.msra.mxu0 0.0
    %1219 = vmatprep.subr.mxu0 0.0
    %1220 = vmatpush1.msra.mxu0 0.0
    %1221 = vmatprep.subr.mxu0 0.0
    %1222 = vmatpush1.msra.mxu0 0.0
    %1223 = vmatprep.subr.mxu0 0.0
    %1224 = vmatpush1.msra.mxu0 0.0
    %1225 = vmatprep.subr.mxu0 0.0
    %1226 = vmatpush1.msra.mxu0 0.0
    %1227 = vmatprep.subr.mxu0 0.0
    %1228 = vmatpush1.msra.mxu0 0.0
    %1229 = vmatprep.subr.mxu0 0.0
    %1230 = vmatpush1.msra.mxu0 0.0
    %1231 = vmatprep.subr.mxu0 0.0
    %1232 = vmatpush1.msra.mxu0 0.0
    %1233 = vmatprep.subr.mxu0 0.0
    %1234 = vmatpush1.msra.mxu0 0.0
    %1235 = vmatprep.mubr.f32.mxu0 0.0
    %1236 = vmatmul.mubr.f32.gmra.mrb[0].mxu0 %v1160
    %v1237 = vpop.f32.mrb[0].mxu0
    %v1238 = vadd.f32 0.0, %v1237
    %v1239 = vpop.f32.mrb[0].mxu0
    %1240 = vmatprep.mubr.f32.mxu0 0.0
    %1241 = vmatmul.mubr.f32.gmra.mrb[0].mxu0 %v1163
    %v1242 = vpop.f32.mrb[0].mxu0
    %v1243 = vadd.f32 0.0, %v1242
    %v1244 = vpop.f32.mrb[0].mxu0
    %1245 = vmatprep.mubr.f32.mxu0 0.0
    %1246 = vmatmul.mubr.f32.gmra.mrb[0].mxu0 %v1166
    %v1247 = vpop.f32.mrb[0].mxu0
    %v1248 = vadd.f32 0.0, %v1247
    %v1249 = vpop.f32.mrb[0].mxu0
    %1250 = vmatprep.mubr.f32.mxu0 0.0
    %1251 = vmatmul.mubr.f32.gmra.mrb[0].mxu0 %v1169
    %v1252 = vpop.f32.mrb[0].mxu0
    %v1253 = vadd.f32 0.0, %v1252
    %v1254 = vpop.f32.mrb[0].mxu0
    %1255 = vdwg.mxu0
    %v1256 = vadd.f32 %v1150, %v1238
    %v1257 = vadd.f32 %v1151, %v1243
    %v1258 = vadd.f32 %v1152, %v1248
    %v1259 = vadd.f32 %v1153, %v1253
    %s1260 = scalar_lea.vmem [#allocation7], 160
    %v1261 = vld [vmem:[%s1260] sm:$0xff]
    %v1262 = vld [vmem:[%s1260 + $0x8] sm:$0xff]
    %v1263 = vld [vmem:[%s1260 + $0x10] sm:$0xff]
    %v1264 = vld [vmem:[%s1260 + $0x18] sm:$0xff]
    %v1266 = vsel %vm747, %v1261, 0
    %v1269 = vsel %vm747, %v1262, 0
    %v1272 = vsel %vm747, %v1263, 0
    %v1275 = vsel %vm747, %v1264, 0
    %1277 = vmatprep.subr.mxu0 0.0
    %1278 = vmatpush1.msra.mxu0 %v629
    %1279 = vmatprep.subr.mxu0 0.0
    %1280 = vmatpush1.msra.mxu0 %v635
    %1281 = vmatprep.subr.mxu0 0.0
    %1282 = vmatpush1.msra.mxu0 %v641
    %1283 = vmatprep.subr.mxu0 0.0
    %1284 = vmatpush1.msra.mxu0 %v647
    %1285 = vmatprep.subr.mxu0 0.0
    %1286 = vmatpush1.msra.mxu0 0.0
    %1287 = vmatprep.subr.mxu0 0.0
    %1288 = vmatpush1.msra.mxu0 0.0
    %1289 = vmatprep.subr.mxu0 0.0
    %1290 = vmatpush1.msra.mxu0 0.0
    %1291 = vmatprep.subr.mxu0 0.0
    %1292 = vmatpush1.msra.mxu0 0.0
    %1293 = vmatprep.subr.mxu0 0.0
    %1294 = vmatpush1.msra.mxu0 0.0
    %1295 = vmatprep.subr.mxu0 0.0
    %1296 = vmatpush1.msra.mxu0 0.0
    %1297 = vmatprep.subr.mxu0 0.0
    %1298 = vmatpush1.msra.mxu0 0.0
    %1299 = vmatprep.subr.mxu0 0.0
    %1300 = vmatpush1.msra.mxu0 0.0
    %1301 = vmatprep.subr.mxu0 0.0
    %1302 = vmatpush1.msra.mxu0 0.0
    %1303 = vmatprep.subr.mxu0 0.0
    %1304 = vmatpush1.msra.mxu0 0.0
    %1305 = vmatprep.subr.mxu0 0.0
    %1306 = vmatpush1.msra.mxu0 0.0
    %1307 = vmatprep.subr.mxu0 0.0
    %1308 = vmatpush1.msra.mxu0 0.0
    %1309 = vmatprep.subr.mxu0 0.0
    %1310 = vmatpush1.msra.mxu0 0.0
    %1311 = vmatprep.subr.mxu0 0.0
    %1312 = vmatpush1.msra.mxu0 0.0
    %1313 = vmatprep.subr.mxu0 0.0
    %1314 = vmatpush1.msra.mxu0 0.0
    %1315 = vmatprep.subr.mxu0 0.0
    %1316 = vmatpush1.msra.mxu0 0.0
    %1317 = vmatprep.subr.mxu0 0.0
    %1318 = vmatpush1.msra.mxu0 0.0
    %1319 = vmatprep.subr.mxu0 0.0
    %1320 = vmatpush1.msra.mxu0 0.0
    %1321 = vmatprep.subr.mxu0 0.0
    %1322 = vmatpush1.msra.mxu0 0.0
    %1323 = vmatprep.subr.mxu0 0.0
    %1324 = vmatpush1.msra.mxu0 0.0
    %1325 = vmatprep.subr.mxu0 0.0
    %1326 = vmatpush1.msra.mxu0 0.0
    %1327 = vmatprep.subr.mxu0 0.0
    %1328 = vmatpush1.msra.mxu0 0.0
    %1329 = vmatprep.subr.mxu0 0.0
    %1330 = vmatpush1.msra.mxu0 0.0
    %1331 = vmatprep.subr.mxu0 0.0
    %1332 = vmatpush1.msra.mxu0 0.0
    %1333 = vmatprep.subr.mxu0 0.0
    %1334 = vmatpush1.msra.mxu0 0.0
    %1335 = vmatprep.subr.mxu0 0.0
    %1336 = vmatpush1.msra.mxu0 0.0
    %1337 = vmatprep.subr.mxu0 0.0
    %1338 = vmatpush1.msra.mxu0 0.0
    %1339 = vmatprep.subr.mxu0 0.0
    %1340 = vmatpush1.msra.mxu0 0.0
    %1341 = vmatprep.mubr.f32.mxu0 0.0
    %1342 = vmatmul.mubr.f32.gmra.mrb[0].mxu0 %v1266
    %v1343 = vpop.f32.mrb[0].mxu0
    %v1344 = vadd.f32 0.0, %v1343
    %v1345 = vpop.f32.mrb[0].mxu0
    %1346 = vmatprep.mubr.f32.mxu0 0.0
    %1347 = vmatmul.mubr.f32.gmra.mrb[0].mxu0 %v1269
    %v1348 = vpop.f32.mrb[0].mxu0
    %v1349 = vadd.f32 0.0, %v1348
    %v1350 = vpop.f32.mrb[0].mxu0
    %1351 = vmatprep.mubr.f32.mxu0 0.0
    %1352 = vmatmul.mubr.f32.gmra.mrb[0].mxu0 %v1272
    %v1353 = vpop.f32.mrb[0].mxu0
    %v1354 = vadd.f32 0.0, %v1353
    %v1355 = vpop.f32.mrb[0].mxu0
    %1356 = vmatprep.mubr.f32.mxu0 0.0
    %1357 = vmatmul.mubr.f32.gmra.mrb[0].mxu0 %v1275
    %v1358 = vpop.f32.mrb[0].mxu0
    %v1359 = vadd.f32 0.0, %v1358
    %v1360 = vpop.f32.mrb[0].mxu0
    %1361 = vdwg.mxu0
    %v1362 = vadd.f32 %v1256, %v1344
    %v1363 = vadd.f32 %v1257, %v1349
    %v1364 = vadd.f32 %v1258, %v1354
    %v1365 = vadd.f32 %v1259, %v1359
    %s1366 = scalar_lea.vmem [#allocation7], 192
    %v1367 = vld [vmem:[%s1366] sm:$0xff]
    %v1368 = vld [vmem:[%s1366 + $0x8] sm:$0xff]
    %v1369 = vld [vmem:[%s1366 + $0x10] sm:$0xff]
    %v1370 = vld [vmem:[%s1366 + $0x18] sm:$0xff]
    %v1372 = vsel %vm747, %v1367, 0
    %v1375 = vsel %vm747, %v1368, 0
    %v1378 = vsel %vm747, %v1369, 0
    %v1381 = vsel %vm747, %v1370, 0
    %1383 = vmatprep.subr.mxu0 0.0
    %1384 = vmatpush1.msra.mxu0 %v716
    %1385 = vmatprep.subr.mxu0 0.0
    %1386 = vmatpush1.msra.mxu0 %v722
    %1387 = vmatprep.subr.mxu0 0.0
    %1388 = vmatpush1.msra.mxu0 %v728
    %1389 = vmatprep.subr.mxu0 0.0
    %1390 = vmatpush1.msra.mxu0 %v734
    %1391 = vmatprep.subr.mxu0 0.0
    %1392 = vmatpush1.msra.mxu0 0.0
    %1393 = vmatprep.subr.mxu0 0.0
    %1394 = vmatpush1.msra.mxu0 0.0
    %1395 = vmatprep.subr.mxu0 0.0
    %1396 = vmatpush1.msra.mxu0 0.0
    %1397 = vmatprep.subr.mxu0 0.0
    %1398 = vmatpush1.msra.mxu0 0.0
    %1399 = vmatprep.subr.mxu0 0.0
    %1400 = vmatpush1.msra.mxu0 0.0
    %1401 = vmatprep.subr.mxu0 0.0
    %1402 = vmatpush1.msra.mxu0 0.0
    %1403 = vmatprep.subr.mxu0 0.0
    %1404 = vmatpush1.msra.mxu0 0.0
    %1405 = vmatprep.subr.mxu0 0.0
    %1406 = vmatpush1.msra.mxu0 0.0
    %1407 = vmatprep.subr.mxu0 0.0
    %1408 = vmatpush1.msra.mxu0 0.0
    %1409 = vmatprep.subr.mxu0 0.0
    %1410 = vmatpush1.msra.mxu0 0.0
    %1411 = vmatprep.subr.mxu0 0.0
    %1412 = vmatpush1.msra.mxu0 0.0
    %1413 = vmatprep.subr.mxu0 0.0
    %1414 = vmatpush1.msra.mxu0 0.0
    %1415 = vmatprep.subr.mxu0 0.0
    %1416 = vmatpush1.msra.mxu0 0.0
    %1417 = vmatprep.subr.mxu0 0.0
    %1418 = vmatpush1.msra.mxu0 0.0
    %1419 = vmatprep.subr.mxu0 0.0
    %1420 = vmatpush1.msra.mxu0 0.0
    %1421 = vmatprep.subr.mxu0 0.0
    %1422 = vmatpush1.msra.mxu0 0.0
    %1423 = vmatprep.subr.mxu0 0.0
    %1424 = vmatpush1.msra.mxu0 0.0
    %1425 = vmatprep.subr.mxu0 0.0
    %1426 = vmatpush1.msra.mxu0 0.0
    %1427 = vmatprep.subr.mxu0 0.0
    %1428 = vmatpush1.msra.mxu0 0.0
    %1429 = vmatprep.subr.mxu0 0.0
    %1430 = vmatpush1.msra.mxu0 0.0
    %1431 = vmatprep.subr.mxu0 0.0
    %1432 = vmatpush1.msra.mxu0 0.0
    %1433 = vmatprep.subr.mxu0 0.0
    %1434 = vmatpush1.msra.mxu0 0.0
    %1435 = vmatprep.subr.mxu0 0.0
    %1436 = vmatpush1.msra.mxu0 0.0
    %1437 = vmatprep.subr.mxu0 0.0
    %1438 = vmatpush1.msra.mxu0 0.0
    %1439 = vmatprep.subr.mxu0 0.0
    %1440 = vmatpush1.msra.mxu0 0.0
    %1441 = vmatprep.subr.mxu0 0.0
    %1442 = vmatpush1.msra.mxu0 0.0
    %1443 = vmatprep.subr.mxu0 0.0
    %1444 = vmatpush1.msra.mxu0 0.0
    %1445 = vmatprep.subr.mxu0 0.0
    %1446 = vmatpush1.msra.mxu0 0.0
    %1447 = vmatprep.mubr.f32.mxu0 0.0
    %1448 = vmatmul.mubr.f32.gmra.mrb[0].mxu0 %v1372
    %v1449 = vpop.f32.mrb[0].mxu0
    %v1450 = vadd.f32 0.0, %v1449
    %v1451 = vpop.f32.mrb[0].mxu0
    %1452 = vmatprep.mubr.f32.mxu0 0.0
    %1453 = vmatmul.mubr.f32.gmra.mrb[0].mxu0 %v1375
    %v1454 = vpop.f32.mrb[0].mxu0
    %v1455 = vadd.f32 0.0, %v1454
    %v1456 = vpop.f32.mrb[0].mxu0
    %1457 = vmatprep.mubr.f32.mxu0 0.0
    %1458 = vmatmul.mubr.f32.gmra.mrb[0].mxu0 %v1378
    %v1459 = vpop.f32.mrb[0].mxu0
    %v1460 = vadd.f32 0.0, %v1459
    %v1461 = vpop.f32.mrb[0].mxu0
    %1462 = vmatprep.mubr.f32.mxu0 0.0
    %1463 = vmatmul.mubr.f32.gmra.mrb[0].mxu0 %v1381
    %v1464 = vpop.f32.mrb[0].mxu0
    %v1465 = vadd.f32 0.0, %v1464
    %v1466 = vpop.f32.mrb[0].mxu0
    %1467 = vdwg.mxu0
    %v1468 = vadd.f32 %v1362, %v1450
    %v1469 = vadd.f32 %v1363, %v1455
    %v1470 = vadd.f32 %v1364, %v1460
    %v1471 = vadd.f32 %v1365, %v1465
    %s1472 = scalar_lea.vmem [#allocation7], 224
    %v1473 = vld [vmem:[%s1472] sm:$0xff]
    %v1474 = vld [vmem:[%s1472 + $0x8] sm:$0xff]
    %v1475 = vld [vmem:[%s1472 + $0x10] sm:$0xff]
    %v1476 = vld [vmem:[%s1472 + $0x18] sm:$0xff]
    %v1478 = vsel %vm747, %v1473, 0
    %v1481 = vsel %vm747, %v1474, 0
    %v1484 = vsel %vm747, %v1475, 0
    %v1487 = vsel %vm747, %v1476, 0
    %1489 = vmatprep.subr.mxu0 0.0
    %1490 = vmatpush1.msra.mxu0 %v718
    %1491 = vmatprep.subr.mxu0 0.0
    %1492 = vmatpush1.msra.mxu0 %v724
    %1493 = vmatprep.subr.mxu0 0.0
    %1494 = vmatpush1.msra.mxu0 %v730
    %1495 = vmatprep.subr.mxu0 0.0
    %1496 = vmatpush1.msra.mxu0 %v736
    %1497 = vmatprep.subr.mxu0 0.0
    %1498 = vmatpush1.msra.mxu0 0.0
    %1499 = vmatprep.subr.mxu0 0.0
    %1500 = vmatpush1.msra.mxu0 0.0
    %1501 = vmatprep.subr.mxu0 0.0
    %1502 = vmatpush1.msra.mxu0 0.0
    %1503 = vmatprep.subr.mxu0 0.0
    %1504 = vmatpush1.msra.mxu0 0.0
    %1505 = vmatprep.subr.mxu0 0.0
    %1506 = vmatpush1.msra.mxu0 0.0
    %1507 = vmatprep.subr.mxu0 0.0
    %1508 = vmatpush1.msra.mxu0 0.0
    %1509 = vmatprep.subr.mxu0 0.0
    %1510 = vmatpush1.msra.mxu0 0.0
    %1511 = vmatprep.subr.mxu0 0.0
    %1512 = vmatpush1.msra.mxu0 0.0
    %1513 = vmatprep.subr.mxu0 0.0
    %1514 = vmatpush1.msra.mxu0 0.0
    %1515 = vmatprep.subr.mxu0 0.0
    %1516 = vmatpush1.msra.mxu0 0.0
    %1517 = vmatprep.subr.mxu0 0.0
    %1518 = vmatpush1.msra.mxu0 0.0
    %1519 = vmatprep.subr.mxu0 0.0
    %1520 = vmatpush1.msra.mxu0 0.0
    %1521 = vmatprep.subr.mxu0 0.0
    %1522 = vmatpush1.msra.mxu0 0.0
    %1523 = vmatprep.subr.mxu0 0.0
    %1524 = vmatpush1.msra.mxu0 0.0
    %1525 = vmatprep.subr.mxu0 0.0
    %1526 = vmatpush1.msra.mxu0 0.0
    %1527 = vmatprep.subr.mxu0 0.0
    %1528 = vmatpush1.msra.mxu0 0.0
    %1529 = vmatprep.subr.mxu0 0.0
    %1530 = vmatpush1.msra.mxu0 0.0
    %1531 = vmatprep.subr.mxu0 0.0
    %1532 = vmatpush1.msra.mxu0 0.0
    %1533 = vmatprep.subr.mxu0 0.0
    %1534 = vmatpush1.msra.mxu0 0.0
    %1535 = vmatprep.subr.mxu0 0.0
    %1536 = vmatpush1.msra.mxu0 0.0
    %1537 = vmatprep.subr.mxu0 0.0
    %1538 = vmatpush1.msra.mxu0 0.0
    %1539 = vmatprep.subr.mxu0 0.0
    %1540 = vmatpush1.msra.mxu0 0.0
    %1541 = vmatprep.subr.mxu0 0.0
    %1542 = vmatpush1.msra.mxu0 0.0
    %1543 = vmatprep.subr.mxu0 0.0
    %1544 = vmatpush1.msra.mxu0 0.0
    %1545 = vmatprep.subr.mxu0 0.0
    %1546 = vmatpush1.msra.mxu0 0.0
    %1547 = vmatprep.subr.mxu0 0.0
    %1548 = vmatpush1.msra.mxu0 0.0
    %1549 = vmatprep.subr.mxu0 0.0
    %1550 = vmatpush1.msra.mxu0 0.0
    %1551 = vmatprep.subr.mxu0 0.0
    %1552 = vmatpush1.msra.mxu0 0.0
    %1553 = vmatprep.mubr.f32.mxu0 0.0
    %1554 = vmatmul.mubr.f32.gmra.mrb[0].mxu0 %v1478
    %v1555 = vpop.f32.mrb[0].mxu0
    %v1556 = vadd.f32 0.0, %v1555
    %v1557 = vpop.f32.mrb[0].mxu0
    %1558 = vmatprep.mubr.f32.mxu0 0.0
    %1559 = vmatmul.mubr.f32.gmra.mrb[0].mxu0 %v1481
    %v1560 = vpop.f32.mrb[0].mxu0
    %v1561 = vadd.f32 0.0, %v1560
    %v1562 = vpop.f32.mrb[0].mxu0
    %1563 = vmatprep.mubr.f32.mxu0 0.0
    %1564 = vmatmul.mubr.f32.gmra.mrb[0].mxu0 %v1484
    %v1565 = vpop.f32.mrb[0].mxu0
    %v1566 = vadd.f32 0.0, %v1565
    %v1567 = vpop.f32.mrb[0].mxu0
    %1568 = vmatprep.mubr.f32.mxu0 0.0
    %1569 = vmatmul.mubr.f32.gmra.mrb[0].mxu0 %v1487
    %v1570 = vpop.f32.mrb[0].mxu0
    %v1571 = vadd.f32 0.0, %v1570
    %v1572 = vpop.f32.mrb[0].mxu0
    %1573 = vdwg.mxu0
    %v1574 = vadd.f32 %v1468, %v1556
    %v1575 = vadd.f32 %v1469, %v1561
    %v1576 = vadd.f32 %v1470, %v1566
    %v1577 = vadd.f32 %v1471, %v1571
    %1578 = vmatprep.subr.mxu0 0.0
    %1579 = vmatpush1.msra.mxu0 %v238
    %1580 = vmatprep.subr.mxu0 0.0
    %1581 = vmatpush1.msra.mxu0 %v239
    %1582 = vmatprep.subr.mxu0 0.0
    %1583 = vmatpush1.msra.mxu0 %v240
    %1584 = vmatprep.subr.mxu0 0.0
    %1585 = vmatpush1.msra.mxu0 %v241
    %1586 = vmatprep.subr.mxu0 0.0
    %1587 = vmatpush1.msra.mxu0 %v242
    %1588 = vmatprep.subr.mxu0 0.0
    %1589 = vmatpush1.msra.mxu0 %v243
    %1590 = vmatprep.subr.mxu0 0.0
    %1591 = vmatpush1.msra.mxu0 %v244
    %1592 = vmatprep.subr.mxu0 0.0
    %1593 = vmatpush1.msra.mxu0 %v245
    %1594 = vmatprep.subr.mxu0 0.0
    %1595 = vmatpush1.msra.mxu0 %v246
    %1596 = vmatprep.subr.mxu0 0.0
    %1597 = vmatpush1.msra.mxu0 %v247
    %1598 = vmatprep.subr.mxu0 0.0
    %1599 = vmatpush1.msra.mxu0 %v248
    %1600 = vmatprep.subr.mxu0 0.0
    %1601 = vmatpush1.msra.mxu0 %v249
    %1602 = vmatprep.subr.mxu0 0.0
    %1603 = vmatpush1.msra.mxu0 %v250
    %1604 = vmatprep.subr.mxu0 0.0
    %1605 = vmatpush1.msra.mxu0 %v251
    %1606 = vmatprep.subr.mxu0 0.0
    %1607 = vmatpush1.msra.mxu0 %v252
    %1608 = vmatprep.subr.mxu0 0.0
    %1609 = vmatpush1.msra.mxu0 %v253
    %1610 = vmatprep.subr.mxu0 0.0
    %1611 = vmatpush1.msra.mxu0 0.0
    %1612 = vmatprep.subr.mxu0 0.0
    %1613 = vmatpush1.msra.mxu0 0.0
    %1614 = vmatprep.subr.mxu0 0.0
    %1615 = vmatpush1.msra.mxu0 0.0
    %1616 = vmatprep.subr.mxu0 0.0
    %1617 = vmatpush1.msra.mxu0 0.0
    %1618 = vmatprep.subr.mxu0 0.0
    %1619 = vmatpush1.msra.mxu0 0.0
    %1620 = vmatprep.subr.mxu0 0.0
    %1621 = vmatpush1.msra.mxu0 0.0
    %1622 = vmatprep.subr.mxu0 0.0
    %1623 = vmatpush1.msra.mxu0 0.0
    %1624 = vmatprep.subr.mxu0 0.0
    %1625 = vmatpush1.msra.mxu0 0.0
    %1626 = vmatprep.subr.mxu0 0.0
    %1627 = vmatpush1.msra.mxu0 0.0
    %1628 = vmatprep.subr.mxu0 0.0
    %1629 = vmatpush1.msra.mxu0 0.0
    %1630 = vmatprep.subr.mxu0 0.0
    %1631 = vmatpush1.msra.mxu0 0.0
    %1632 = vmatprep.subr.mxu0 0.0
    %1633 = vmatpush1.msra.mxu0 0.0
    %1634 = vmatprep.subr.mxu0 0.0
    %1635 = vmatpush1.msra.mxu0 0.0
    %1636 = vmatprep.subr.mxu0 0.0
    %1637 = vmatpush1.msra.mxu0 0.0
    %1638 = vmatprep.subr.mxu0 0.0
    %1639 = vmatpush1.msra.mxu0 0.0
    %1640 = vmatprep.subr.mxu0 0.0
    %1641 = vmatpush1.msra.mxu0 0.0
    %1642 = vmatprep.mubr.f32.mxu0 0.0
    %1643 = vmatmul.mubr.f32.gmra.mrb[0].mxu0 %v220
    %v1644 = vpop.f32.mrb[0].mxu0
    %v1645 = vadd.f32 %v1574, %v1644
    %v1646 = vpop.f32.mrb[0].mxu0
    %1647 = vmatprep.mubr.f32.mxu0 0.0
    %1648 = vmatmul.mubr.f32.gmra.mrb[0].mxu0 %v225
    %v1649 = vpop.f32.mrb[0].mxu0
    %v1650 = vadd.f32 %v1575, %v1649
    %v1651 = vpop.f32.mrb[0].mxu0
    %1652 = vmatprep.mubr.f32.mxu0 0.0
    %1653 = vmatmul.mubr.f32.gmra.mrb[0].mxu0 %v230
    %v1654 = vpop.f32.mrb[0].mxu0
    %v1655 = vadd.f32 %v1576, %v1654
    %v1656 = vpop.f32.mrb[0].mxu0
    %1657 = vmatprep.mubr.f32.mxu0 0.0
    %1658 = vmatmul.mubr.f32.gmra.mrb[0].mxu0 %v235
    %v1659 = vpop.f32.mrb[0].mxu0
    %v1660 = vadd.f32 %v1577, %v1659
    %v1661 = vpop.f32.mrb[0].mxu0
    %1662 = vdwg.mxu0
    %v1663 = vld [vmem:[#allocation9] sm:$0xff]
    %v1664 = vld [vmem:[#allocation9 + $0x8] sm:$0xff]
    %v1665 = vld [vmem:[#allocation9 + $0x10] sm:$0xff]
    %v1666 = vld [vmem:[#allocation9 + $0x18] sm:$0xff]
    %v1667 = vld [vmem:[#allocation9 + $0x20] sm:$0xff]
    %v1668 = vld [vmem:[#allocation9 + $0x28] sm:$0xff]
    %v1669 = vld [vmem:[#allocation9 + $0x30] sm:$0xff]
    %v1670 = vld [vmem:[#allocation9 + $0x38] sm:$0xff]
    %v1671 = vld [vmem:[#allocation9 + $0x40] sm:$0xff]
    %v1672 = vld [vmem:[#allocation9 + $0x48] sm:$0xff]
    %v1673 = vld [vmem:[#allocation9 + $0x50] sm:$0xff]
    %v1674 = vld [vmem:[#allocation9 + $0x58] sm:$0xff]
    %v1675 = vld [vmem:[#allocation9 + $0x60] sm:$0xff]
    %v1676 = vld [vmem:[#allocation9 + $0x68] sm:$0xff]
    %v1677 = vld [vmem:[#allocation9 + $0x70] sm:$0xff]
    %v1678 = vld [vmem:[#allocation9 + $0x78] sm:$0xff]
    %v1679 = vld [vmem:[#allocation9 + $0x80] sm:$0xff]
    %v1680 = vld [vmem:[#allocation9 + $0x88] sm:$0xff]
    %v1681 = vld [vmem:[#allocation9 + $0x90] sm:$0xff]
    %v1682 = vld [vmem:[#allocation9 + $0x98] sm:$0xff]
    %v1683 = vld [vmem:[#allocation9 + $0xa0] sm:$0xff]
    %v1684 = vld [vmem:[#allocation9 + $0xa8] sm:$0xff]
    %v1685 = vld [vmem:[#allocation9 + $0xb0] sm:$0xff]
    %v1686 = vld [vmem:[#allocation9 + $0xb8] sm:$0xff]
    %v1687 = vld [vmem:[#allocation9 + $0xc0] sm:$0xff]
    %v1688 = vld [vmem:[#allocation9 + $0xc8] sm:$0xff]
    %v1689 = vld [vmem:[#allocation9 + $0xd0] sm:$0xff]
    %v1690 = vld [vmem:[#allocation9 + $0xd8] sm:$0xff]
    %v1691 = vld [vmem:[#allocation9 + $0xe0] sm:$0xff]
    %v1692 = vld [vmem:[#allocation9 + $0xe8] sm:$0xff]
    %v1693 = vld [vmem:[#allocation9 + $0xf0] sm:$0xff]
    %v1694 = vld [vmem:[#allocation9 + $0xf8] sm:$0xff]
    %v1695 = vld [vmem:[%s7] sm:$0x3]
    %v1697 = vlaneseq
    %v1698 = vshrl.u32 %v1697, 7
    %v1699 = vsub.s32 0, %v1698
    %v1700 = vrot.slane %v1695, %v1699
    %v1701 = vlaneseq
    %v1702 = vshrl.u32 %v1701, 7
    %v1703 = vsub.s32 1, %v1702
    %v1704 = vrot.slane %v1695, %v1703
    %1707 = vmatprep.subr.mxu0 %v1664
    %1708 = vmatpush1.msra.mxu0 %v1663
    %1709 = vmatprep.subr.mxu0 %v1666
    %1710 = vmatpush1.msra.mxu0 %v1665
    %1711 = vmatprep.subr.mxu0 %v1668
    %1712 = vmatpush1.msra.mxu0 %v1667
    %1713 = vmatprep.subr.mxu0 %v1670
    %1714 = vmatpush1.msra.mxu0 %v1669
    %1715 = vmatprep.subr.mxu0 %v1672
    %1716 = vmatpush1.msra.mxu0 %v1671
    %1717 = vmatprep.subr.mxu0 %v1674
    %1718 = vmatpush1.msra.mxu0 %v1673
    %1719 = vmatprep.subr.mxu0 %v1676
    %1720 = vmatpush1.msra.mxu0 %v1675
    %1721 = vmatprep.subr.mxu0 %v1678
    %1722 = vmatpush1.msra.mxu0 %v1677
    %1723 = vmatprep.subr.mxu0 %v1680
    %1724 = vmatpush1.msra.mxu0 %v1679
    %1725 = vmatprep.subr.mxu0 %v1682
    %1726 = vmatpush1.msra.mxu0 %v1681
    %1727 = vmatprep.subr.mxu0 %v1684
    %1728 = vmatpush1.msra.mxu0 %v1683
    %1729 = vmatprep.subr.mxu0 %v1686
    %1730 = vmatpush1.msra.mxu0 %v1685
    %1731 = vmatprep.subr.mxu0 %v1688
    %1732 = vmatpush1.msra.mxu0 %v1687
    %1733 = vmatprep.subr.mxu0 %v1690
    %1734 = vmatpush1.msra.mxu0 %v1689
    %1735 = vmatprep.subr.mxu0 %v1692
    %1736 = vmatpush1.msra.mxu0 %v1691
    %1737 = vmatprep.subr.mxu0 %v1694
    %1738 = vmatpush1.msra.mxu0 %v1693
    %1739 = vmatprep.subr.mxu0 0.0
    %1740 = vmatpush1.msra.mxu0 0.0
    %1741 = vmatprep.subr.mxu0 0.0
    %1742 = vmatpush1.msra.mxu0 0.0
    %1743 = vmatprep.subr.mxu0 0.0
    %1744 = vmatpush1.msra.mxu0 0.0
    %1745 = vmatprep.subr.mxu0 0.0
    %1746 = vmatpush1.msra.mxu0 0.0
    %1747 = vmatprep.subr.mxu0 0.0
    %1748 = vmatpush1.msra.mxu0 0.0
    %1749 = vmatprep.subr.mxu0 0.0
    %1750 = vmatpush1.msra.mxu0 0.0
    %1751 = vmatprep.subr.mxu0 0.0
    %1752 = vmatpush1.msra.mxu0 0.0
    %1753 = vmatprep.subr.mxu0 0.0
    %1754 = vmatpush1.msra.mxu0 0.0
    %1755 = vmatprep.subr.mxu0 0.0
    %1756 = vmatpush1.msra.mxu0 0.0
    %1757 = vmatprep.subr.mxu0 0.0
    %1758 = vmatpush1.msra.mxu0 0.0
    %1759 = vmatprep.subr.mxu0 0.0
    %1760 = vmatpush1.msra.mxu0 0.0
    %1761 = vmatprep.subr.mxu0 0.0
    %1762 = vmatpush1.msra.mxu0 0.0
    %1763 = vmatprep.subr.mxu0 0.0
    %1764 = vmatpush1.msra.mxu0 0.0
    %1765 = vmatprep.subr.mxu0 0.0
    %1766 = vmatpush1.msra.mxu0 0.0
    %1767 = vmatprep.subr.mxu0 0.0
    %1768 = vmatpush1.msra.mxu0 0.0
    %1769 = vmatprep.subr.mxu0 0.0
    %1770 = vmatpush1.msra.mxu0 0.0
    %1771 = vmatprep.mubr.f32.mxu0 0.0
    %1772 = vmatmul.mubr.f32.gmra.mrb[0].mxu0 %v1645
    %v1773 = vpop.f32.mrb[0].mxu0
    %v1774 = vadd.f32 %v1700, %v1773
    %v1775 = vpop.f32.mrb[0].mxu0
    %v1776 = vadd.f32 %v1704, %v1775
    %1777 = vmatprep.mubr.f32.mxu0 0.0
    %1778 = vmatmul.mubr.f32.gmra.mrb[0].mxu0 %v1650
    %v1779 = vpop.f32.mrb[0].mxu0
    %v1780 = vadd.f32 %v1700, %v1779
    %v1781 = vpop.f32.mrb[0].mxu0
    %v1782 = vadd.f32 %v1704, %v1781
    %1783 = vmatprep.mubr.f32.mxu0 0.0
    %1784 = vmatmul.mubr.f32.gmra.mrb[0].mxu0 %v1655
    %v1785 = vpop.f32.mrb[0].mxu0
    %v1786 = vadd.f32 %v1700, %v1785
    %v1787 = vpop.f32.mrb[0].mxu0
    %v1788 = vadd.f32 %v1704, %v1787
    %1789 = vmatprep.mubr.f32.mxu0 0.0
    %1790 = vmatmul.mubr.f32.gmra.mrb[0].mxu0 %v1660
    %v1791 = vpop.f32.mrb[0].mxu0
    %v1792 = vadd.f32 %v1700, %v1791
    %v1793 = vpop.f32.mrb[0].mxu0
    %v1794 = vadd.f32 %v1704, %v1793
    %1795 = vdwg.mxu0
    %v1796 = vmax.f32 %v1774, 0.0
    %v1797 = vmax.f32 %v1776, 0.0
    %v1798 = vmax.f32 %v1780, 0.0
    %v1799 = vmax.f32 %v1782, 0.0
    %v1800 = vmax.f32 %v1786, 0.0
    %v1801 = vmax.f32 %v1788, 0.0
    %v1802 = vmax.f32 %v1792, 0.0
    %v1803 = vmax.f32 %v1794, 0.0
    %v1804 = vld [vmem:[#allocation10] sm:$0xff]
    %v1805 = vld [vmem:[#allocation10 + $0x8] sm:$0xff]
    %v1806 = vld [vmem:[#allocation10 + $0x10] sm:$0xff]
    %v1807 = vld [vmem:[#allocation10 + $0x18] sm:$0xff]
    %v1808 = vld [vmem:[#allocation10 + $0x20] sm:$0xff]
    %v1809 = vld [vmem:[#allocation10 + $0x28] sm:$0xff]
    %v1810 = vld [vmem:[#allocation10 + $0x30] sm:$0xff]
    %v1811 = vld [vmem:[#allocation10 + $0x38] sm:$0xff]
    %v1812 = vld [vmem:[#allocation10 + $0x40] sm:$0xff]
    %v1813 = vld [vmem:[#allocation10 + $0x48] sm:$0xff]
    %v1814 = vld [vmem:[#allocation10 + $0x50] sm:$0xff]
    %v1815 = vld [vmem:[#allocation10 + $0x58] sm:$0xff]
    %v1816 = vld [vmem:[#allocation10 + $0x60] sm:$0xff]
    %v1817 = vld [vmem:[#allocation10 + $0x68] sm:$0xff]
    %v1818 = vld [vmem:[#allocation10 + $0x70] sm:$0xff]
    %v1819 = vld [vmem:[#allocation10 + $0x78] sm:$0xff]
    %v1820 = vld [vmem:[#allocation10 + $0x80] sm:$0xff]
    %v1821 = vld [vmem:[#allocation10 + $0x88] sm:$0xff]
    %v1822 = vld [vmem:[#allocation10 + $0x90] sm:$0xff]
    %v1823 = vld [vmem:[#allocation10 + $0x98] sm:$0xff]
    %v1824 = vld [vmem:[#allocation10 + $0xa0] sm:$0xff]
    %v1825 = vld [vmem:[#allocation10 + $0xa8] sm:$0xff]
    %v1826 = vld [vmem:[#allocation10 + $0xb0] sm:$0xff]
    %v1827 = vld [vmem:[#allocation10 + $0xb8] sm:$0xff]
    %v1828 = vld [vmem:[#allocation10 + $0xc0] sm:$0xff]
    %v1829 = vld [vmem:[#allocation10 + $0xc8] sm:$0xff]
    %v1830 = vld [vmem:[#allocation10 + $0xd0] sm:$0xff]
    %v1831 = vld [vmem:[#allocation10 + $0xd8] sm:$0xff]
    %v1832 = vld [vmem:[#allocation10 + $0xe0] sm:$0xff]
    %v1833 = vld [vmem:[#allocation10 + $0xe8] sm:$0xff]
    %v1834 = vld [vmem:[#allocation10 + $0xf0] sm:$0xff]
    %v1835 = vld [vmem:[#allocation10 + $0xf8] sm:$0xff]
    %v1836 = vld [vmem:[%s9] sm:$0x1]
    %v1838 = vlaneseq
    %v1839 = vshrl.u32 %v1838, 7
    %v1840 = vsub.s32 0, %v1839
    %v1841 = vrot.slane %v1836, %v1840
    %1843 = vmatprep.subr.mxu0 0.0
    %1844 = vmatpush1.msra.mxu0 %v1804
    %1845 = vmatprep.subr.mxu0 0.0
    %1846 = vmatpush1.msra.mxu0 %v1805
    %1847 = vmatprep.subr.mxu0 0.0
    %1848 = vmatpush1.msra.mxu0 %v1806
    %1849 = vmatprep.subr.mxu0 0.0
    %1850 = vmatpush1.msra.mxu0 %v1807
    %1851 = vmatprep.subr.mxu0 0.0
    %1852 = vmatpush1.msra.mxu0 %v1808
    %1853 = vmatprep.subr.mxu0 0.0
    %1854 = vmatpush1.msra.mxu0 %v1809
    %1855 = vmatprep.subr.mxu0 0.0
    %1856 = vmatpush1.msra.mxu0 %v1810
    %1857 = vmatprep.subr.mxu0 0.0
    %1858 = vmatpush1.msra.mxu0 %v1811
    %1859 = vmatprep.subr.mxu0 0.0
    %1860 = vmatpush1.msra.mxu0 %v1812
    %1861 = vmatprep.subr.mxu0 0.0
    %1862 = vmatpush1.msra.mxu0 %v1813
    %1863 = vmatprep.subr.mxu0 0.0
    %1864 = vmatpush1.msra.mxu0 %v1814
    %1865 = vmatprep.subr.mxu0 0.0
    %1866 = vmatpush1.msra.mxu0 %v1815
    %1867 = vmatprep.subr.mxu0 0.0
    %1868 = vmatpush1.msra.mxu0 %v1816
    %1869 = vmatprep.subr.mxu0 0.0
    %1870 = vmatpush1.msra.mxu0 %v1817
    %1871 = vmatprep.subr.mxu0 0.0
    %1872 = vmatpush1.msra.mxu0 %v1818
    %1873 = vmatprep.subr.mxu0 0.0
    %1874 = vmatpush1.msra.mxu0 %v1819
    %1875 = vmatprep.subr.mxu0 0.0
    %1876 = vmatpush1.msra.mxu0 %v1820
    %1877 = vmatprep.subr.mxu0 0.0
    %1878 = vmatpush1.msra.mxu0 %v1821
    %1879 = vmatprep.subr.mxu0 0.0
    %1880 = vmatpush1.msra.mxu0 %v1822
    %1881 = vmatprep.subr.mxu0 0.0
    %1882 = vmatpush1.msra.mxu0 %v1823
    %1883 = vmatprep.subr.mxu0 0.0
    %1884 = vmatpush1.msra.mxu0 %v1824
    %1885 = vmatprep.subr.mxu0 0.0
    %1886 = vmatpush1.msra.mxu0 %v1825
    %1887 = vmatprep.subr.mxu0 0.0
    %1888 = vmatpush1.msra.mxu0 %v1826
    %1889 = vmatprep.subr.mxu0 0.0
    %1890 = vmatpush1.msra.mxu0 %v1827
    %1891 = vmatprep.subr.mxu0 0.0
    %1892 = vmatpush1.msra.mxu0 %v1828
    %1893 = vmatprep.subr.mxu0 0.0
    %1894 = vmatpush1.msra.mxu0 %v1829
    %1895 = vmatprep.subr.mxu0 0.0
    %1896 = vmatpush1.msra.mxu0 %v1830
    %1897 = vmatprep.subr.mxu0 0.0
    %1898 = vmatpush1.msra.mxu0 %v1831
    %1899 = vmatprep.subr.mxu0 0.0
    %1900 = vmatpush1.msra.mxu0 %v1832
    %1901 = vmatprep.subr.mxu0 0.0
    %1902 = vmatpush1.msra.mxu0 %v1833
    %1903 = vmatprep.subr.mxu0 0.0
    %1904 = vmatpush1.msra.mxu0 %v1834
    %1905 = vmatprep.subr.mxu0 0.0
    %1906 = vmatpush1.msra.mxu0 %v1835
    %1907 = vmatprep.mubr.f32.mxu0 %v1797
    %1908 = vmatmul.mubr.f32.gmra.mrb[0].mxu0 %v1796
    %v1909 = vpop.f32.mrb[0].mxu0
    %v1910 = vadd.f32 %v1841, %v1909
    %v1911 = vpop.f32.mrb[0].mxu0
    %1912 = vmatprep.mubr.f32.mxu0 %v1799
    %1913 = vmatmul.mubr.f32.gmra.mrb[0].mxu0 %v1798
    %v1914 = vpop.f32.mrb[0].mxu0
    %v1915 = vadd.f32 %v1841, %v1914
    %v1916 = vpop.f32.mrb[0].mxu0
    %1917 = vmatprep.mubr.f32.mxu0 %v1801
    %1918 = vmatmul.mubr.f32.gmra.mrb[0].mxu0 %v1800
    %v1919 = vpop.f32.mrb[0].mxu0
    %v1920 = vadd.f32 %v1841, %v1919
    %v1921 = vpop.f32.mrb[0].mxu0
    %1922 = vmatprep.mubr.f32.mxu0 %v1803
    %1923 = vmatmul.mubr.f32.gmra.mrb[0].mxu0 %v1802
    %v1924 = vpop.f32.mrb[0].mxu0
    %v1925 = vadd.f32 %v1841, %v1924
    %v1926 = vpop.f32.mrb[0].mxu0
    %1927 = vdwg.mxu0
    %v1928 = vadd.f32 %v220, %v1910
    %v1929 = vadd.f32 %v225, %v1915
    %v1930 = vadd.f32 %v230, %v1920
    %v1931 = vadd.f32 %v235, %v1925
    %s1932 = scalar_lea.vmem [#allocation6], 128
    %v1933 = vld [vmem:[%s1932] sm:$0xff]
    %v1934 = vld [vmem:[%s1932 + $0x8] sm:$0xff]
    %v1935 = vld [vmem:[%s1932 + $0x10] sm:$0xff]
    %v1936 = vld [vmem:[%s1932 + $0x18] sm:$0xff]
    %v1937 = vld [vmem:[%s1932 + $0x20] sm:$0xff]
    %v1938 = vld [vmem:[%s1932 + $0x28] sm:$0xff]
    %v1939 = vld [vmem:[%s1932 + $0x30] sm:$0xff]
    %v1940 = vld [vmem:[%s1932 + $0x38] sm:$0xff]
    %v1941 = vld [vmem:[%s1932 + $0x40] sm:$0xff]
    %v1942 = vld [vmem:[%s1932 + $0x48] sm:$0xff]
    %v1943 = vld [vmem:[%s1932 + $0x50] sm:$0xff]
    %v1944 = vld [vmem:[%s1932 + $0x58] sm:$0xff]
    %v1945 = vld [vmem:[%s1932 + $0x60] sm:$0xff]
    %v1946 = vld [vmem:[%s1932 + $0x68] sm:$0xff]
    %v1947 = vld [vmem:[%s1932 + $0x70] sm:$0xff]
    %v1948 = vld [vmem:[%s1932 + $0x78] sm:$0xff]
    %s1949 = scalar_lea.vmem %s5, 1024
    %v1950 = vld [vmem:[%s1949] sm:$0xff]
    %v1951 = vld [vmem:[%s1949 + $0x8] sm:$0xff]
    %v1952 = vld [vmem:[%s1949 + $0x10] sm:$0xff]
    %v1953 = vld [vmem:[%s1949 + $0x18] sm:$0xff]
    %v1954 = vld [vmem:[%s1949 + $0x20] sm:$0xff]
    %v1955 = vld [vmem:[%s1949 + $0x28] sm:$0xff]
    %v1956 = vld [vmem:[%s1949 + $0x30] sm:$0xff]
    %v1957 = vld [vmem:[%s1949 + $0x38] sm:$0xff]
    %v1958 = vld [vmem:[%s1949 + $0x40] sm:$0xff]
    %v1959 = vld [vmem:[%s1949 + $0x48] sm:$0xff]
    %v1960 = vld [vmem:[%s1949 + $0x50] sm:$0xff]
    %v1961 = vld [vmem:[%s1949 + $0x58] sm:$0xff]
    %v1962 = vld [vmem:[%s1949 + $0x60] sm:$0xff]
    %v1963 = vld [vmem:[%s1949 + $0x68] sm:$0xff]
    %v1964 = vld [vmem:[%s1949 + $0x70] sm:$0xff]
    %v1965 = vld [vmem:[%s1949 + $0x78] sm:$0xff]
    %v1966 = vld [vmem:[%s1949 + $0x80] sm:$0xff]
    %v1967 = vld [vmem:[%s1949 + $0x88] sm:$0xff]
    %v1968 = vld [vmem:[%s1949 + $0x90] sm:$0xff]
    %v1969 = vld [vmem:[%s1949 + $0x98] sm:$0xff]
    %v1970 = vld [vmem:[%s1949 + $0xa0] sm:$0xff]
    %v1971 = vld [vmem:[%s1949 + $0xa8] sm:$0xff]
    %v1972 = vld [vmem:[%s1949 + $0xb0] sm:$0xff]
    %v1973 = vld [vmem:[%s1949 + $0xb8] sm:$0xff]
    %v1974 = vld [vmem:[%s1949 + $0xc0] sm:$0xff]
    %v1975 = vld [vmem:[%s1949 + $0xc8] sm:$0xff]
    %v1976 = vld [vmem:[%s1949 + $0xd0] sm:$0xff]
    %v1977 = vld [vmem:[%s1949 + $0xd8] sm:$0xff]
    %v1978 = vld [vmem:[%s1949 + $0xe0] sm:$0xff]
    %v1979 = vld [vmem:[%s1949 + $0xe8] sm:$0xff]
    %v1980 = vld [vmem:[%s1949 + $0xf0] sm:$0xff]
    %v1981 = vld [vmem:[%s1949 + $0xf8] sm:$0xff]
    %v1982 = vld [vmem:[%s1949 + $0x100] sm:$0xff]
    %v1983 = vld [vmem:[%s1949 + $0x108] sm:$0xff]
    %v1984 = vld [vmem:[%s1949 + $0x110] sm:$0xff]
    %v1985 = vld [vmem:[%s1949 + $0x118] sm:$0xff]
    %v1986 = vld [vmem:[%s1949 + $0x120] sm:$0xff]
    %v1987 = vld [vmem:[%s1949 + $0x128] sm:$0xff]
    %v1988 = vld [vmem:[%s1949 + $0x130] sm:$0xff]
    %v1989 = vld [vmem:[%s1949 + $0x138] sm:$0xff]
    %v1990 = vld [vmem:[%s1949 + $0x140] sm:$0xff]
    %v1991 = vld [vmem:[%s1949 + $0x148] sm:$0xff]
    %v1992 = vld [vmem:[%s1949 + $0x150] sm:$0xff]
    %v1993 = vld [vmem:[%s1949 + $0x158] sm:$0xff]
    %v1994 = vld [vmem:[%s1949 + $0x160] sm:$0xff]
    %v1995 = vld [vmem:[%s1949 + $0x168] sm:$0xff]
    %v1996 = vld [vmem:[%s1949 + $0x170] sm:$0xff]
    %v1997 = vld [vmem:[%s1949 + $0x178] sm:$0xff]
    %v1998 = vld [vmem:[%s1949 + $0x180] sm:$0xff]
    %v1999 = vld [vmem:[%s1949 + $0x188] sm:$0xff]
    %v2000 = vld [vmem:[%s1949 + $0x190] sm:$0xff]
    %v2001 = vld [vmem:[%s1949 + $0x198] sm:$0xff]
    %v2002 = vld [vmem:[%s1949 + $0x1a0] sm:$0xff]
    %v2003 = vld [vmem:[%s1949 + $0x1a8] sm:$0xff]
    %v2004 = vld [vmem:[%s1949 + $0x1b0] sm:$0xff]
    %v2005 = vld [vmem:[%s1949 + $0x1b8] sm:$0xff]
    %v2006 = vld [vmem:[%s1949 + $0x1c0] sm:$0xff]
    %v2007 = vld [vmem:[%s1949 + $0x1c8] sm:$0xff]
    %v2008 = vld [vmem:[%s1949 + $0x1d0] sm:$0xff]
    %v2009 = vld [vmem:[%s1949 + $0x1d8] sm:$0xff]
    %v2010 = vld [vmem:[%s1949 + $0x1e0] sm:$0xff]
    %v2011 = vld [vmem:[%s1949 + $0x1e8] sm:$0xff]
    %v2012 = vld [vmem:[%s1949 + $0x1f0] sm:$0xff]
    %v2013 = vld [vmem:[%s1949 + $0x1f8] sm:$0xff]
    %v2014 = vld [vmem:[%s1949 + $0x200] sm:$0xff]
    %v2015 = vld [vmem:[%s1949 + $0x208] sm:$0xff]
    %v2016 = vld [vmem:[%s1949 + $0x210] sm:$0xff]
    %v2017 = vld [vmem:[%s1949 + $0x218] sm:$0xff]
    %v2018 = vld [vmem:[%s1949 + $0x220] sm:$0xff]
    %v2019 = vld [vmem:[%s1949 + $0x228] sm:$0xff]
    %v2020 = vld [vmem:[%s1949 + $0x230] sm:$0xff]
    %v2021 = vld [vmem:[%s1949 + $0x238] sm:$0xff]
    %v2022 = vld [vmem:[%s1949 + $0x240] sm:$0xff]
    %v2023 = vld [vmem:[%s1949 + $0x248] sm:$0xff]
    %v2024 = vld [vmem:[%s1949 + $0x250] sm:$0xff]
    %v2025 = vld [vmem:[%s1949 + $0x258] sm:$0xff]
    %v2026 = vld [vmem:[%s1949 + $0x260] sm:$0xff]
    %v2027 = vld [vmem:[%s1949 + $0x268] sm:$0xff]
    %v2028 = vld [vmem:[%s1949 + $0x270] sm:$0xff]
    %v2029 = vld [vmem:[%s1949 + $0x278] sm:$0xff]
    %v2030 = vld [vmem:[%s1949 + $0x280] sm:$0xff]
    %v2031 = vld [vmem:[%s1949 + $0x288] sm:$0xff]
    %v2032 = vld [vmem:[%s1949 + $0x290] sm:$0xff]
    %v2033 = vld [vmem:[%s1949 + $0x298] sm:$0xff]
    %v2034 = vld [vmem:[%s1949 + $0x2a0] sm:$0xff]
    %v2035 = vld [vmem:[%s1949 + $0x2a8] sm:$0xff]
    %v2036 = vld [vmem:[%s1949 + $0x2b0] sm:$0xff]
    %v2037 = vld [vmem:[%s1949 + $0x2b8] sm:$0xff]
    %v2038 = vld [vmem:[%s1949 + $0x2c0] sm:$0xff]
    %v2039 = vld [vmem:[%s1949 + $0x2c8] sm:$0xff]
    %v2040 = vld [vmem:[%s1949 + $0x2d0] sm:$0xff]
    %v2041 = vld [vmem:[%s1949 + $0x2d8] sm:$0xff]
    %v2042 = vld [vmem:[%s1949 + $0x2e0] sm:$0xff]
    %v2043 = vld [vmem:[%s1949 + $0x2e8] sm:$0xff]
    %v2044 = vld [vmem:[%s1949 + $0x2f0] sm:$0xff]
    %v2045 = vld [vmem:[%s1949 + $0x2f8] sm:$0xff]
    %v2046 = vld [vmem:[%s1949 + $0x300] sm:$0xff]
    %v2047 = vld [vmem:[%s1949 + $0x308] sm:$0xff]
    %v2048 = vld [vmem:[%s1949 + $0x310] sm:$0xff]
    %v2049 = vld [vmem:[%s1949 + $0x318] sm:$0xff]
    %v2050 = vld [vmem:[%s1949 + $0x320] sm:$0xff]
    %v2051 = vld [vmem:[%s1949 + $0x328] sm:$0xff]
    %v2052 = vld [vmem:[%s1949 + $0x330] sm:$0xff]
    %v2053 = vld [vmem:[%s1949 + $0x338] sm:$0xff]
    %v2054 = vld [vmem:[%s1949 + $0x340] sm:$0xff]
    %v2055 = vld [vmem:[%s1949 + $0x348] sm:$0xff]
    %v2056 = vld [vmem:[%s1949 + $0x350] sm:$0xff]
    %v2057 = vld [vmem:[%s1949 + $0x358] sm:$0xff]
    %v2058 = vld [vmem:[%s1949 + $0x360] sm:$0xff]
    %v2059 = vld [vmem:[%s1949 + $0x368] sm:$0xff]
    %v2060 = vld [vmem:[%s1949 + $0x370] sm:$0xff]
    %v2061 = vld [vmem:[%s1949 + $0x378] sm:$0xff]
    %v2062 = vld [vmem:[%s1949 + $0x380] sm:$0xff]
    %v2063 = vld [vmem:[%s1949 + $0x388] sm:$0xff]
    %v2064 = vld [vmem:[%s1949 + $0x390] sm:$0xff]
    %v2065 = vld [vmem:[%s1949 + $0x398] sm:$0xff]
    %v2066 = vld [vmem:[%s1949 + $0x3a0] sm:$0xff]
    %v2067 = vld [vmem:[%s1949 + $0x3a8] sm:$0xff]
    %v2068 = vld [vmem:[%s1949 + $0x3b0] sm:$0xff]
    %v2069 = vld [vmem:[%s1949 + $0x3b8] sm:$0xff]
    %v2070 = vld [vmem:[%s1949 + $0x3c0] sm:$0xff]
    %v2071 = vld [vmem:[%s1949 + $0x3c8] sm:$0xff]
    %v2072 = vld [vmem:[%s1949 + $0x3d0] sm:$0xff]
    %v2073 = vld [vmem:[%s1949 + $0x3d8] sm:$0xff]
    %v2074 = vld [vmem:[%s1949 + $0x3e0] sm:$0xff]
    %v2075 = vld [vmem:[%s1949 + $0x3e8] sm:$0xff]
    %v2076 = vld [vmem:[%s1949 + $0x3f0] sm:$0xff]
    %v2077 = vld [vmem:[%s1949 + $0x3f8] sm:$0xff]
    %2078 = vmatprep.subr.mxu0 %v1951
    %2079 = vmatpush1.msra.mxu0 %v1950
    %2080 = vmatprep.subr.mxu0 %v1959
    %2081 = vmatpush1.msra.mxu0 %v1958
    %2082 = vmatprep.subr.mxu0 %v1967
    %2083 = vmatpush1.msra.mxu0 %v1966
    %2084 = vmatprep.subr.mxu0 %v1975
    %2085 = vmatpush1.msra.mxu0 %v1974
    %2086 = vmatprep.subr.mxu0 %v1983
    %2087 = vmatpush1.msra.mxu0 %v1982
    %2088 = vmatprep.subr.mxu0 %v1991
    %2089 = vmatpush1.msra.mxu0 %v1990
    %2090 = vmatprep.subr.mxu0 %v1999
    %2091 = vmatpush1.msra.mxu0 %v1998
    %2092 = vmatprep.subr.mxu0 %v2007
    %2093 = vmatpush1.msra.mxu0 %v2006
    %2094 = vmatprep.subr.mxu0 %v2015
    %2095 = vmatpush1.msra.mxu0 %v2014
    %2096 = vmatprep.subr.mxu0 %v2023
    %2097 = vmatpush1.msra.mxu0 %v2022
    %2098 = vmatprep.subr.mxu0 %v2031
    %2099 = vmatpush1.msra.mxu0 %v2030
    %2100 = vmatprep.subr.mxu0 %v2039
    %2101 = vmatpush1.msra.mxu0 %v2038
    %2102 = vmatprep.subr.mxu0 %v2047
    %2103 = vmatpush1.msra.mxu0 %v2046
    %2104 = vmatprep.subr.mxu0 %v2055
    %2105 = vmatpush1.msra.mxu0 %v2054
    %2106 = vmatprep.subr.mxu0 %v2063
    %2107 = vmatpush1.msra.mxu0 %v2062
    %2108 = vmatprep.subr.mxu0 %v2071
    %2109 = vmatpush1.msra.mxu0 %v2070
    %2110 = vmatprep.subr.mxu0 0.0
    %2111 = vmatpush1.msra.mxu0 0.0
    %2112 = vmatprep.subr.mxu0 0.0
    %2113 = vmatpush1.msra.mxu0 0.0
    %2114 = vmatprep.subr.mxu0 0.0
    %2115 = vmatpush1.msra.mxu0 0.0
    %2116 = vmatprep.subr.mxu0 0.0
    %2117 = vmatpush1.msra.mxu0 0.0
    %2118 = vmatprep.subr.mxu0 0.0
    %2119 = vmatpush1.msra.mxu0 0.0
    %2120 = vmatprep.subr.mxu0 0.0
    %2121 = vmatpush1.msra.mxu0 0.0
    %2122 = vmatprep.subr.mxu0 0.0
    %2123 = vmatpush1.msra.mxu0 0.0
    %2124 = vmatprep.subr.mxu0 0.0
    %2125 = vmatpush1.msra.mxu0 0.0
    %2126 = vmatprep.subr.mxu0 0.0
    %2127 = vmatpush1.msra.mxu0 0.0
    %2128 = vmatprep.subr.mxu0 0.0
    %2129 = vmatpush1.msra.mxu0 0.0
    %2130 = vmatprep.subr.mxu0 0.0
    %2131 = vmatpush1.msra.mxu0 0.0
    %2132 = vmatprep.subr.mxu0 0.0
    %2133 = vmatpush1.msra.mxu0 0.0
    %2134 = vmatprep.subr.mxu0 0.0
    %2135 = vmatpush1.msra.mxu0 0.0
    %2136 = vmatprep.subr.mxu0 0.0
    %2137 = vmatpush1.msra.mxu0 0.0
    %2138 = vmatprep.subr.mxu0 0.0
    %2139 = vmatpush1.msra.mxu0 0.0
    %2140 = vmatprep.subr.mxu0 0.0
    %2141 = vmatpush1.msra.mxu0 0.0
    %2142 = vmatprep.mubr.f32.mxu0 0.0
    %2143 = vmatmul.mubr.f32.gmra.mrb[0].mxu0 %v1928
    %v2144 = vpop.f32.mrb[0].mxu0
    %v2145 = vadd.f32 0.0, %v2144
    %v2146 = vpop.f32.mrb[0].mxu0
    %v2147 = vadd.f32 0.0, %v2146
    %2148 = vmatprep.mubr.f32.mxu0 0.0
    %2149 = vmatmul.mubr.f32.gmra.mrb[0].mxu0 %v1929
    %v2150 = vpop.f32.mrb[0].mxu0
    %v2151 = vadd.f32 0.0, %v2150
    %v2152 = vpop.f32.mrb[0].mxu0
    %v2153 = vadd.f32 0.0, %v2152
    %2154 = vmatprep.mubr.f32.mxu0 0.0
    %2155 = vmatmul.mubr.f32.gmra.mrb[0].mxu0 %v1930
    %v2156 = vpop.f32.mrb[0].mxu0
    %v2157 = vadd.f32 0.0, %v2156
    %v2158 = vpop.f32.mrb[0].mxu0
    %v2159 = vadd.f32 0.0, %v2158
    %2160 = vmatprep.mubr.f32.mxu0 0.0
    %2161 = vmatmul.mubr.f32.gmra.mrb[0].mxu0 %v1931
    %v2162 = vpop.f32.mrb[0].mxu0
    %v2163 = vadd.f32 0.0, %v2162
    %v2164 = vpop.f32.mrb[0].mxu0
    %v2165 = vadd.f32 0.0, %v2164
    %2166 = vdwg.mxu0
    %2167 = vmatprep.subr.mxu0 %v1953
    %2168 = vmatpush1.msra.mxu0 %v1952
    %2169 = vmatprep.subr.mxu0 %v1961
    %2170 = vmatpush1.msra.mxu0 %v1960
    %2171 = vmatprep.subr.mxu0 %v1969
    %2172 = vmatpush1.msra.mxu0 %v1968
    %2173 = vmatprep.subr.mxu0 %v1977
    %2174 = vmatpush1.msra.mxu0 %v1976
    %2175 = vmatprep.subr.mxu0 %v1985
    %2176 = vmatpush1.msra.mxu0 %v1984
    %2177 = vmatprep.subr.mxu0 %v1993
    %2178 = vmatpush1.msra.mxu0 %v1992
    %2179 = vmatprep.subr.mxu0 %v2001
    %2180 = vmatpush1.msra.mxu0 %v2000
    %2181 = vmatprep.subr.mxu0 %v2009
    %2182 = vmatpush1.msra.mxu0 %v2008
    %2183 = vmatprep.subr.mxu0 %v2017
    %2184 = vmatpush1.msra.mxu0 %v2016
    %2185 = vmatprep.subr.mxu0 %v2025
    %2186 = vmatpush1.msra.mxu0 %v2024
    %2187 = vmatprep.subr.mxu0 %v2033
    %2188 = vmatpush1.msra.mxu0 %v2032
    %2189 = vmatprep.subr.mxu0 %v2041
    %2190 = vmatpush1.msra.mxu0 %v2040
    %2191 = vmatprep.subr.mxu0 %v2049
    %2192 = vmatpush1.msra.mxu0 %v2048
    %2193 = vmatprep.subr.mxu0 %v2057
    %2194 = vmatpush1.msra.mxu0 %v2056
    %2195 = vmatprep.subr.mxu0 %v2065
    %2196 = vmatpush1.msra.mxu0 %v2064
    %2197 = vmatprep.subr.mxu0 %v2073
    %2198 = vmatpush1.msra.mxu0 %v2072
    %2199 = vmatprep.subr.mxu0 0.0
    %2200 = vmatpush1.msra.mxu0 0.0
    %2201 = vmatprep.subr.mxu0 0.0
    %2202 = vmatpush1.msra.mxu0 0.0
    %2203 = vmatprep.subr.mxu0 0.0
    %2204 = vmatpush1.msra.mxu0 0.0
    %2205 = vmatprep.subr.mxu0 0.0
    %2206 = vmatpush1.msra.mxu0 0.0
    %2207 = vmatprep.subr.mxu0 0.0
    %2208 = vmatpush1.msra.mxu0 0.0
    %2209 = vmatprep.subr.mxu0 0.0
    %2210 = vmatpush1.msra.mxu0 0.0
    %2211 = vmatprep.subr.mxu0 0.0
    %2212 = vmatpush1.msra.mxu0 0.0
    %2213 = vmatprep.subr.mxu0 0.0
    %2214 = vmatpush1.msra.mxu0 0.0
    %2215 = vmatprep.subr.mxu0 0.0
    %2216 = vmatpush1.msra.mxu0 0.0
    %2217 = vmatprep.subr.mxu0 0.0
    %2218 = vmatpush1.msra.mxu0 0.0
    %2219 = vmatprep.subr.mxu0 0.0
    %2220 = vmatpush1.msra.mxu0 0.0
    %2221 = vmatprep.subr.mxu0 0.0
    %2222 = vmatpush1.msra.mxu0 0.0
    %2223 = vmatprep.subr.mxu0 0.0
    %2224 = vmatpush1.msra.mxu0 0.0
    %2225 = vmatprep.subr.mxu0 0.0
    %2226 = vmatpush1.msra.mxu0 0.0
    %2227 = vmatprep.subr.mxu0 0.0
    %2228 = vmatpush1.msra.mxu0 0.0
    %2229 = vmatprep.subr.mxu0 0.0
    %2230 = vmatpush1.msra.mxu0 0.0
    %2231 = vmatprep.mubr.f32.mxu0 0.0
    %2232 = vmatmul.mubr.f32.gmra.mrb[0].mxu0 %v1928
    %v2233 = vpop.f32.mrb[0].mxu0
    %v2234 = vadd.f32 0.0, %v2233
    %v2235 = vpop.f32.mrb[0].mxu0
    %v2236 = vadd.f32 0.0, %v2235
    %2237 = vmatprep.mubr.f32.mxu0 0.0
    %2238 = vmatmul.mubr.f32.gmra.mrb[0].mxu0 %v1929
    %v2239 = vpop.f32.mrb[0].mxu0
    %v2240 = vadd.f32 0.0, %v2239
    %v2241 = vpop.f32.mrb[0].mxu0
    %v2242 = vadd.f32 0.0, %v2241
    %2243 = vmatprep.mubr.f32.mxu0 0.0
    %2244 = vmatmul.mubr.f32.gmra.mrb[0].mxu0 %v1930
    %v2245 = vpop.f32.mrb[0].mxu0
    %v2246 = vadd.f32 0.0, %v2245
    %v2247 = vpop.f32.mrb[0].mxu0
    %v2248 = vadd.f32 0.0, %v2247
    %2249 = vmatprep.mubr.f32.mxu0 0.0
    %2250 = vmatmul.mubr.f32.gmra.mrb[0].mxu0 %v1931
    %v2251 = vpop.f32.mrb[0].mxu0
    %v2252 = vadd.f32 0.0, %v2251
    %v2253 = vpop.f32.mrb[0].mxu0
    %v2254 = vadd.f32 0.0, %v2253
    %2255 = vdwg.mxu0
    %2256 = vmatprep.subr.mxu0 %v1955
    %2257 = vmatpush1.msra.mxu0 %v1954
    %2258 = vmatprep.subr.mxu0 %v1963
    %2259 = vmatpush1.msra.mxu0 %v1962
    %2260 = vmatprep.subr.mxu0 %v1971
    %2261 = vmatpush1.msra.mxu0 %v1970
    %2262 = vmatprep.subr.mxu0 %v1979
    %2263 = vmatpush1.msra.mxu0 %v1978
    %2264 = vmatprep.subr.mxu0 %v1987
    %2265 = vmatpush1.msra.mxu0 %v1986
    %2266 = vmatprep.subr.mxu0 %v1995
    %2267 = vmatpush1.msra.mxu0 %v1994
    %2268 = vmatprep.subr.mxu0 %v2003
    %2269 = vmatpush1.msra.mxu0 %v2002
    %2270 = vmatprep.subr.mxu0 %v2011
    %2271 = vmatpush1.msra.mxu0 %v2010
    %2272 = vmatprep.subr.mxu0 %v2019
    %2273 = vmatpush1.msra.mxu0 %v2018
    %2274 = vmatprep.subr.mxu0 %v2027
    %2275 = vmatpush1.msra.mxu0 %v2026
    %2276 = vmatprep.subr.mxu0 %v2035
    %2277 = vmatpush1.msra.mxu0 %v2034
    %2278 = vmatprep.subr.mxu0 %v2043
    %2279 = vmatpush1.msra.mxu0 %v2042
    %2280 = vmatprep.subr.mxu0 %v2051
    %2281 = vmatpush1.msra.mxu0 %v2050
    %2282 = vmatprep.subr.mxu0 %v2059
    %2283 = vmatpush1.msra.mxu0 %v2058
    %2284 = vmatprep.subr.mxu0 %v2067
    %2285 = vmatpush1.msra.mxu0 %v2066
    %2286 = vmatprep.subr.mxu0 %v2075
    %2287 = vmatpush1.msra.mxu0 %v2074
    %2288 = vmatprep.subr.mxu0 0.0
    %2289 = vmatpush1.msra.mxu0 0.0
    %2290 = vmatprep.subr.mxu0 0.0
    %2291 = vmatpush1.msra.mxu0 0.0
    %2292 = vmatprep.subr.mxu0 0.0
    %2293 = vmatpush1.msra.mxu0 0.0
    %2294 = vmatprep.subr.mxu0 0.0
    %2295 = vmatpush1.msra.mxu0 0.0
    %2296 = vmatprep.subr.mxu0 0.0
    %2297 = vmatpush1.msra.mxu0 0.0
    %2298 = vmatprep.subr.mxu0 0.0
    %2299 = vmatpush1.msra.mxu0 0.0
    %2300 = vmatprep.subr.mxu0 0.0
    %2301 = vmatpush1.msra.mxu0 0.0
    %2302 = vmatprep.subr.mxu0 0.0
    %2303 = vmatpush1.msra.mxu0 0.0
    %2304 = vmatprep.subr.mxu0 0.0
    %2305 = vmatpush1.msra.mxu0 0.0
    %2306 = vmatprep.subr.mxu0 0.0
    %2307 = vmatpush1.msra.mxu0 0.0
    %2308 = vmatprep.subr.mxu0 0.0
    %2309 = vmatpush1.msra.mxu0 0.0
    %2310 = vmatprep.subr.mxu0 0.0
    %2311 = vmatpush1.msra.mxu0 0.0
    %2312 = vmatprep.subr.mxu0 0.0
    %2313 = vmatpush1.msra.mxu0 0.0
    %2314 = vmatprep.subr.mxu0 0.0
    %2315 = vmatpush1.msra.mxu0 0.0
    %2316 = vmatprep.subr.mxu0 0.0
    %2317 = vmatpush1.msra.mxu0 0.0
    %2318 = vmatprep.subr.mxu0 0.0
    %2319 = vmatpush1.msra.mxu0 0.0
    %2320 = vmatprep.mubr.f32.mxu0 0.0
    %2321 = vmatmul.mubr.f32.gmra.mrb[0].mxu0 %v1928
    %v2322 = vpop.f32.mrb[0].mxu0
    %v2323 = vadd.f32 0.0, %v2322
    %v2324 = vpop.f32.mrb[0].mxu0
    %v2325 = vadd.f32 0.0, %v2324
    %2326 = vmatprep.mubr.f32.mxu0 0.0
    %2327 = vmatmul.mubr.f32.gmra.mrb[0].mxu0 %v1929
    %v2328 = vpop.f32.mrb[0].mxu0
    %v2329 = vadd.f32 0.0, %v2328
    %v2330 = vpop.f32.mrb[0].mxu0
    %v2331 = vadd.f32 0.0, %v2330
    %2332 = vmatprep.mubr.f32.mxu0 0.0
    %2333 = vmatmul.mubr.f32.gmra.mrb[0].mxu0 %v1930
    %v2334 = vpop.f32.mrb[0].mxu0
    %v2335 = vadd.f32 0.0, %v2334
    %v2336 = vpop.f32.mrb[0].mxu0
    %v2337 = vadd.f32 0.0, %v2336
    %2338 = vmatprep.mubr.f32.mxu0 0.0
    %2339 = vmatmul.mubr.f32.gmra.mrb[0].mxu0 %v1931
    %v2340 = vpop.f32.mrb[0].mxu0
    %v2341 = vadd.f32 0.0, %v2340
    %v2342 = vpop.f32.mrb[0].mxu0
    %v2343 = vadd.f32 0.0, %v2342
    %2344 = vdwg.mxu0
    %2345 = vmatprep.subr.mxu0 %v1957
    %2346 = vmatpush1.msra.mxu0 %v1956
    %2347 = vmatprep.subr.mxu0 %v1965
    %2348 = vmatpush1.msra.mxu0 %v1964
    %2349 = vmatprep.subr.mxu0 %v1973
    %2350 = vmatpush1.msra.mxu0 %v1972
    %2351 = vmatprep.subr.mxu0 %v1981
    %2352 = vmatpush1.msra.mxu0 %v1980
    %2353 = vmatprep.subr.mxu0 %v1989
    %2354 = vmatpush1.msra.mxu0 %v1988
    %2355 = vmatprep.subr.mxu0 %v1997
    %2356 = vmatpush1.msra.mxu0 %v1996
    %2357 = vmatprep.subr.mxu0 %v2005
    %2358 = vmatpush1.msra.mxu0 %v2004
    %2359 = vmatprep.subr.mxu0 %v2013
    %2360 = vmatpush1.msra.mxu0 %v2012
    %2361 = vmatprep.subr.mxu0 %v2021
    %2362 = vmatpush1.msra.mxu0 %v2020
    %2363 = vmatprep.subr.mxu0 %v2029
    %2364 = vmatpush1.msra.mxu0 %v2028
    %2365 = vmatprep.subr.mxu0 %v2037
    %2366 = vmatpush1.msra.mxu0 %v2036
    %2367 = vmatprep.subr.mxu0 %v2045
    %2368 = vmatpush1.msra.mxu0 %v2044
    %2369 = vmatprep.subr.mxu0 %v2053
    %2370 = vmatpush1.msra.mxu0 %v2052
    %2371 = vmatprep.subr.mxu0 %v2061
    %2372 = vmatpush1.msra.mxu0 %v2060
    %2373 = vmatprep.subr.mxu0 %v2069
    %2374 = vmatpush1.msra.mxu0 %v2068
    %2375 = vmatprep.subr.mxu0 %v2077
    %2376 = vmatpush1.msra.mxu0 %v2076
    %2377 = vmatprep.subr.mxu0 0.0
    %2378 = vmatpush1.msra.mxu0 0.0
    %2379 = vmatprep.subr.mxu0 0.0
    %2380 = vmatpush1.msra.mxu0 0.0
    %2381 = vmatprep.subr.mxu0 0.0
    %2382 = vmatpush1.msra.mxu0 0.0
    %2383 = vmatprep.subr.mxu0 0.0
    %2384 = vmatpush1.msra.mxu0 0.0
    %2385 = vmatprep.subr.mxu0 0.0
    %2386 = vmatpush1.msra.mxu0 0.0
    %2387 = vmatprep.subr.mxu0 0.0
    %2388 = vmatpush1.msra.mxu0 0.0
    %2389 = vmatprep.subr.mxu0 0.0
    %2390 = vmatpush1.msra.mxu0 0.0
    %2391 = vmatprep.subr.mxu0 0.0
    %2392 = vmatpush1.msra.mxu0 0.0
    %2393 = vmatprep.subr.mxu0 0.0
    %2394 = vmatpush1.msra.mxu0 0.0
    %2395 = vmatprep.subr.mxu0 0.0
    %2396 = vmatpush1.msra.mxu0 0.0
    %2397 = vmatprep.subr.mxu0 0.0
    %2398 = vmatpush1.msra.mxu0 0.0
    %2399 = vmatprep.subr.mxu0 0.0
    %2400 = vmatpush1.msra.mxu0 0.0
    %2401 = vmatprep.subr.mxu0 0.0
    %2402 = vmatpush1.msra.mxu0 0.0
    %2403 = vmatprep.subr.mxu0 0.0
    %2404 = vmatpush1.msra.mxu0 0.0
    %2405 = vmatprep.subr.mxu0 0.0
    %2406 = vmatpush1.msra.mxu0 0.0
    %2407 = vmatprep.subr.mxu0 0.0
    %2408 = vmatpush1.msra.mxu0 0.0
    %2409 = vmatprep.mubr.f32.mxu0 0.0
    %2410 = vmatmul.mubr.f32.gmra.mrb[0].mxu0 %v1928
    %v2411 = vpop.f32.mrb[0].mxu0
    %v2412 = vadd.f32 0.0, %v2411
    %v2413 = vpop.f32.mrb[0].mxu0
    %v2414 = vadd.f32 0.0, %v2413
    %2415 = vmatprep.mubr.f32.mxu0 0.0
    %2416 = vmatmul.mubr.f32.gmra.mrb[0].mxu0 %v1929
    %v2417 = vpop.f32.mrb[0].mxu0
    %v2418 = vadd.f32 0.0, %v2417
    %v2419 = vpop.f32.mrb[0].mxu0
    %v2420 = vadd.f32 0.0, %v2419
    %2421 = vmatprep.mubr.f32.mxu0 0.0
    %2422 = vmatmul.mubr.f32.gmra.mrb[0].mxu0 %v1930
    %v2423 = vpop.f32.mrb[0].mxu0
    %v2424 = vadd.f32 0.0, %v2423
    %v2425 = vpop.f32.mrb[0].mxu0
    %v2426 = vadd.f32 0.0, %v2425
    %2427 = vmatprep.mubr.f32.mxu0 0.0
    %2428 = vmatmul.mubr.f32.gmra.mrb[0].mxu0 %v1931
    %v2429 = vpop.f32.mrb[0].mxu0
    %v2430 = vadd.f32 0.0, %v2429
    %v2431 = vpop.f32.mrb[0].mxu0
    %v2432 = vadd.f32 0.0, %v2431
    %2433 = vdwg.mxu0
    %2434 = vmatprep.subr.mxu0 0.0
    %2435 = vmatpush1.msra.mxu0 %v2147
    %2436 = vmatprep.subr.mxu0 0.0
    %2437 = vmatpush1.msra.mxu0 %v2153
    %2438 = vmatprep.subr.mxu0 0.0
    %2439 = vmatpush1.msra.mxu0 %v2159
    %2440 = vmatprep.subr.mxu0 0.0
    %2441 = vmatpush1.msra.mxu0 %v2165
    %2442 = vmatprep.subr.mxu0 0.0
    %2443 = vmatpush1.msra.mxu0 0.0
    %2444 = vmatprep.subr.mxu0 0.0
    %2445 = vmatpush1.msra.mxu0 0.0
    %2446 = vmatprep.subr.mxu0 0.0
    %2447 = vmatpush1.msra.mxu0 0.0
    %2448 = vmatprep.subr.mxu0 0.0
    %2449 = vmatpush1.msra.mxu0 0.0
    %2450 = vmatprep.subr.mxu0 0.0
    %2451 = vmatpush1.msra.mxu0 0.0
    %2452 = vmatprep.subr.mxu0 0.0
    %2453 = vmatpush1.msra.mxu0 0.0
    %2454 = vmatprep.subr.mxu0 0.0
    %2455 = vmatpush1.msra.mxu0 0.0
    %2456 = vmatprep.subr.mxu0 0.0
    %2457 = vmatpush1.msra.mxu0 0.0
    %2458 = vmatprep.subr.mxu0 0.0
    %2459 = vmatpush1.msra.mxu0 0.0
    %2460 = vmatprep.subr.mxu0 0.0
    %2461 = vmatpush1.msra.mxu0 0.0
    %2462 = vmatprep.subr.mxu0 0.0
    %2463 = vmatpush1.msra.mxu0 0.0
    %2464 = vmatprep.subr.mxu0 0.0
    %2465 = vmatpush1.msra.mxu0 0.0
    %2466 = vmatprep.subr.mxu0 0.0
    %2467 = vmatpush1.msra.mxu0 0.0
    %2468 = vmatprep.subr.mxu0 0.0
    %2469 = vmatpush1.msra.mxu0 0.0
    %2470 = vmatprep.subr.mxu0 0.0
    %2471 = vmatpush1.msra.mxu0 0.0
    %2472 = vmatprep.subr.mxu0 0.0
    %2473 = vmatpush1.msra.mxu0 0.0
    %2474 = vmatprep.subr.mxu0 0.0
    %2475 = vmatpush1.msra.mxu0 0.0
    %2476 = vmatprep.subr.mxu0 0.0
    %2477 = vmatpush1.msra.mxu0 0.0
    %2478 = vmatprep.subr.mxu0 0.0
    %2479 = vmatpush1.msra.mxu0 0.0
    %2480 = vmatprep.subr.mxu0 0.0
    %2481 = vmatpush1.msra.mxu0 0.0
    %2482 = vmatprep.subr.mxu0 0.0
    %2483 = vmatpush1.msra.mxu0 0.0
    %2484 = vmatprep.subr.mxu0 0.0
    %2485 = vmatpush1.msra.mxu0 0.0
    %2486 = vmatprep.subr.mxu0 0.0
    %2487 = vmatpush1.msra.mxu0 0.0
    %2488 = vmatprep.subr.mxu0 0.0
    %2489 = vmatpush1.msra.mxu0 0.0
    %2490 = vmatprep.subr.mxu0 0.0
    %2491 = vmatpush1.msra.mxu0 0.0
    %2492 = vmatprep.subr.mxu0 0.0
    %2493 = vmatpush1.msra.mxu0 0.0
    %2494 = vmatprep.subr.mxu0 0.0
    %2495 = vmatpush1.msra.mxu0 0.0
    %2496 = vmatprep.subr.mxu0 0.0
    %2497 = vmatpush1.msra.mxu0 0.0
    %2498 = vmatprep.mubr.f32.mxu0 0.0
    %2499 = vmatmul.mubr.f32.gmra.mrb[0].mxu0 %v749
    %v2500 = vpop.f32.mrb[0].mxu0
    %v2501 = vadd.f32 0.0, %v2500
    %v2502 = vpop.f32.mrb[0].mxu0
    %2503 = vmatprep.mubr.f32.mxu0 0.0
    %2504 = vmatmul.mubr.f32.gmra.mrb[0].mxu0 %v752
    %v2505 = vpop.f32.mrb[0].mxu0
    %v2506 = vadd.f32 0.0, %v2505
    %v2507 = vpop.f32.mrb[0].mxu0
    %2508 = vmatprep.mubr.f32.mxu0 0.0
    %2509 = vmatmul.mubr.f32.gmra.mrb[0].mxu0 %v755
    %v2510 = vpop.f32.mrb[0].mxu0
    %v2511 = vadd.f32 0.0, %v2510
    %v2512 = vpop.f32.mrb[0].mxu0
    %2513 = vmatprep.mubr.f32.mxu0 0.0
    %2514 = vmatmul.mubr.f32.gmra.mrb[0].mxu0 %v758
    %v2515 = vpop.f32.mrb[0].mxu0
    %v2516 = vadd.f32 0.0, %v2515
    %v2517 = vpop.f32.mrb[0].mxu0
    %2518 = vdwg.mxu0
    %2519 = vmatprep.subr.mxu0 0.0
    %2520 = vmatpush1.msra.mxu0 %v2145
    %2521 = vmatprep.subr.mxu0 0.0
    %2522 = vmatpush1.msra.mxu0 %v2151
    %2523 = vmatprep.subr.mxu0 0.0
    %2524 = vmatpush1.msra.mxu0 %v2157
    %2525 = vmatprep.subr.mxu0 0.0
    %2526 = vmatpush1.msra.mxu0 %v2163
    %2527 = vmatprep.subr.mxu0 0.0
    %2528 = vmatpush1.msra.mxu0 0.0
    %2529 = vmatprep.subr.mxu0 0.0
    %2530 = vmatpush1.msra.mxu0 0.0
    %2531 = vmatprep.subr.mxu0 0.0
    %2532 = vmatpush1.msra.mxu0 0.0
    %2533 = vmatprep.subr.mxu0 0.0
    %2534 = vmatpush1.msra.mxu0 0.0
    %2535 = vmatprep.subr.mxu0 0.0
    %2536 = vmatpush1.msra.mxu0 0.0
    %2537 = vmatprep.subr.mxu0 0.0
    %2538 = vmatpush1.msra.mxu0 0.0
    %2539 = vmatprep.subr.mxu0 0.0
    %2540 = vmatpush1.msra.mxu0 0.0
    %2541 = vmatprep.subr.mxu0 0.0
    %2542 = vmatpush1.msra.mxu0 0.0
    %2543 = vmatprep.subr.mxu0 0.0
    %2544 = vmatpush1.msra.mxu0 0.0
    %2545 = vmatprep.subr.mxu0 0.0
    %2546 = vmatpush1.msra.mxu0 0.0
    %2547 = vmatprep.subr.mxu0 0.0
    %2548 = vmatpush1.msra.mxu0 0.0
    %2549 = vmatprep.subr.mxu0 0.0
    %2550 = vmatpush1.msra.mxu0 0.0
    %2551 = vmatprep.subr.mxu0 0.0
    %2552 = vmatpush1.msra.mxu0 0.0
    %2553 = vmatprep.subr.mxu0 0.0
    %2554 = vmatpush1.msra.mxu0 0.0
    %2555 = vmatprep.subr.mxu0 0.0
    %2556 = vmatpush1.msra.mxu0 0.0
    %2557 = vmatprep.subr.mxu0 0.0
    %2558 = vmatpush1.msra.mxu0 0.0
    %2559 = vmatprep.subr.mxu0 0.0
    %2560 = vmatpush1.msra.mxu0 0.0
    %2561 = vmatprep.subr.mxu0 0.0
    %2562 = vmatpush1.msra.mxu0 0.0
    %2563 = vmatprep.subr.mxu0 0.0
    %2564 = vmatpush1.msra.mxu0 0.0
    %2565 = vmatprep.subr.mxu0 0.0
    %2566 = vmatpush1.msra.mxu0 0.0
    %2567 = vmatprep.subr.mxu0 0.0
    %2568 = vmatpush1.msra.mxu0 0.0
    %2569 = vmatprep.subr.mxu0 0.0
    %2570 = vmatpush1.msra.mxu0 0.0
    %2571 = vmatprep.subr.mxu0 0.0
    %2572 = vmatpush1.msra.mxu0 0.0
    %2573 = vmatprep.subr.mxu0 0.0
    %2574 = vmatpush1.msra.mxu0 0.0
    %2575 = vmatprep.subr.mxu0 0.0
    %2576 = vmatpush1.msra.mxu0 0.0
    %2577 = vmatprep.subr.mxu0 0.0
    %2578 = vmatpush1.msra.mxu0 0.0
    %2579 = vmatprep.subr.mxu0 0.0
    %2580 = vmatpush1.msra.mxu0 0.0
    %2581 = vmatprep.subr.mxu0 0.0
    %2582 = vmatpush1.msra.mxu0 0.0
    %2583 = vmatprep.mubr.f32.mxu0 0.0
    %2584 = vmatmul.mubr.f32.gmra.mrb[0].mxu0 %v846
    %v2585 = vpop.f32.mrb[0].mxu0
    %v2586 = vadd.f32 %v2501, %v2585
    %v2587 = vpop.f32.mrb[0].mxu0
    %2588 = vmatprep.mubr.f32.mxu0 0.0
    %2589 = vmatmul.mubr.f32.gmra.mrb[0].mxu0 %v849
    %v2590 = vpop.f32.mrb[0].mxu0
    %v2591 = vadd.f32 %v2506, %v2590
    %v2592 = vpop.f32.mrb[0].mxu0
    %2593 = vmatprep.mubr.f32.mxu0 0.0
    %2594 = vmatmul.mubr.f32.gmra.mrb[0].mxu0 %v852
    %v2595 = vpop.f32.mrb[0].mxu0
    %v2596 = vadd.f32 %v2511, %v2595
    %v2597 = vpop.f32.mrb[0].mxu0
    %2598 = vmatprep.mubr.f32.mxu0 0.0
    %2599 = vmatmul.mubr.f32.gmra.mrb[0].mxu0 %v855
    %v2600 = vpop.f32.mrb[0].mxu0
    %v2601 = vadd.f32 %v2516, %v2600
    %v2602 = vpop.f32.mrb[0].mxu0
    %2603 = vdwg.mxu0
    %2604 = vmatprep.subr.mxu0 0.0
    %2605 = vmatpush1.msra.mxu0 %v2234
    %2606 = vmatprep.subr.mxu0 0.0
    %2607 = vmatpush1.msra.mxu0 %v2240
    %2608 = vmatprep.subr.mxu0 0.0
    %2609 = vmatpush1.msra.mxu0 %v2246
    %2610 = vmatprep.subr.mxu0 0.0
    %2611 = vmatpush1.msra.mxu0 %v2252
    %2612 = vmatprep.subr.mxu0 0.0
    %2613 = vmatpush1.msra.mxu0 0.0
    %2614 = vmatprep.subr.mxu0 0.0
    %2615 = vmatpush1.msra.mxu0 0.0
    %2616 = vmatprep.subr.mxu0 0.0
    %2617 = vmatpush1.msra.mxu0 0.0
    %2618 = vmatprep.subr.mxu0 0.0
    %2619 = vmatpush1.msra.mxu0 0.0
    %2620 = vmatprep.subr.mxu0 0.0
    %2621 = vmatpush1.msra.mxu0 0.0
    %2622 = vmatprep.subr.mxu0 0.0
    %2623 = vmatpush1.msra.mxu0 0.0
    %2624 = vmatprep.subr.mxu0 0.0
    %2625 = vmatpush1.msra.mxu0 0.0
    %2626 = vmatprep.subr.mxu0 0.0
    %2627 = vmatpush1.msra.mxu0 0.0
    %2628 = vmatprep.subr.mxu0 0.0
    %2629 = vmatpush1.msra.mxu0 0.0
    %2630 = vmatprep.subr.mxu0 0.0
    %2631 = vmatpush1.msra.mxu0 0.0
    %2632 = vmatprep.subr.mxu0 0.0
    %2633 = vmatpush1.msra.mxu0 0.0
    %2634 = vmatprep.subr.mxu0 0.0
    %2635 = vmatpush1.msra.mxu0 0.0
    %2636 = vmatprep.subr.mxu0 0.0
    %2637 = vmatpush1.msra.mxu0 0.0
    %2638 = vmatprep.subr.mxu0 0.0
    %2639 = vmatpush1.msra.mxu0 0.0
    %2640 = vmatprep.subr.mxu0 0.0
    %2641 = vmatpush1.msra.mxu0 0.0
    %2642 = vmatprep.subr.mxu0 0.0
    %2643 = vmatpush1.msra.mxu0 0.0
    %2644 = vmatprep.subr.mxu0 0.0
    %2645 = vmatpush1.msra.mxu0 0.0
    %2646 = vmatprep.subr.mxu0 0.0
    %2647 = vmatpush1.msra.mxu0 0.0
    %2648 = vmatprep.subr.mxu0 0.0
    %2649 = vmatpush1.msra.mxu0 0.0
    %2650 = vmatprep.subr.mxu0 0.0
    %2651 = vmatpush1.msra.mxu0 0.0
    %2652 = vmatprep.subr.mxu0 0.0
    %2653 = vmatpush1.msra.mxu0 0.0
    %2654 = vmatprep.subr.mxu0 0.0
    %2655 = vmatpush1.msra.mxu0 0.0
    %2656 = vmatprep.subr.mxu0 0.0
    %2657 = vmatpush1.msra.mxu0 0.0
    %2658 = vmatprep.subr.mxu0 0.0
    %2659 = vmatpush1.msra.mxu0 0.0
    %2660 = vmatprep.subr.mxu0 0.0
    %2661 = vmatpush1.msra.mxu0 0.0
    %2662 = vmatprep.subr.mxu0 0.0
    %2663 = vmatpush1.msra.mxu0 0.0
    %2664 = vmatprep.subr.mxu0 0.0
    %2665 = vmatpush1.msra.mxu0 0.0
    %2666 = vmatprep.subr.mxu0 0.0
    %2667 = vmatpush1.msra.mxu0 0.0
    %2668 = vmatprep.mubr.f32.mxu0 0.0
    %2669 = vmatmul.mubr.f32.gmra.mrb[0].mxu0 %v948
    %v2670 = vpop.f32.mrb[0].mxu0
    %v2671 = vadd.f32 0.0, %v2670
    %v2672 = vpop.f32.mrb[0].mxu0
    %2673 = vmatprep.mubr.f32.mxu0 0.0
    %2674 = vmatmul.mubr.f32.gmra.mrb[0].mxu0 %v951
    %v2675 = vpop.f32.mrb[0].mxu0
    %v2676 = vadd.f32 0.0, %v2675
    %v2677 = vpop.f32.mrb[0].mxu0
    %2678 = vmatprep.mubr.f32.mxu0 0.0
    %2679 = vmatmul.mubr.f32.gmra.mrb[0].mxu0 %v954
    %v2680 = vpop.f32.mrb[0].mxu0
    %v2681 = vadd.f32 0.0, %v2680
    %v2682 = vpop.f32.mrb[0].mxu0
    %2683 = vmatprep.mubr.f32.mxu0 0.0
    %2684 = vmatmul.mubr.f32.gmra.mrb[0].mxu0 %v957
    %v2685 = vpop.f32.mrb[0].mxu0
    %v2686 = vadd.f32 0.0, %v2685
    %v2687 = vpop.f32.mrb[0].mxu0
    %2688 = vdwg.mxu0
    %v2689 = vadd.f32 %v2586, %v2671
    %v2690 = vadd.f32 %v2591, %v2676
    %v2691 = vadd.f32 %v2596, %v2681
    %v2692 = vadd.f32 %v2601, %v2686
    %2693 = vmatprep.subr.mxu0 0.0
    %2694 = vmatpush1.msra.mxu0 %v2236
    %2695 = vmatprep.subr.mxu0 0.0
    %2696 = vmatpush1.msra.mxu0 %v2242
    %2697 = vmatprep.subr.mxu0 0.0
    %2698 = vmatpush1.msra.mxu0 %v2248
    %2699 = vmatprep.subr.mxu0 0.0
    %2700 = vmatpush1.msra.mxu0 %v2254
    %2701 = vmatprep.subr.mxu0 0.0
    %2702 = vmatpush1.msra.mxu0 0.0
    %2703 = vmatprep.subr.mxu0 0.0
    %2704 = vmatpush1.msra.mxu0 0.0
    %2705 = vmatprep.subr.mxu0 0.0
    %2706 = vmatpush1.msra.mxu0 0.0
    %2707 = vmatprep.subr.mxu0 0.0
    %2708 = vmatpush1.msra.mxu0 0.0
    %2709 = vmatprep.subr.mxu0 0.0
    %2710 = vmatpush1.msra.mxu0 0.0
    %2711 = vmatprep.subr.mxu0 0.0
    %2712 = vmatpush1.msra.mxu0 0.0
    %2713 = vmatprep.subr.mxu0 0.0
    %2714 = vmatpush1.msra.mxu0 0.0
    %2715 = vmatprep.subr.mxu0 0.0
    %2716 = vmatpush1.msra.mxu0 0.0
    %2717 = vmatprep.subr.mxu0 0.0
    %2718 = vmatpush1.msra.mxu0 0.0
    %2719 = vmatprep.subr.mxu0 0.0
    %2720 = vmatpush1.msra.mxu0 0.0
    %2721 = vmatprep.subr.mxu0 0.0
    %2722 = vmatpush1.msra.mxu0 0.0
    %2723 = vmatprep.subr.mxu0 0.0
    %2724 = vmatpush1.msra.mxu0 0.0
    %2725 = vmatprep.subr.mxu0 0.0
    %2726 = vmatpush1.msra.mxu0 0.0
    %2727 = vmatprep.subr.mxu0 0.0
    %2728 = vmatpush1.msra.mxu0 0.0
    %2729 = vmatprep.subr.mxu0 0.0
    %2730 = vmatpush1.msra.mxu0 0.0
    %2731 = vmatprep.subr.mxu0 0.0
    %2732 = vmatpush1.msra.mxu0 0.0
    %2733 = vmatprep.subr.mxu0 0.0
    %2734 = vmatpush1.msra.mxu0 0.0
    %2735 = vmatprep.subr.mxu0 0.0
    %2736 = vmatpush1.msra.mxu0 0.0
    %2737 = vmatprep.subr.mxu0 0.0
    %2738 = vmatpush1.msra.mxu0 0.0
    %2739 = vmatprep.subr.mxu0 0.0
    %2740 = vmatpush1.msra.mxu0 0.0
    %2741 = vmatprep.subr.mxu0 0.0
    %2742 = vmatpush1.msra.mxu0 0.0
    %2743 = vmatprep.subr.mxu0 0.0
    %2744 = vmatpush1.msra.mxu0 0.0
    %2745 = vmatprep.subr.mxu0 0.0
    %2746 = vmatpush1.msra.mxu0 0.0
    %2747 = vmatprep.subr.mxu0 0.0
    %2748 = vmatpush1.msra.mxu0 0.0
    %2749 = vmatprep.subr.mxu0 0.0
    %2750 = vmatpush1.msra.mxu0 0.0
    %2751 = vmatprep.subr.mxu0 0.0
    %2752 = vmatpush1.msra.mxu0 0.0
    %2753 = vmatprep.subr.mxu0 0.0
    %2754 = vmatpush1.msra.mxu0 0.0
    %2755 = vmatprep.subr.mxu0 0.0
    %2756 = vmatpush1.msra.mxu0 0.0
    %2757 = vmatprep.mubr.f32.mxu0 0.0
    %2758 = vmatmul.mubr.f32.gmra.mrb[0].mxu0 %v1054
    %v2759 = vpop.f32.mrb[0].mxu0
    %v2760 = vadd.f32 0.0, %v2759
    %v2761 = vpop.f32.mrb[0].mxu0
    %2762 = vmatprep.mubr.f32.mxu0 0.0
    %2763 = vmatmul.mubr.f32.gmra.mrb[0].mxu0 %v1057
    %v2764 = vpop.f32.mrb[0].mxu0
    %v2765 = vadd.f32 0.0, %v2764
    %v2766 = vpop.f32.mrb[0].mxu0
    %2767 = vmatprep.mubr.f32.mxu0 0.0
    %2768 = vmatmul.mubr.f32.gmra.mrb[0].mxu0 %v1060
    %v2769 = vpop.f32.mrb[0].mxu0
    %v2770 = vadd.f32 0.0, %v2769
    %v2771 = vpop.f32.mrb[0].mxu0
    %2772 = vmatprep.mubr.f32.mxu0 0.0
    %2773 = vmatmul.mubr.f32.gmra.mrb[0].mxu0 %v1063
    %v2774 = vpop.f32.mrb[0].mxu0
    %v2775 = vadd.f32 0.0, %v2774
    %v2776 = vpop.f32.mrb[0].mxu0
    %2777 = vdwg.mxu0
    %v2778 = vadd.f32 %v2689, %v2760
    %v2779 = vadd.f32 %v2690, %v2765
    %v2780 = vadd.f32 %v2691, %v2770
    %v2781 = vadd.f32 %v2692, %v2775
    %2782 = vmatprep.subr.mxu0 0.0
    %2783 = vmatpush1.msra.mxu0 %v2323
    %2784 = vmatprep.subr.mxu0 0.0
    %2785 = vmatpush1.msra.mxu0 %v2329
    %2786 = vmatprep.subr.mxu0 0.0
    %2787 = vmatpush1.msra.mxu0 %v2335
    %2788 = vmatprep.subr.mxu0 0.0
    %2789 = vmatpush1.msra.mxu0 %v2341
    %2790 = vmatprep.subr.mxu0 0.0
    %2791 = vmatpush1.msra.mxu0 0.0
    %2792 = vmatprep.subr.mxu0 0.0
    %2793 = vmatpush1.msra.mxu0 0.0
    %2794 = vmatprep.subr.mxu0 0.0
    %2795 = vmatpush1.msra.mxu0 0.0
    %2796 = vmatprep.subr.mxu0 0.0
    %2797 = vmatpush1.msra.mxu0 0.0
    %2798 = vmatprep.subr.mxu0 0.0
    %2799 = vmatpush1.msra.mxu0 0.0
    %2800 = vmatprep.subr.mxu0 0.0
    %2801 = vmatpush1.msra.mxu0 0.0
    %2802 = vmatprep.subr.mxu0 0.0
    %2803 = vmatpush1.msra.mxu0 0.0
    %2804 = vmatprep.subr.mxu0 0.0
    %2805 = vmatpush1.msra.mxu0 0.0
    %2806 = vmatprep.subr.mxu0 0.0
    %2807 = vmatpush1.msra.mxu0 0.0
    %2808 = vmatprep.subr.mxu0 0.0
    %2809 = vmatpush1.msra.mxu0 0.0
    %2810 = vmatprep.subr.mxu0 0.0
    %2811 = vmatpush1.msra.mxu0 0.0
    %2812 = vmatprep.subr.mxu0 0.0
    %2813 = vmatpush1.msra.mxu0 0.0
    %2814 = vmatprep.subr.mxu0 0.0
    %2815 = vmatpush1.msra.mxu0 0.0
    %2816 = vmatprep.subr.mxu0 0.0
    %2817 = vmatpush1.msra.mxu0 0.0
    %2818 = vmatprep.subr.mxu0 0.0
    %2819 = vmatpush1.msra.mxu0 0.0
    %2820 = vmatprep.subr.mxu0 0.0
    %2821 = vmatpush1.msra.mxu0 0.0
    %2822 = vmatprep.subr.mxu0 0.0
    %2823 = vmatpush1.msra.mxu0 0.0
    %2824 = vmatprep.subr.mxu0 0.0
    %2825 = vmatpush1.msra.mxu0 0.0
    %2826 = vmatprep.subr.mxu0 0.0
    %2827 = vmatpush1.msra.mxu0 0.0
    %2828 = vmatprep.subr.mxu0 0.0
    %2829 = vmatpush1.msra.mxu0 0.0
    %2830 = vmatprep.subr.mxu0 0.0
    %2831 = vmatpush1.msra.mxu0 0.0
    %2832 = vmatprep.subr.mxu0 0.0
    %2833 = vmatpush1.msra.mxu0 0.0
    %2834 = vmatprep.subr.mxu0 0.0
    %2835 = vmatpush1.msra.mxu0 0.0
    %2836 = vmatprep.subr.mxu0 0.0
    %2837 = vmatpush1.msra.mxu0 0.0
    %2838 = vmatprep.subr.mxu0 0.0
    %2839 = vmatpush1.msra.mxu0 0.0
    %2840 = vmatprep.subr.mxu0 0.0
    %2841 = vmatpush1.msra.mxu0 0.0
    %2842 = vmatprep.subr.mxu0 0.0
    %2843 = vmatpush1.msra.mxu0 0.0
    %2844 = vmatprep.subr.mxu0 0.0
    %2845 = vmatpush1.msra.mxu0 0.0
    %2846 = vmatprep.mubr.f32.mxu0 0.0
    %2847 = vmatmul.mubr.f32.gmra.mrb[0].mxu0 %v1160
    %v2848 = vpop.f32.mrb[0].mxu0
    %v2849 = vadd.f32 0.0, %v2848
    %v2850 = vpop.f32.mrb[0].mxu0
    %2851 = vmatprep.mubr.f32.mxu0 0.0
    %2852 = vmatmul.mubr.f32.gmra.mrb[0].mxu0 %v1163
    %v2853 = vpop.f32.mrb[0].mxu0
    %v2854 = vadd.f32 0.0, %v2853
    %v2855 = vpop.f32.mrb[0].mxu0
    %2856 = vmatprep.mubr.f32.mxu0 0.0
    %2857 = vmatmul.mubr.f32.gmra.mrb[0].mxu0 %v1166
    %v2858 = vpop.f32.mrb[0].mxu0
    %v2859 = vadd.f32 0.0, %v2858
    %v2860 = vpop.f32.mrb[0].mxu0
    %2861 = vmatprep.mubr.f32.mxu0 0.0
    %2862 = vmatmul.mubr.f32.gmra.mrb[0].mxu0 %v1169
    %v2863 = vpop.f32.mrb[0].mxu0
    %v2864 = vadd.f32 0.0, %v2863
    %v2865 = vpop.f32.mrb[0].mxu0
    %2866 = vdwg.mxu0
    %v2867 = vadd.f32 %v2778, %v2849
    %v2868 = vadd.f32 %v2779, %v2854
    %v2869 = vadd.f32 %v2780, %v2859
    %v2870 = vadd.f32 %v2781, %v2864
    %2871 = vmatprep.subr.mxu0 0.0
    %2872 = vmatpush1.msra.mxu0 %v2325
    %2873 = vmatprep.subr.mxu0 0.0
    %2874 = vmatpush1.msra.mxu0 %v2331
    %2875 = vmatprep.subr.mxu0 0.0
    %2876 = vmatpush1.msra.mxu0 %v2337
    %2877 = vmatprep.subr.mxu0 0.0
    %2878 = vmatpush1.msra.mxu0 %v2343
    %2879 = vmatprep.subr.mxu0 0.0
    %2880 = vmatpush1.msra.mxu0 0.0
    %2881 = vmatprep.subr.mxu0 0.0
    %2882 = vmatpush1.msra.mxu0 0.0
    %2883 = vmatprep.subr.mxu0 0.0
    %2884 = vmatpush1.msra.mxu0 0.0
    %2885 = vmatprep.subr.mxu0 0.0
    %2886 = vmatpush1.msra.mxu0 0.0
    %2887 = vmatprep.subr.mxu0 0.0
    %2888 = vmatpush1.msra.mxu0 0.0
    %2889 = vmatprep.subr.mxu0 0.0
    %2890 = vmatpush1.msra.mxu0 0.0
    %2891 = vmatprep.subr.mxu0 0.0
    %2892 = vmatpush1.msra.mxu0 0.0
    %2893 = vmatprep.subr.mxu0 0.0
    %2894 = vmatpush1.msra.mxu0 0.0
    %2895 = vmatprep.subr.mxu0 0.0
    %2896 = vmatpush1.msra.mxu0 0.0
    %2897 = vmatprep.subr.mxu0 0.0
    %2898 = vmatpush1.msra.mxu0 0.0
    %2899 = vmatprep.subr.mxu0 0.0
    %2900 = vmatpush1.msra.mxu0 0.0
    %2901 = vmatprep.subr.mxu0 0.0
    %2902 = vmatpush1.msra.mxu0 0.0
    %2903 = vmatprep.subr.mxu0 0.0
    %2904 = vmatpush1.msra.mxu0 0.0
    %2905 = vmatprep.subr.mxu0 0.0
    %2906 = vmatpush1.msra.mxu0 0.0
    %2907 = vmatprep.subr.mxu0 0.0
    %2908 = vmatpush1.msra.mxu0 0.0
    %2909 = vmatprep.subr.mxu0 0.0
    %2910 = vmatpush1.msra.mxu0 0.0
    %2911 = vmatprep.subr.mxu0 0.0
    %2912 = vmatpush1.msra.mxu0 0.0
    %2913 = vmatprep.subr.mxu0 0.0
    %2914 = vmatpush1.msra.mxu0 0.0
    %2915 = vmatprep.subr.mxu0 0.0
    %2916 = vmatpush1.msra.mxu0 0.0
    %2917 = vmatprep.subr.mxu0 0.0
    %2918 = vmatpush1.msra.mxu0 0.0
    %2919 = vmatprep.subr.mxu0 0.0
    %2920 = vmatpush1.msra.mxu0 0.0
    %2921 = vmatprep.subr.mxu0 0.0
    %2922 = vmatpush1.msra.mxu0 0.0
    %2923 = vmatprep.subr.mxu0 0.0
    %2924 = vmatpush1.msra.mxu0 0.0
    %2925 = vmatprep.subr.mxu0 0.0
    %2926 = vmatpush1.msra.mxu0 0.0
    %2927 = vmatprep.subr.mxu0 0.0
    %2928 = vmatpush1.msra.mxu0 0.0
    %2929 = vmatprep.subr.mxu0 0.0
    %2930 = vmatpush1.msra.mxu0 0.0
    %2931 = vmatprep.subr.mxu0 0.0
    %2932 = vmatpush1.msra.mxu0 0.0
    %2933 = vmatprep.subr.mxu0 0.0
    %2934 = vmatpush1.msra.mxu0 0.0
    %2935 = vmatprep.mubr.f32.mxu0 0.0
    %2936 = vmatmul.mubr.f32.gmra.mrb[0].mxu0 %v1266
    %v2937 = vpop.f32.mrb[0].mxu0
    %v2938 = vadd.f32 0.0, %v2937
    %v2939 = vpop.f32.mrb[0].mxu0
    %2940 = vmatprep.mubr.f32.mxu0 0.0
    %2941 = vmatmul.mubr.f32.gmra.mrb[0].mxu0 %v1269
    %v2942 = vpop.f32.mrb[0].mxu0
    %v2943 = vadd.f32 0.0, %v2942
    %v2944 = vpop.f32.mrb[0].mxu0
    %2945 = vmatprep.mubr.f32.mxu0 0.0
    %2946 = vmatmul.mubr.f32.gmra.mrb[0].mxu0 %v1272
    %v2947 = vpop.f32.mrb[0].mxu0
    %v2948 = vadd.f32 0.0, %v2947
    %v2949 = vpop.f32.mrb[0].mxu0
    %2950 = vmatprep.mubr.f32.mxu0 0.0
    %2951 = vmatmul.mubr.f32.gmra.mrb[0].mxu0 %v1275
    %v2952 = vpop.f32.mrb[0].mxu0
    %v2953 = vadd.f32 0.0, %v2952
    %v2954 = vpop.f32.mrb[0].mxu0
    %2955 = vdwg.mxu0
    %v2956 = vadd.f32 %v2867, %v2938
    %v2957 = vadd.f32 %v2868, %v2943
    %v2958 = vadd.f32 %v2869, %v2948
    %v2959 = vadd.f32 %v2870, %v2953
    %2960 = vmatprep.subr.mxu0 0.0
    %2961 = vmatpush1.msra.mxu0 %v2412
    %2962 = vmatprep.subr.mxu0 0.0
    %2963 = vmatpush1.msra.mxu0 %v2418
    %2964 = vmatprep.subr.mxu0 0.0
    %2965 = vmatpush1.msra.mxu0 %v2424
    %2966 = vmatprep.subr.mxu0 0.0
    %2967 = vmatpush1.msra.mxu0 %v2430
    %2968 = vmatprep.subr.mxu0 0.0
    %2969 = vmatpush1.msra.mxu0 0.0
    %2970 = vmatprep.subr.mxu0 0.0
    %2971 = vmatpush1.msra.mxu0 0.0
    %2972 = vmatprep.subr.mxu0 0.0
    %2973 = vmatpush1.msra.mxu0 0.0
    %2974 = vmatprep.subr.mxu0 0.0
    %2975 = vmatpush1.msra.mxu0 0.0
    %2976 = vmatprep.subr.mxu0 0.0
    %2977 = vmatpush1.msra.mxu0 0.0
    %2978 = vmatprep.subr.mxu0 0.0
    %2979 = vmatpush1.msra.mxu0 0.0
    %2980 = vmatprep.subr.mxu0 0.0
    %2981 = vmatpush1.msra.mxu0 0.0
    %2982 = vmatprep.subr.mxu0 0.0
    %2983 = vmatpush1.msra.mxu0 0.0
    %2984 = vmatprep.subr.mxu0 0.0
    %2985 = vmatpush1.msra.mxu0 0.0
    %2986 = vmatprep.subr.mxu0 0.0
    %2987 = vmatpush1.msra.mxu0 0.0
    %2988 = vmatprep.subr.mxu0 0.0
    %2989 = vmatpush1.msra.mxu0 0.0
    %2990 = vmatprep.subr.mxu0 0.0
    %2991 = vmatpush1.msra.mxu0 0.0
    %2992 = vmatprep.subr.mxu0 0.0
    %2993 = vmatpush1.msra.mxu0 0.0
    %2994 = vmatprep.subr.mxu0 0.0
    %2995 = vmatpush1.msra.mxu0 0.0
    %2996 = vmatprep.subr.mxu0 0.0
    %2997 = vmatpush1.msra.mxu0 0.0
    %2998 = vmatprep.subr.mxu0 0.0
    %2999 = vmatpush1.msra.mxu0 0.0
    %3000 = vmatprep.subr.mxu0 0.0
    %3001 = vmatpush1.msra.mxu0 0.0
    %3002 = vmatprep.subr.mxu0 0.0
    %3003 = vmatpush1.msra.mxu0 0.0
    %3004 = vmatprep.subr.mxu0 0.0
    %3005 = vmatpush1.msra.mxu0 0.0
    %3006 = vmatprep.subr.mxu0 0.0
    %3007 = vmatpush1.msra.mxu0 0.0
    %3008 = vmatprep.subr.mxu0 0.0
    %3009 = vmatpush1.msra.mxu0 0.0
    %3010 = vmatprep.subr.mxu0 0.0
    %3011 = vmatpush1.msra.mxu0 0.0
    %3012 = vmatprep.subr.mxu0 0.0
    %3013 = vmatpush1.msra.mxu0 0.0
    %3014 = vmatprep.subr.mxu0 0.0
    %3015 = vmatpush1.msra.mxu0 0.0
    %3016 = vmatprep.subr.mxu0 0.0
    %3017 = vmatpush1.msra.mxu0 0.0
    %3018 = vmatprep.subr.mxu0 0.0
    %3019 = vmatpush1.msra.mxu0 0.0
    %3020 = vmatprep.subr.mxu0 0.0
    %3021 = vmatpush1.msra.mxu0 0.0
    %3022 = vmatprep.subr.mxu0 0.0
    %3023 = vmatpush1.msra.mxu0 0.0
    %3024 = vmatprep.mubr.f32.mxu0 0.0
    %3025 = vmatmul.mubr.f32.gmra.mrb[0].mxu0 %v1372
    %v3026 = vpop.f32.mrb[0].mxu0
    %v3027 = vadd.f32 0.0, %v3026
    %v3028 = vpop.f32.mrb[0].mxu0
    %3029 = vmatprep.mubr.f32.mxu0 0.0
    %3030 = vmatmul.mubr.f32.gmra.mrb[0].mxu0 %v1375
    %v3031 = vpop.f32.mrb[0].mxu0
    %v3032 = vadd.f32 0.0, %v3031
    %v3033 = vpop.f32.mrb[0].mxu0
    %3034 = vmatprep.mubr.f32.mxu0 0.0
    %3035 = vmatmul.mubr.f32.gmra.mrb[0].mxu0 %v1378
    %v3036 = vpop.f32.mrb[0].mxu0
    %v3037 = vadd.f32 0.0, %v3036
    %v3038 = vpop.f32.mrb[0].mxu0
    %3039 = vmatprep.mubr.f32.mxu0 0.0
    %3040 = vmatmul.mubr.f32.gmra.mrb[0].mxu0 %v1381
    %v3041 = vpop.f32.mrb[0].mxu0
    %v3042 = vadd.f32 0.0, %v3041
    %v3043 = vpop.f32.mrb[0].mxu0
    %3044 = vdwg.mxu0
    %v3045 = vadd.f32 %v2956, %v3027
    %v3046 = vadd.f32 %v2957, %v3032
    %v3047 = vadd.f32 %v2958, %v3037
    %v3048 = vadd.f32 %v2959, %v3042
    %3049 = vmatprep.subr.mxu0 0.0
    %3050 = vmatpush1.msra.mxu0 %v2414
    %3051 = vmatprep.subr.mxu0 0.0
    %3052 = vmatpush1.msra.mxu0 %v2420
    %3053 = vmatprep.subr.mxu0 0.0
    %3054 = vmatpush1.msra.mxu0 %v2426
    %3055 = vmatprep.subr.mxu0 0.0
    %3056 = vmatpush1.msra.mxu0 %v2432
    %3057 = vmatprep.subr.mxu0 0.0
    %3058 = vmatpush1.msra.mxu0 0.0
    %3059 = vmatprep.subr.mxu0 0.0
    %3060 = vmatpush1.msra.mxu0 0.0
    %3061 = vmatprep.subr.mxu0 0.0
    %3062 = vmatpush1.msra.mxu0 0.0
    %3063 = vmatprep.subr.mxu0 0.0
    %3064 = vmatpush1.msra.mxu0 0.0
    %3065 = vmatprep.subr.mxu0 0.0
    %3066 = vmatpush1.msra.mxu0 0.0
    %3067 = vmatprep.subr.mxu0 0.0
    %3068 = vmatpush1.msra.mxu0 0.0
    %3069 = vmatprep.subr.mxu0 0.0
    %3070 = vmatpush1.msra.mxu0 0.0
    %3071 = vmatprep.subr.mxu0 0.0
    %3072 = vmatpush1.msra.mxu0 0.0
    %3073 = vmatprep.subr.mxu0 0.0
    %3074 = vmatpush1.msra.mxu0 0.0
    %3075 = vmatprep.subr.mxu0 0.0
    %3076 = vmatpush1.msra.mxu0 0.0
    %3077 = vmatprep.subr.mxu0 0.0
    %3078 = vmatpush1.msra.mxu0 0.0
    %3079 = vmatprep.subr.mxu0 0.0
    %3080 = vmatpush1.msra.mxu0 0.0
    %3081 = vmatprep.subr.mxu0 0.0
    %3082 = vmatpush1.msra.mxu0 0.0
    %3083 = vmatprep.subr.mxu0 0.0
    %3084 = vmatpush1.msra.mxu0 0.0
    %3085 = vmatprep.subr.mxu0 0.0
    %3086 = vmatpush1.msra.mxu0 0.0
    %3087 = vmatprep.subr.mxu0 0.0
    %3088 = vmatpush1.msra.mxu0 0.0
    %3089 = vmatprep.subr.mxu0 0.0
    %3090 = vmatpush1.msra.mxu0 0.0
    %3091 = vmatprep.subr.mxu0 0.0
    %3092 = vmatpush1.msra.mxu0 0.0
    %3093 = vmatprep.subr.mxu0 0.0
    %3094 = vmatpush1.msra.mxu0 0.0
    %3095 = vmatprep.subr.mxu0 0.0
    %3096 = vmatpush1.msra.mxu0 0.0
    %3097 = vmatprep.subr.mxu0 0.0
    %3098 = vmatpush1.msra.mxu0 0.0
    %3099 = vmatprep.subr.mxu0 0.0
    %3100 = vmatpush1.msra.mxu0 0.0
    %3101 = vmatprep.subr.mxu0 0.0
    %3102 = vmatpush1.msra.mxu0 0.0
    %3103 = vmatprep.subr.mxu0 0.0
    %3104 = vmatpush1.msra.mxu0 0.0
    %3105 = vmatprep.subr.mxu0 0.0
    %3106 = vmatpush1.msra.mxu0 0.0
    %3107 = vmatprep.subr.mxu0 0.0
    %3108 = vmatpush1.msra.mxu0 0.0
    %3109 = vmatprep.subr.mxu0 0.0
    %3110 = vmatpush1.msra.mxu0 0.0
    %3111 = vmatprep.subr.mxu0 0.0
    %3112 = vmatpush1.msra.mxu0 0.0
    %3113 = vmatprep.mubr.f32.mxu0 0.0
    %3114 = vmatmul.mubr.f32.gmra.mrb[0].mxu0 %v1478
    %v3115 = vpop.f32.mrb[0].mxu0
    %v3116 = vadd.f32 0.0, %v3115
    %v3117 = vpop.f32.mrb[0].mxu0
    %3118 = vmatprep.mubr.f32.mxu0 0.0
    %3119 = vmatmul.mubr.f32.gmra.mrb[0].mxu0 %v1481
    %v3120 = vpop.f32.mrb[0].mxu0
    %v3121 = vadd.f32 0.0, %v3120
    %v3122 = vpop.f32.mrb[0].mxu0
    %3123 = vmatprep.mubr.f32.mxu0 0.0
    %3124 = vmatmul.mubr.f32.gmra.mrb[0].mxu0 %v1484
    %v3125 = vpop.f32.mrb[0].mxu0
    %v3126 = vadd.f32 0.0, %v3125
    %v3127 = vpop.f32.mrb[0].mxu0
    %3128 = vmatprep.mubr.f32.mxu0 0.0
    %3129 = vmatmul.mubr.f32.gmra.mrb[0].mxu0 %v1487
    %v3130 = vpop.f32.mrb[0].mxu0
    %v3131 = vadd.f32 0.0, %v3130
    %v3132 = vpop.f32.mrb[0].mxu0
    %3133 = vdwg.mxu0
    %v3134 = vadd.f32 %v3045, %v3116
    %v3135 = vadd.f32 %v3046, %v3121
    %v3136 = vadd.f32 %v3047, %v3126
    %v3137 = vadd.f32 %v3048, %v3131
    %3138 = vmatprep.subr.mxu0 0.0
    %3139 = vmatpush1.msra.mxu0 %v1933
    %3140 = vmatprep.subr.mxu0 0.0
    %3141 = vmatpush1.msra.mxu0 %v1934
    %3142 = vmatprep.subr.mxu0 0.0
    %3143 = vmatpush1.msra.mxu0 %v1935
    %3144 = vmatprep.subr.mxu0 0.0
    %3145 = vmatpush1.msra.mxu0 %v1936
    %3146 = vmatprep.subr.mxu0 0.0
    %3147 = vmatpush1.msra.mxu0 %v1937
    %3148 = vmatprep.subr.mxu0 0.0
    %3149 = vmatpush1.msra.mxu0 %v1938
    %3150 = vmatprep.subr.mxu0 0.0
    %3151 = vmatpush1.msra.mxu0 %v1939
    %3152 = vmatprep.subr.mxu0 0.0
    %3153 = vmatpush1.msra.mxu0 %v1940
    %3154 = vmatprep.subr.mxu0 0.0
    %3155 = vmatpush1.msra.mxu0 %v1941
    %3156 = vmatprep.subr.mxu0 0.0
    %3157 = vmatpush1.msra.mxu0 %v1942
    %3158 = vmatprep.subr.mxu0 0.0
    %3159 = vmatpush1.msra.mxu0 %v1943
    %3160 = vmatprep.subr.mxu0 0.0
    %3161 = vmatpush1.msra.mxu0 %v1944
    %3162 = vmatprep.subr.mxu0 0.0
    %3163 = vmatpush1.msra.mxu0 %v1945
    %3164 = vmatprep.subr.mxu0 0.0
    %3165 = vmatpush1.msra.mxu0 %v1946
    %3166 = vmatprep.subr.mxu0 0.0
    %3167 = vmatpush1.msra.mxu0 %v1947
    %3168 = vmatprep.subr.mxu0 0.0
    %3169 = vmatpush1.msra.mxu0 %v1948
    %3170 = vmatprep.subr.mxu0 0.0
    %3171 = vmatpush1.msra.mxu0 0.0
    %3172 = vmatprep.subr.mxu0 0.0
    %3173 = vmatpush1.msra.mxu0 0.0
    %3174 = vmatprep.subr.mxu0 0.0
    %3175 = vmatpush1.msra.mxu0 0.0
    %3176 = vmatprep.subr.mxu0 0.0
    %3177 = vmatpush1.msra.mxu0 0.0
    %3178 = vmatprep.subr.mxu0 0.0
    %3179 = vmatpush1.msra.mxu0 0.0
    %3180 = vmatprep.subr.mxu0 0.0
    %3181 = vmatpush1.msra.mxu0 0.0
    %3182 = vmatprep.subr.mxu0 0.0
    %3183 = vmatpush1.msra.mxu0 0.0
    %3184 = vmatprep.subr.mxu0 0.0
    %3185 = vmatpush1.msra.mxu0 0.0
    %3186 = vmatprep.subr.mxu0 0.0
    %3187 = vmatpush1.msra.mxu0 0.0
    %3188 = vmatprep.subr.mxu0 0.0
    %3189 = vmatpush1.msra.mxu0 0.0
    %3190 = vmatprep.subr.mxu0 0.0
    %3191 = vmatpush1.msra.mxu0 0.0
    %3192 = vmatprep.subr.mxu0 0.0
    %3193 = vmatpush1.msra.mxu0 0.0
    %3194 = vmatprep.subr.mxu0 0.0
    %3195 = vmatpush1.msra.mxu0 0.0
    %3196 = vmatprep.subr.mxu0 0.0
    %3197 = vmatpush1.msra.mxu0 0.0
    %3198 = vmatprep.subr.mxu0 0.0
    %3199 = vmatpush1.msra.mxu0 0.0
    %3200 = vmatprep.subr.mxu0 0.0
    %3201 = vmatpush1.msra.mxu0 0.0
    %3202 = vmatprep.mubr.f32.mxu0 0.0
    %3203 = vmatmul.mubr.f32.gmra.mrb[0].mxu0 %v1928
    %v3204 = vpop.f32.mrb[0].mxu0
    %v3205 = vadd.f32 %v3134, %v3204
    %v3206 = vpop.f32.mrb[0].mxu0
    %3207 = vmatprep.mubr.f32.mxu0 0.0
    %3208 = vmatmul.mubr.f32.gmra.mrb[0].mxu0 %v1929
    %v3209 = vpop.f32.mrb[0].mxu0
    %v3210 = vadd.f32 %v3135, %v3209
    %v3211 = vpop.f32.mrb[0].mxu0
    %3212 = vmatprep.mubr.f32.mxu0 0.0
    %3213 = vmatmul.mubr.f32.gmra.mrb[0].mxu0 %v1930
    %v3214 = vpop.f32.mrb[0].mxu0
    %v3215 = vadd.f32 %v3136, %v3214
    %v3216 = vpop.f32.mrb[0].mxu0
    %3217 = vmatprep.mubr.f32.mxu0 0.0
    %3218 = vmatmul.mubr.f32.gmra.mrb[0].mxu0 %v1931
    %v3219 = vpop.f32.mrb[0].mxu0
    %v3220 = vadd.f32 %v3137, %v3219
    %v3221 = vpop.f32.mrb[0].mxu0
    %3222 = vdwg.mxu0
    %s3223 = scalar_lea.vmem [#allocation9], 256
    %v3224 = vld [vmem:[%s3223] sm:$0xff]
    %v3225 = vld [vmem:[%s3223 + $0x8] sm:$0xff]
    %v3226 = vld [vmem:[%s3223 + $0x10] sm:$0xff]
    %v3227 = vld [vmem:[%s3223 + $0x18] sm:$0xff]
    %v3228 = vld [vmem:[%s3223 + $0x20] sm:$0xff]
    %v3229 = vld [vmem:[%s3223 + $0x28] sm:$0xff]
    %v3230 = vld [vmem:[%s3223 + $0x30] sm:$0xff]
    %v3231 = vld [vmem:[%s3223 + $0x38] sm:$0xff]
    %v3232 = vld [vmem:[%s3223 + $0x40] sm:$0xff]
    %v3233 = vld [vmem:[%s3223 + $0x48] sm:$0xff]
    %v3234 = vld [vmem:[%s3223 + $0x50] sm:$0xff]
    %v3235 = vld [vmem:[%s3223 + $0x58] sm:$0xff]
    %v3236 = vld [vmem:[%s3223 + $0x60] sm:$0xff]
    %v3237 = vld [vmem:[%s3223 + $0x68] sm:$0xff]
    %v3238 = vld [vmem:[%s3223 + $0x70] sm:$0xff]
    %v3239 = vld [vmem:[%s3223 + $0x78] sm:$0xff]
    %v3240 = vld [vmem:[%s3223 + $0x80] sm:$0xff]
    %v3241 = vld [vmem:[%s3223 + $0x88] sm:$0xff]
    %v3242 = vld [vmem:[%s3223 + $0x90] sm:$0xff]
    %v3243 = vld [vmem:[%s3223 + $0x98] sm:$0xff]
    %v3244 = vld [vmem:[%s3223 + $0xa0] sm:$0xff]
    %v3245 = vld [vmem:[%s3223 + $0xa8] sm:$0xff]
    %v3246 = vld [vmem:[%s3223 + $0xb0] sm:$0xff]
    %v3247 = vld [vmem:[%s3223 + $0xb8] sm:$0xff]
    %v3248 = vld [vmem:[%s3223 + $0xc0] sm:$0xff]
    %v3249 = vld [vmem:[%s3223 + $0xc8] sm:$0xff]
    %v3250 = vld [vmem:[%s3223 + $0xd0] sm:$0xff]
    %v3251 = vld [vmem:[%s3223 + $0xd8] sm:$0xff]
    %v3252 = vld [vmem:[%s3223 + $0xe0] sm:$0xff]
    %v3253 = vld [vmem:[%s3223 + $0xe8] sm:$0xff]
    %v3254 = vld [vmem:[%s3223 + $0xf0] sm:$0xff]
    %v3255 = vld [vmem:[%s3223 + $0xf8] sm:$0xff]
    %s3256 = scalar_lea.vmem %s7, 2
    %v3257 = vld [vmem:[%s3256] sm:$0x3]
    %v3259 = vlaneseq
    %v3260 = vshrl.u32 %v3259, 7
    %v3261 = vsub.s32 0, %v3260
    %v3262 = vrot.slane %v3257, %v3261
    %v3263 = vlaneseq
    %v3264 = vshrl.u32 %v3263, 7
    %v3265 = vsub.s32 1, %v3264
    %v3266 = vrot.slane %v3257, %v3265
    %3269 = vmatprep.subr.mxu0 %v3225
    %3270 = vmatpush1.msra.mxu0 %v3224
    %3271 = vmatprep.subr.mxu0 %v3227
    %3272 = vmatpush1.msra.mxu0 %v3226
    %3273 = vmatprep.subr.mxu0 %v3229
    %3274 = vmatpush1.msra.mxu0 %v3228
    %3275 = vmatprep.subr.mxu0 %v3231
    %3276 = vmatpush1.msra.mxu0 %v3230
    %3277 = vmatprep.subr.mxu0 %v3233
    %3278 = vmatpush1.msra.mxu0 %v3232
    %3279 = vmatprep.subr.mxu0 %v3235
    %3280 = vmatpush1.msra.mxu0 %v3234
    %3281 = vmatprep.subr.mxu0 %v3237
    %3282 = vmatpush1.msra.mxu0 %v3236
    %3283 = vmatprep.subr.mxu0 %v3239
    %3284 = vmatpush1.msra.mxu0 %v3238
    %3285 = vmatprep.subr.mxu0 %v3241
    %3286 = vmatpush1.msra.mxu0 %v3240
    %3287 = vmatprep.subr.mxu0 %v3243
    %3288 = vmatpush1.msra.mxu0 %v3242
    %3289 = vmatprep.subr.mxu0 %v3245
    %3290 = vmatpush1.msra.mxu0 %v3244
    %3291 = vmatprep.subr.mxu0 %v3247
    %3292 = vmatpush1.msra.mxu0 %v3246
    %3293 = vmatprep.subr.mxu0 %v3249
    %3294 = vmatpush1.msra.mxu0 %v3248
    %3295 = vmatprep.subr.mxu0 %v3251
    %3296 = vmatpush1.msra.mxu0 %v3250
    %3297 = vmatprep.subr.mxu0 %v3253
    %3298 = vmatpush1.msra.mxu0 %v3252
    %3299 = vmatprep.subr.mxu0 %v3255
    %3300 = vmatpush1.msra.mxu0 %v3254
    %3301 = vmatprep.subr.mxu0 0.0
    %3302 = vmatpush1.msra.mxu0 0.0
    %3303 = vmatprep.subr.mxu0 0.0
    %3304 = vmatpush1.msra.mxu0 0.0
    %3305 = vmatprep.subr.mxu0 0.0
    %3306 = vmatpush1.msra.mxu0 0.0
    %3307 = vmatprep.subr.mxu0 0.0
    %3308 = vmatpush1.msra.mxu0 0.0
    %3309 = vmatprep.subr.mxu0 0.0
    %3310 = vmatpush1.msra.mxu0 0.0
    %3311 = vmatprep.subr.mxu0 0.0
    %3312 = vmatpush1.msra.mxu0 0.0
    %3313 = vmatprep.subr.mxu0 0.0
    %3314 = vmatpush1.msra.mxu0 0.0
    %3315 = vmatprep.subr.mxu0 0.0
    %3316 = vmatpush1.msra.mxu0 0.0
    %3317 = vmatprep.subr.mxu0 0.0
    %3318 = vmatpush1.msra.mxu0 0.0
    %3319 = vmatprep.subr.mxu0 0.0
    %3320 = vmatpush1.msra.mxu0 0.0
    %3321 = vmatprep.subr.mxu0 0.0
    %3322 = vmatpush1.msra.mxu0 0.0
    %3323 = vmatprep.subr.mxu0 0.0
    %3324 = vmatpush1.msra.mxu0 0.0
    %3325 = vmatprep.subr.mxu0 0.0
    %3326 = vmatpush1.msra.mxu0 0.0
    %3327 = vmatprep.subr.mxu0 0.0
    %3328 = vmatpush1.msra.mxu0 0.0
    %3329 = vmatprep.subr.mxu0 0.0
    %3330 = vmatpush1.msra.mxu0 0.0
    %3331 = vmatprep.subr.mxu0 0.0
    %3332 = vmatpush1.msra.mxu0 0.0
    %3333 = vmatprep.mubr.f32.mxu0 0.0
    %3334 = vmatmul.mubr.f32.gmra.mrb[0].mxu0 %v3205
    %v3335 = vpop.f32.mrb[0].mxu0
    %v3336 = vadd.f32 %v3262, %v3335
    %v3337 = vpop.f32.mrb[0].mxu0
    %v3338 = vadd.f32 %v3266, %v3337
    %3339 = vmatprep.mubr.f32.mxu0 0.0
    %3340 = vmatmul.mubr.f32.gmra.mrb[0].mxu0 %v3210
    %v3341 = vpop.f32.mrb[0].mxu0
    %v3342 = vadd.f32 %v3262, %v3341
    %v3343 = vpop.f32.mrb[0].mxu0
    %v3344 = vadd.f32 %v3266, %v3343
    %3345 = vmatprep.mubr.f32.mxu0 0.0
    %3346 = vmatmul.mubr.f32.gmra.mrb[0].mxu0 %v3215
    %v3347 = vpop.f32.mrb[0].mxu0
    %v3348 = vadd.f32 %v3262, %v3347
    %v3349 = vpop.f32.mrb[0].mxu0
    %v3350 = vadd.f32 %v3266, %v3349
    %3351 = vmatprep.mubr.f32.mxu0 0.0
    %3352 = vmatmul.mubr.f32.gmra.mrb[0].mxu0 %v3220
    %v3353 = vpop.f32.mrb[0].mxu0
    %v3354 = vadd.f32 %v3262, %v3353
    %v3355 = vpop.f32.mrb[0].mxu0
    %v3356 = vadd.f32 %v3266, %v3355
    %3357 = vdwg.mxu0
    %v3358 = vmax.f32 %v3336, 0.0
    %v3359 = vmax.f32 %v3338, 0.0
    %v3360 = vmax.f32 %v3342, 0.0
    %v3361 = vmax.f32 %v3344, 0.0
    %v3362 = vmax.f32 %v3348, 0.0
    %v3363 = vmax.f32 %v3350, 0.0
    %v3364 = vmax.f32 %v3354, 0.0
    %v3365 = vmax.f32 %v3356, 0.0
    %s3366 = scalar_lea.vmem [#allocation10], 256
    %v3367 = vld [vmem:[%s3366] sm:$0xff]
    %v3368 = vld [vmem:[%s3366 + $0x8] sm:$0xff]
    %v3369 = vld [vmem:[%s3366 + $0x10] sm:$0xff]
    %v3370 = vld [vmem:[%s3366 + $0x18] sm:$0xff]
    %v3371 = vld [vmem:[%s3366 + $0x20] sm:$0xff]
    %v3372 = vld [vmem:[%s3366 + $0x28] sm:$0xff]
    %v3373 = vld [vmem:[%s3366 + $0x30] sm:$0xff]
    %v3374 = vld [vmem:[%s3366 + $0x38] sm:$0xff]
    %v3375 = vld [vmem:[%s3366 + $0x40] sm:$0xff]
    %v3376 = vld [vmem:[%s3366 + $0x48] sm:$0xff]
    %v3377 = vld [vmem:[%s3366 + $0x50] sm:$0xff]
    %v3378 = vld [vmem:[%s3366 + $0x58] sm:$0xff]
    %v3379 = vld [vmem:[%s3366 + $0x60] sm:$0xff]
    %v3380 = vld [vmem:[%s3366 + $0x68] sm:$0xff]
    %v3381 = vld [vmem:[%s3366 + $0x70] sm:$0xff]
    %v3382 = vld [vmem:[%s3366 + $0x78] sm:$0xff]
    %v3383 = vld [vmem:[%s3366 + $0x80] sm:$0xff]
    %v3384 = vld [vmem:[%s3366 + $0x88] sm:$0xff]
    %v3385 = vld [vmem:[%s3366 + $0x90] sm:$0xff]
    %v3386 = vld [vmem:[%s3366 + $0x98] sm:$0xff]
    %v3387 = vld [vmem:[%s3366 + $0xa0] sm:$0xff]
    %v3388 = vld [vmem:[%s3366 + $0xa8] sm:$0xff]
    %v3389 = vld [vmem:[%s3366 + $0xb0] sm:$0xff]
    %v3390 = vld [vmem:[%s3366 + $0xb8] sm:$0xff]
    %v3391 = vld [vmem:[%s3366 + $0xc0] sm:$0xff]
    %v3392 = vld [vmem:[%s3366 + $0xc8] sm:$0xff]
    %v3393 = vld [vmem:[%s3366 + $0xd0] sm:$0xff]
    %v3394 = vld [vmem:[%s3366 + $0xd8] sm:$0xff]
    %v3395 = vld [vmem:[%s3366 + $0xe0] sm:$0xff]
    %v3396 = vld [vmem:[%s3366 + $0xe8] sm:$0xff]
    %v3397 = vld [vmem:[%s3366 + $0xf0] sm:$0xff]
    %v3398 = vld [vmem:[%s3366 + $0xf8] sm:$0xff]
    %s3399 = scalar_lea.vmem %s9, 1
    %v3400 = vld [vmem:[%s3399] sm:$0x1]
    %v3402 = vlaneseq
    %v3403 = vshrl.u32 %v3402, 7
    %v3404 = vsub.s32 0, %v3403
    %v3405 = vrot.slane %v3400, %v3404
    %3407 = vmatprep.subr.mxu0 0.0
    %3408 = vmatpush1.msra.mxu0 %v3367
    %3409 = vmatprep.subr.mxu0 0.0
    %3410 = vmatpush1.msra.mxu0 %v3368
    %3411 = vmatprep.subr.mxu0 0.0
    %3412 = vmatpush1.msra.mxu0 %v3369
    %3413 = vmatprep.subr.mxu0 0.0
    %3414 = vmatpush1.msra.mxu0 %v3370
    %3415 = vmatprep.subr.mxu0 0.0
    %3416 = vmatpush1.msra.mxu0 %v3371
    %3417 = vmatprep.subr.mxu0 0.0
    %3418 = vmatpush1.msra.mxu0 %v3372
    %3419 = vmatprep.subr.mxu0 0.0
    %3420 = vmatpush1.msra.mxu0 %v3373
    %3421 = vmatprep.subr.mxu0 0.0
    %3422 = vmatpush1.msra.mxu0 %v3374
    %3423 = vmatprep.subr.mxu0 0.0
    %3424 = vmatpush1.msra.mxu0 %v3375
    %3425 = vmatprep.subr.mxu0 0.0
    %3426 = vmatpush1.msra.mxu0 %v3376
    %3427 = vmatprep.subr.mxu0 0.0
    %3428 = vmatpush1.msra.mxu0 %v3377
    %3429 = vmatprep.subr.mxu0 0.0
    %3430 = vmatpush1.msra.mxu0 %v3378
    %3431 = vmatprep.subr.mxu0 0.0
    %3432 = vmatpush1.msra.mxu0 %v3379
    %3433 = vmatprep.subr.mxu0 0.0
    %3434 = vmatpush1.msra.mxu0 %v3380
    %3435 = vmatprep.subr.mxu0 0.0
    %3436 = vmatpush1.msra.mxu0 %v3381
    %3437 = vmatprep.subr.mxu0 0.0
    %3438 = vmatpush1.msra.mxu0 %v3382
    %3439 = vmatprep.subr.mxu0 0.0
    %3440 = vmatpush1.msra.mxu0 %v3383
    %3441 = vmatprep.subr.mxu0 0.0
    %3442 = vmatpush1.msra.mxu0 %v3384
    %3443 = vmatprep.subr.mxu0 0.0
    %3444 = vmatpush1.msra.mxu0 %v3385
    %3445 = vmatprep.subr.mxu0 0.0
    %3446 = vmatpush1.msra.mxu0 %v3386
    %3447 = vmatprep.subr.mxu0 0.0
    %3448 = vmatpush1.msra.mxu0 %v3387
    %3449 = vmatprep.subr.mxu0 0.0
    %3450 = vmatpush1.msra.mxu0 %v3388
    %3451 = vmatprep.subr.mxu0 0.0
    %3452 = vmatpush1.msra.mxu0 %v3389
    %3453 = vmatprep.subr.mxu0 0.0
    %3454 = vmatpush1.msra.mxu0 %v3390
    %3455 = vmatprep.subr.mxu0 0.0
    %3456 = vmatpush1.msra.mxu0 %v3391
    %3457 = vmatprep.subr.mxu0 0.0
    %3458 = vmatpush1.msra.mxu0 %v3392
    %3459 = vmatprep.subr.mxu0 0.0
    %3460 = vmatpush1.msra.mxu0 %v3393
    %3461 = vmatprep.subr.mxu0 0.0
    %3462 = vmatpush1.msra.mxu0 %v3394
    %3463 = vmatprep.subr.mxu0 0.0
    %3464 = vmatpush1.msra.mxu0 %v3395
    %3465 = vmatprep.subr.mxu0 0.0
    %3466 = vmatpush1.msra.mxu0 %v3396
    %3467 = vmatprep.subr.mxu0 0.0
    %3468 = vmatpush1.msra.mxu0 %v3397
    %3469 = vmatprep.subr.mxu0 0.0
    %3470 = vmatpush1.msra.mxu0 %v3398
    %3471 = vmatprep.mubr.f32.mxu0 %v3359
    %3472 = vmatmul.mubr.f32.gmra.mrb[0].mxu0 %v3358
    %v3473 = vpop.f32.mrb[0].mxu0
    %v3474 = vadd.f32 %v3405, %v3473
    %v3475 = vpop.f32.mrb[0].mxu0
    %3476 = vmatprep.mubr.f32.mxu0 %v3361
    %3477 = vmatmul.mubr.f32.gmra.mrb[0].mxu0 %v3360
    %v3478 = vpop.f32.mrb[0].mxu0
    %v3479 = vadd.f32 %v3405, %v3478
    %v3480 = vpop.f32.mrb[0].mxu0
    %3481 = vmatprep.mubr.f32.mxu0 %v3363
    %3482 = vmatmul.mubr.f32.gmra.mrb[0].mxu0 %v3362
    %v3483 = vpop.f32.mrb[0].mxu0
    %v3484 = vadd.f32 %v3405, %v3483
    %v3485 = vpop.f32.mrb[0].mxu0
    %3486 = vmatprep.mubr.f32.mxu0 %v3365
    %3487 = vmatmul.mubr.f32.gmra.mrb[0].mxu0 %v3364
    %v3488 = vpop.f32.mrb[0].mxu0
    %v3489 = vadd.f32 %v3405, %v3488
    %v3490 = vpop.f32.mrb[0].mxu0
    %3491 = vdwg.mxu0
    %v3492 = vld [vmem:[%s10] sm:$0xff]
    %v3493 = vld [vmem:[%s10 + $0x8] sm:$0xff]
    %v3494 = vld [vmem:[%s10 + $0x10] sm:$0xff]
    %v3495 = vld [vmem:[%s10 + $0x18] sm:$0xff]
    %v3496 = vld [vmem:[%s10 + $0x20] sm:$0xff]
    %v3497 = vld [vmem:[%s10 + $0x28] sm:$0xff]
    %v3498 = vld [vmem:[%s10 + $0x30] sm:$0xff]
    %v3499 = vld [vmem:[%s10 + $0x38] sm:$0xff]
    %v3500 = vld [vmem:[%s10 + $0x40] sm:$0xff]
    %v3501 = vld [vmem:[%s10 + $0x48] sm:$0xff]
    %v3502 = vld [vmem:[%s10 + $0x50] sm:$0xff]
    %v3503 = vld [vmem:[%s10 + $0x58] sm:$0xff]
    %v3504 = vld [vmem:[%s10 + $0x60] sm:$0xff]
    %v3505 = vld [vmem:[%s10 + $0x68] sm:$0xff]
    %v3506 = vld [vmem:[%s10 + $0x70] sm:$0xff]
    %v3507 = vld [vmem:[%s10 + $0x78] sm:$0xff]
    %v3508 = vld [vmem:[%s10 + $0x80] sm:$0xff]
    %v3509 = vld [vmem:[%s10 + $0x88] sm:$0xff]
    %v3510 = vld [vmem:[%s10 + $0x90] sm:$0xff]
    %v3511 = vld [vmem:[%s10 + $0x98] sm:$0xff]
    %v3512 = vld [vmem:[%s10 + $0xa0] sm:$0xff]
    %v3513 = vld [vmem:[%s10 + $0xa8] sm:$0xff]
    %v3514 = vld [vmem:[%s10 + $0xb0] sm:$0xff]
    %v3515 = vld [vmem:[%s10 + $0xb8] sm:$0xff]
    %v3516 = vld [vmem:[%s10 + $0xc0] sm:$0xff]
    %v3517 = vld [vmem:[%s10 + $0xc8] sm:$0xff]
    %v3518 = vld [vmem:[%s10 + $0xd0] sm:$0xff]
    %v3519 = vld [vmem:[%s10 + $0xd8] sm:$0xff]
    %v3520 = vld [vmem:[%s10 + $0xe0] sm:$0xff]
    %v3521 = vld [vmem:[%s10 + $0xe8] sm:$0xff]
    %v3522 = vld [vmem:[%s10 + $0xf0] sm:$0xff]
    %v3523 = vld [vmem:[%s10 + $0xf8] sm:$0xff]
    %v3524 = vld [vmem:[%s10 + $0x100] sm:$0xff]
    %v3525 = vld [vmem:[%s10 + $0x108] sm:$0xff]
    %v3526 = vld [vmem:[%s10 + $0x110] sm:$0xff]
    %v3527 = vld [vmem:[%s10 + $0x118] sm:$0xff]
    %v3528 = vld [vmem:[%s10 + $0x120] sm:$0xff]
    %v3529 = vld [vmem:[%s10 + $0x128] sm:$0xff]
    %v3530 = vld [vmem:[%s10 + $0x130] sm:$0xff]
    %v3531 = vld [vmem:[%s10 + $0x138] sm:$0xff]
    %v3532 = vld [vmem:[%s10 + $0x140] sm:$0xff]
    %v3533 = vld [vmem:[%s10 + $0x148] sm:$0xff]
    %v3534 = vld [vmem:[%s10 + $0x150] sm:$0xff]
    %v3535 = vld [vmem:[%s10 + $0x158] sm:$0xff]
    %v3536 = vld [vmem:[%s10 + $0x160] sm:$0xff]
    %v3537 = vld [vmem:[%s10 + $0x168] sm:$0xff]
    %v3538 = vld [vmem:[%s10 + $0x170] sm:$0xff]
    %v3539 = vld [vmem:[%s10 + $0x178] sm:$0xff]
    %v3540 = vld [vmem:[%s10 + $0x180] sm:$0xff]
    %v3541 = vld [vmem:[%s10 + $0x188] sm:$0xff]
    %v3542 = vld [vmem:[%s10 + $0x190] sm:$0xff]
    %v3543 = vld [vmem:[%s10 + $0x198] sm:$0xff]
    %v3544 = vld [vmem:[%s10 + $0x1a0] sm:$0xff]
    %v3545 = vld [vmem:[%s10 + $0x1a8] sm:$0xff]
    %v3546 = vld [vmem:[%s10 + $0x1b0] sm:$0xff]
    %v3547 = vld [vmem:[%s10 + $0x1b8] sm:$0xff]
    %v3548 = vld [vmem:[%s10 + $0x1c0] sm:$0xff]
    %v3549 = vld [vmem:[%s10 + $0x1c8] sm:$0xff]
    %v3550 = vld [vmem:[%s10 + $0x1d0] sm:$0xff]
    %v3551 = vld [vmem:[%s10 + $0x1d8] sm:$0xff]
    %v3552 = vld [vmem:[%s10 + $0x1e0] sm:$0xff]
    %v3553 = vld [vmem:[%s10 + $0x1e8] sm:$0xff]
    %v3554 = vld [vmem:[%s10 + $0x1f0] sm:$0xff]
    %v3555 = vld [vmem:[%s10 + $0x1f8] sm:$0xff]
    %v3556 = vld [vmem:[%s10 + $0x200] sm:$0xff]
    %v3557 = vld [vmem:[%s10 + $0x208] sm:$0xff]
    %v3558 = vld [vmem:[%s10 + $0x210] sm:$0xff]
    %v3559 = vld [vmem:[%s10 + $0x218] sm:$0xff]
    %v3560 = vld [vmem:[%s10 + $0x220] sm:$0xff]
    %v3561 = vld [vmem:[%s10 + $0x228] sm:$0xff]
    %v3562 = vld [vmem:[%s10 + $0x230] sm:$0xff]
    %v3563 = vld [vmem:[%s10 + $0x238] sm:$0xff]
    %v3564 = vld [vmem:[%s10 + $0x240] sm:$0xff]
    %v3565 = vld [vmem:[%s10 + $0x248] sm:$0xff]
    %v3566 = vld [vmem:[%s10 + $0x250] sm:$0xff]
    %v3567 = vld [vmem:[%s10 + $0x258] sm:$0xff]
    %v3568 = vld [vmem:[%s10 + $0x260] sm:$0xff]
    %v3569 = vld [vmem:[%s10 + $0x268] sm:$0xff]
    %v3570 = vld [vmem:[%s10 + $0x270] sm:$0xff]
    %v3571 = vld [vmem:[%s10 + $0x278] sm:$0xff]
    %v3572 = vld [vmem:[%s10 + $0x280] sm:$0xff]
    %v3573 = vld [vmem:[%s10 + $0x288] sm:$0xff]
    %v3574 = vld [vmem:[%s10 + $0x290] sm:$0xff]
    %v3575 = vld [vmem:[%s10 + $0x298] sm:$0xff]
    %v3576 = vld [vmem:[%s10 + $0x2a0] sm:$0xff]
    %v3577 = vld [vmem:[%s10 + $0x2a8] sm:$0xff]
    %v3578 = vld [vmem:[%s10 + $0x2b0] sm:$0xff]
    %v3579 = vld [vmem:[%s10 + $0x2b8] sm:$0xff]
    %v3580 = vld [vmem:[%s10 + $0x2c0] sm:$0xff]
    %v3581 = vld [vmem:[%s10 + $0x2c8] sm:$0xff]
    %v3582 = vld [vmem:[%s10 + $0x2d0] sm:$0xff]
    %v3583 = vld [vmem:[%s10 + $0x2d8] sm:$0xff]
    %v3584 = vld [vmem:[%s10 + $0x2e0] sm:$0xff]
    %v3585 = vld [vmem:[%s10 + $0x2e8] sm:$0xff]
    %v3586 = vld [vmem:[%s10 + $0x2f0] sm:$0xff]
    %v3587 = vld [vmem:[%s10 + $0x2f8] sm:$0xff]
    %v3588 = vld [vmem:[%s10 + $0x300] sm:$0xff]
    %v3589 = vld [vmem:[%s10 + $0x308] sm:$0xff]
    %v3590 = vld [vmem:[%s10 + $0x310] sm:$0xff]
    %v3591 = vld [vmem:[%s10 + $0x318] sm:$0xff]
    %v3592 = vld [vmem:[%s10 + $0x320] sm:$0xff]
    %v3593 = vld [vmem:[%s10 + $0x328] sm:$0xff]
    %v3594 = vld [vmem:[%s10 + $0x330] sm:$0xff]
    %v3595 = vld [vmem:[%s10 + $0x338] sm:$0xff]
    %v3596 = vld [vmem:[%s10 + $0x340] sm:$0xff]
    %v3597 = vld [vmem:[%s10 + $0x348] sm:$0xff]
    %v3598 = vld [vmem:[%s10 + $0x350] sm:$0xff]
    %v3599 = vld [vmem:[%s10 + $0x358] sm:$0xff]
    %v3600 = vld [vmem:[%s10 + $0x360] sm:$0xff]
    %v3601 = vld [vmem:[%s10 + $0x368] sm:$0xff]
    %v3602 = vld [vmem:[%s10 + $0x370] sm:$0xff]
    %v3603 = vld [vmem:[%s10 + $0x378] sm:$0xff]
    %v3604 = vld [vmem:[%s10 + $0x380] sm:$0xff]
    %v3605 = vld [vmem:[%s10 + $0x388] sm:$0xff]
    %v3606 = vld [vmem:[%s10 + $0x390] sm:$0xff]
    %v3607 = vld [vmem:[%s10 + $0x398] sm:$0xff]
    %v3608 = vld [vmem:[%s10 + $0x3a0] sm:$0xff]
    %v3609 = vld [vmem:[%s10 + $0x3a8] sm:$0xff]
    %v3610 = vld [vmem:[%s10 + $0x3b0] sm:$0xff]
    %v3611 = vld [vmem:[%s10 + $0x3b8] sm:$0xff]
    %v3612 = vld [vmem:[%s10 + $0x3c0] sm:$0xff]
    %v3613 = vld [vmem:[%s10 + $0x3c8] sm:$0xff]
    %v3614 = vld [vmem:[%s10 + $0x3d0] sm:$0xff]
    %v3615 = vld [vmem:[%s10 + $0x3d8] sm:$0xff]
    %v3616 = vld [vmem:[%s10 + $0x3e0] sm:$0xff]
    %v3617 = vld [vmem:[%s10 + $0x3e8] sm:$0xff]
    %v3618 = vld [vmem:[%s10 + $0x3f0] sm:$0xff]
    %v3619 = vld [vmem:[%s10 + $0x3f8] sm:$0xff]
    %v3620 = vld [vmem:[%s10 + $0x400] sm:$0xff]
    %v3621 = vld [vmem:[%s10 + $0x408] sm:$0xff]
    %v3622 = vld [vmem:[%s10 + $0x410] sm:$0xff]
    %v3623 = vld [vmem:[%s10 + $0x418] sm:$0xff]
    %v3624 = vld [vmem:[%s10 + $0x420] sm:$0xff]
    %v3625 = vld [vmem:[%s10 + $0x428] sm:$0xff]
    %v3626 = vld [vmem:[%s10 + $0x430] sm:$0xff]
    %v3627 = vld [vmem:[%s10 + $0x438] sm:$0xff]
    %v3628 = vld [vmem:[%s10 + $0x440] sm:$0xff]
    %v3629 = vld [vmem:[%s10 + $0x448] sm:$0xff]
    %v3630 = vld [vmem:[%s10 + $0x450] sm:$0xff]
    %v3631 = vld [vmem:[%s10 + $0x458] sm:$0xff]
    %v3632 = vld [vmem:[%s10 + $0x460] sm:$0xff]
    %v3633 = vld [vmem:[%s10 + $0x468] sm:$0xff]
    %v3634 = vld [vmem:[%s10 + $0x470] sm:$0xff]
    %v3635 = vld [vmem:[%s10 + $0x478] sm:$0xff]
    %v3636 = vld [vmem:[%s10 + $0x480] sm:$0xff]
    %v3637 = vld [vmem:[%s10 + $0x488] sm:$0xff]
    %v3638 = vld [vmem:[%s10 + $0x490] sm:$0xff]
    %v3639 = vld [vmem:[%s10 + $0x498] sm:$0xff]
    %v3640 = vld [vmem:[%s10 + $0x4a0] sm:$0xff]
    %v3641 = vld [vmem:[%s10 + $0x4a8] sm:$0xff]
    %v3642 = vld [vmem:[%s10 + $0x4b0] sm:$0xff]
    %v3643 = vld [vmem:[%s10 + $0x4b8] sm:$0xff]
    %v3644 = vld [vmem:[%s10 + $0x4c0] sm:$0xff]
    %v3645 = vld [vmem:[%s10 + $0x4c8] sm:$0xff]
    %v3646 = vld [vmem:[%s10 + $0x4d0] sm:$0xff]
    %v3647 = vld [vmem:[%s10 + $0x4d8] sm:$0xff]
    %v3648 = vld [vmem:[%s10 + $0x4e0] sm:$0xff]
    %v3649 = vld [vmem:[%s10 + $0x4e8] sm:$0xff]
    %v3650 = vld [vmem:[%s10 + $0x4f0] sm:$0xff]
    %v3651 = vld [vmem:[%s10 + $0x4f8] sm:$0xff]
    %v3652 = vld [vmem:[%s10 + $0x500] sm:$0xff]
    %v3653 = vld [vmem:[%s10 + $0x508] sm:$0xff]
    %v3654 = vld [vmem:[%s10 + $0x510] sm:$0xff]
    %v3655 = vld [vmem:[%s10 + $0x518] sm:$0xff]
    %v3656 = vld [vmem:[%s10 + $0x520] sm:$0xff]
    %v3657 = vld [vmem:[%s10 + $0x528] sm:$0xff]
    %v3658 = vld [vmem:[%s10 + $0x530] sm:$0xff]
    %v3659 = vld [vmem:[%s10 + $0x538] sm:$0xff]
    %v3660 = vld [vmem:[%s10 + $0x540] sm:$0xff]
    %v3661 = vld [vmem:[%s10 + $0x548] sm:$0xff]
    %v3662 = vld [vmem:[%s10 + $0x550] sm:$0xff]
    %v3663 = vld [vmem:[%s10 + $0x558] sm:$0xff]
    %v3664 = vld [vmem:[%s10 + $0x560] sm:$0xff]
    %v3665 = vld [vmem:[%s10 + $0x568] sm:$0xff]
    %v3666 = vld [vmem:[%s10 + $0x570] sm:$0xff]
    %v3667 = vld [vmem:[%s10 + $0x578] sm:$0xff]
    %v3668 = vld [vmem:[%s10 + $0x580] sm:$0xff]
    %v3669 = vld [vmem:[%s10 + $0x588] sm:$0xff]
    %v3670 = vld [vmem:[%s10 + $0x590] sm:$0xff]
    %v3671 = vld [vmem:[%s10 + $0x598] sm:$0xff]
    %v3672 = vld [vmem:[%s10 + $0x5a0] sm:$0xff]
    %v3673 = vld [vmem:[%s10 + $0x5a8] sm:$0xff]
    %v3674 = vld [vmem:[%s10 + $0x5b0] sm:$0xff]
    %v3675 = vld [vmem:[%s10 + $0x5b8] sm:$0xff]
    %v3676 = vld [vmem:[%s10 + $0x5c0] sm:$0xff]
    %v3677 = vld [vmem:[%s10 + $0x5c8] sm:$0xff]
    %v3678 = vld [vmem:[%s10 + $0x5d0] sm:$0xff]
    %v3679 = vld [vmem:[%s10 + $0x5d8] sm:$0xff]
    %v3680 = vld [vmem:[%s10 + $0x5e0] sm:$0xff]
    %v3681 = vld [vmem:[%s10 + $0x5e8] sm:$0xff]
    %v3682 = vld [vmem:[%s10 + $0x5f0] sm:$0xff]
    %v3683 = vld [vmem:[%s10 + $0x5f8] sm:$0xff]
    %v3684 = vld [vmem:[%s10 + $0x600] sm:$0xff]
    %v3685 = vld [vmem:[%s10 + $0x608] sm:$0xff]
    %v3686 = vld [vmem:[%s10 + $0x610] sm:$0xff]
    %v3687 = vld [vmem:[%s10 + $0x618] sm:$0xff]
    %v3688 = vld [vmem:[%s10 + $0x620] sm:$0xff]
    %v3689 = vld [vmem:[%s10 + $0x628] sm:$0xff]
    %v3690 = vld [vmem:[%s10 + $0x630] sm:$0xff]
    %v3691 = vld [vmem:[%s10 + $0x638] sm:$0xff]
    %v3692 = vld [vmem:[%s10 + $0x640] sm:$0xff]
    %v3693 = vld [vmem:[%s10 + $0x648] sm:$0xff]
    %v3694 = vld [vmem:[%s10 + $0x650] sm:$0xff]
    %v3695 = vld [vmem:[%s10 + $0x658] sm:$0xff]
    %v3696 = vld [vmem:[%s10 + $0x660] sm:$0xff]
    %v3697 = vld [vmem:[%s10 + $0x668] sm:$0xff]
    %v3698 = vld [vmem:[%s10 + $0x670] sm:$0xff]
    %v3699 = vld [vmem:[%s10 + $0x678] sm:$0xff]
    %v3700 = vld [vmem:[%s10 + $0x680] sm:$0xff]
    %v3701 = vld [vmem:[%s10 + $0x688] sm:$0xff]
    %v3702 = vld [vmem:[%s10 + $0x690] sm:$0xff]
    %v3703 = vld [vmem:[%s10 + $0x698] sm:$0xff]
    %v3704 = vld [vmem:[%s10 + $0x6a0] sm:$0xff]
    %v3705 = vld [vmem:[%s10 + $0x6a8] sm:$0xff]
    %v3706 = vld [vmem:[%s10 + $0x6b0] sm:$0xff]
    %v3707 = vld [vmem:[%s10 + $0x6b8] sm:$0xff]
    %v3708 = vld [vmem:[%s10 + $0x6c0] sm:$0xff]
    %v3709 = vld [vmem:[%s10 + $0x6c8] sm:$0xff]
    %v3710 = vld [vmem:[%s10 + $0x6d0] sm:$0xff]
    %v3711 = vld [vmem:[%s10 + $0x6d8] sm:$0xff]
    %v3712 = vld [vmem:[%s10 + $0x6e0] sm:$0xff]
    %v3713 = vld [vmem:[%s10 + $0x6e8] sm:$0xff]
    %v3714 = vld [vmem:[%s10 + $0x6f0] sm:$0xff]
    %v3715 = vld [vmem:[%s10 + $0x6f8] sm:$0xff]
    %v3716 = vld [vmem:[%s10 + $0x700] sm:$0xff]
    %v3717 = vld [vmem:[%s10 + $0x708] sm:$0xff]
    %v3718 = vld [vmem:[%s10 + $0x710] sm:$0xff]
    %v3719 = vld [vmem:[%s10 + $0x718] sm:$0xff]
    %v3720 = vld [vmem:[%s10 + $0x720] sm:$0xff]
    %v3721 = vld [vmem:[%s10 + $0x728] sm:$0xff]
    %v3722 = vld [vmem:[%s10 + $0x730] sm:$0xff]
    %v3723 = vld [vmem:[%s10 + $0x738] sm:$0xff]
    %v3724 = vld [vmem:[%s10 + $0x740] sm:$0xff]
    %v3725 = vld [vmem:[%s10 + $0x748] sm:$0xff]
    %v3726 = vld [vmem:[%s10 + $0x750] sm:$0xff]
    %v3727 = vld [vmem:[%s10 + $0x758] sm:$0xff]
    %v3728 = vld [vmem:[%s10 + $0x760] sm:$0xff]
    %v3729 = vld [vmem:[%s10 + $0x768] sm:$0xff]
    %v3730 = vld [vmem:[%s10 + $0x770] sm:$0xff]
    %v3731 = vld [vmem:[%s10 + $0x778] sm:$0xff]
    %v3732 = vld [vmem:[%s10 + $0x780] sm:$0xff]
    %v3733 = vld [vmem:[%s10 + $0x788] sm:$0xff]
    %v3734 = vld [vmem:[%s10 + $0x790] sm:$0xff]
    %v3735 = vld [vmem:[%s10 + $0x798] sm:$0xff]
    %v3736 = vld [vmem:[%s10 + $0x7a0] sm:$0xff]
    %v3737 = vld [vmem:[%s10 + $0x7a8] sm:$0xff]
    %v3738 = vld [vmem:[%s10 + $0x7b0] sm:$0xff]
    %v3739 = vld [vmem:[%s10 + $0x7b8] sm:$0xff]
    %v3740 = vld [vmem:[%s10 + $0x7c0] sm:$0xff]
    %v3741 = vld [vmem:[%s10 + $0x7c8] sm:$0xff]
    %v3742 = vld [vmem:[%s10 + $0x7d0] sm:$0xff]
    %v3743 = vld [vmem:[%s10 + $0x7d8] sm:$0xff]
    %v3744 = vld [vmem:[%s10 + $0x7e0] sm:$0xff]
    %v3745 = vld [vmem:[%s10 + $0x7e8] sm:$0xff]
    %v3746 = vld [vmem:[%s10 + $0x7f0] sm:$0xff]
    %v3747 = vld [vmem:[%s10 + $0x7f8] sm:$0xff]
    %v3748 = vld [vmem:[%s11] sm:$0xff]
    %v3749 = vld [vmem:[%s11 + $0x8] sm:$0xff]
    %v3752 = vlaneseq
    %v3753 = vshrl.u32 %v3752, 7
    %v3754 = vsub.s32 0, %v3753
    %v3755 = vrot.slane %v3748, %v3754
    %v3756 = vlaneseq
    %v3757 = vshrl.u32 %v3756, 7
    %v3758 = vsub.s32 1, %v3757
    %v3759 = vrot.slane %v3748, %v3758
    %v3760 = vlaneseq
    %v3761 = vshrl.u32 %v3760, 7
    %v3762 = vsub.s32 2, %v3761
    %v3763 = vrot.slane %v3748, %v3762
    %v3764 = vlaneseq
    %v3765 = vshrl.u32 %v3764, 7
    %v3766 = vsub.s32 3, %v3765
    %v3767 = vrot.slane %v3748, %v3766
    %v3768 = vlaneseq
    %v3769 = vshrl.u32 %v3768, 7
    %v3770 = vsub.s32 4, %v3769
    %v3771 = vrot.slane %v3748, %v3770
    %v3772 = vlaneseq
    %v3773 = vshrl.u32 %v3772, 7
    %v3774 = vsub.s32 5, %v3773
    %v3775 = vrot.slane %v3748, %v3774
    %v3776 = vlaneseq
    %v3777 = vshrl.u32 %v3776, 7
    %v3778 = vsub.s32 6, %v3777
    %v3779 = vrot.slane %v3748, %v3778
    %v3780 = vlaneseq
    %v3781 = vshrl.u32 %v3780, 7
    %v3782 = vsub.s32 7, %v3781
    %v3783 = vrot.slane %v3748, %v3782
    %v3784 = vlaneseq
    %v3785 = vshrl.u32 %v3784, 7
    %v3786 = vsub.s32 0, %v3785
    %v3787 = vrot.slane %v3749, %v3786
    %v3788 = vlaneseq
    %v3789 = vshrl.u32 %v3788, 7
    %v3790 = vsub.s32 1, %v3789
    %v3791 = vrot.slane %v3749, %v3790
    %v3792 = vlaneseq
    %v3793 = vshrl.u32 %v3792, 7
    %v3794 = vsub.s32 2, %v3793
    %v3795 = vrot.slane %v3749, %v3794
    %v3796 = vlaneseq
    %v3797 = vshrl.u32 %v3796, 7
    %v3798 = vsub.s32 3, %v3797
    %v3799 = vrot.slane %v3749, %v3798
    %v3800 = vlaneseq
    %v3801 = vshrl.u32 %v3800, 7
    %v3802 = vsub.s32 4, %v3801
    %v3803 = vrot.slane %v3749, %v3802
    %v3804 = vlaneseq
    %v3805 = vshrl.u32 %v3804, 7
    %v3806 = vsub.s32 5, %v3805
    %v3807 = vrot.slane %v3749, %v3806
    %v3808 = vlaneseq
    %v3809 = vshrl.u32 %v3808, 7
    %v3810 = vsub.s32 6, %v3809
    %v3811 = vrot.slane %v3749, %v3810
    %v3812 = vlaneseq
    %v3813 = vshrl.u32 %v3812, 7
    %v3814 = vsub.s32 7, %v3813
    %v3815 = vrot.slane %v3749, %v3814
    %3832 = vmatprep.subr.mxu0 %v3493
    %3833 = vmatpush1.msra.mxu0 %v3492
    %3834 = vmatprep.subr.mxu0 %v3509
    %3835 = vmatpush1.msra.mxu0 %v3508
    %3836 = vmatprep.subr.mxu0 %v3525
    %3837 = vmatpush1.msra.mxu0 %v3524
    %3838 = vmatprep.subr.mxu0 %v3541
    %3839 = vmatpush1.msra.mxu0 %v3540
    %3840 = vmatprep.subr.mxu0 %v3557
    %3841 = vmatpush1.msra.mxu0 %v3556
    %3842 = vmatprep.subr.mxu0 %v3573
    %3843 = vmatpush1.msra.mxu0 %v3572
    %3844 = vmatprep.subr.mxu0 %v3589
    %3845 = vmatpush1.msra.mxu0 %v3588
    %3846 = vmatprep.subr.mxu0 %v3605
    %3847 = vmatpush1.msra.mxu0 %v3604
    %3848 = vmatprep.subr.mxu0 %v3621
    %3849 = vmatpush1.msra.mxu0 %v3620
    %3850 = vmatprep.subr.mxu0 %v3637
    %3851 = vmatpush1.msra.mxu0 %v3636
    %3852 = vmatprep.subr.mxu0 %v3653
    %3853 = vmatpush1.msra.mxu0 %v3652
    %3854 = vmatprep.subr.mxu0 %v3669
    %3855 = vmatpush1.msra.mxu0 %v3668
    %3856 = vmatprep.subr.mxu0 %v3685
    %3857 = vmatpush1.msra.mxu0 %v3684
    %3858 = vmatprep.subr.mxu0 %v3701
    %3859 = vmatpush1.msra.mxu0 %v3700
    %3860 = vmatprep.subr.mxu0 %v3717
    %3861 = vmatpush1.msra.mxu0 %v3716
    %3862 = vmatprep.subr.mxu0 %v3733
    %3863 = vmatpush1.msra.mxu0 %v3732
    %3864 = vmatprep.subr.mxu0 0.0
    %3865 = vmatpush1.msra.mxu0 0.0
    %3866 = vmatprep.subr.mxu0 0.0
    %3867 = vmatpush1.msra.mxu0 0.0
    %3868 = vmatprep.subr.mxu0 0.0
    %3869 = vmatpush1.msra.mxu0 0.0
    %3870 = vmatprep.subr.mxu0 0.0
    %3871 = vmatpush1.msra.mxu0 0.0
    %3872 = vmatprep.subr.mxu0 0.0
    %3873 = vmatpush1.msra.mxu0 0.0
    %3874 = vmatprep.subr.mxu0 0.0
    %3875 = vmatpush1.msra.mxu0 0.0
    %3876 = vmatprep.subr.mxu0 0.0
    %3877 = vmatpush1.msra.mxu0 0.0
    %3878 = vmatprep.subr.mxu0 0.0
    %3879 = vmatpush1.msra.mxu0 0.0
    %3880 = vmatprep.subr.mxu0 0.0
    %3881 = vmatpush1.msra.mxu0 0.0
    %3882 = vmatprep.subr.mxu0 0.0
    %3883 = vmatpush1.msra.mxu0 0.0
    %3884 = vmatprep.subr.mxu0 0.0
    %3885 = vmatpush1.msra.mxu0 0.0
    %3886 = vmatprep.subr.mxu0 0.0
    %3887 = vmatpush1.msra.mxu0 0.0
    %3888 = vmatprep.subr.mxu0 0.0
    %3889 = vmatpush1.msra.mxu0 0.0
    %3890 = vmatprep.subr.mxu0 0.0
    %3891 = vmatpush1.msra.mxu0 0.0
    %3892 = vmatprep.subr.mxu0 0.0
    %3893 = vmatpush1.msra.mxu0 0.0
    %3894 = vmatprep.subr.mxu0 0.0
    %3895 = vmatpush1.msra.mxu0 0.0
    %3896 = vmatprep.mubr.f32.mxu0 0.0
    %3897 = vmatmul.mubr.f32.gmra.mrb[0].mxu0 %v3474
    %v3898 = vpop.f32.mrb[0].mxu0
    %v3899 = vadd.f32 %v3755, %v3898
    %v3900 = vpop.f32.mrb[0].mxu0
    %v3901 = vadd.f32 %v3759, %v3900
    %3902 = vmatprep.mubr.f32.mxu0 0.0
    %3903 = vmatmul.mubr.f32.gmra.mrb[0].mxu0 %v3479
    %v3904 = vpop.f32.mrb[0].mxu0
    %v3905 = vadd.f32 %v3755, %v3904
    %v3906 = vpop.f32.mrb[0].mxu0
    %v3907 = vadd.f32 %v3759, %v3906
    %3908 = vmatprep.mubr.f32.mxu0 0.0
    %3909 = vmatmul.mubr.f32.gmra.mrb[0].mxu0 %v3484
    %v3910 = vpop.f32.mrb[0].mxu0
    %v3911 = vadd.f32 %v3755, %v3910
    %v3912 = vpop.f32.mrb[0].mxu0
    %v3913 = vadd.f32 %v3759, %v3912
    %3914 = vmatprep.mubr.f32.mxu0 0.0
    %3915 = vmatmul.mubr.f32.gmra.mrb[0].mxu0 %v3489
    %v3916 = vpop.f32.mrb[0].mxu0
    %v3917 = vadd.f32 %v3755, %v3916
    %v3918 = vpop.f32.mrb[0].mxu0
    %v3919 = vadd.f32 %v3759, %v3918
    %3920 = vdwg.mxu0
    %3921 = vmatprep.subr.mxu0 %v3495
    %3922 = vmatpush1.msra.mxu0 %v3494
    %3923 = vmatprep.subr.mxu0 %v3511
    %3924 = vmatpush1.msra.mxu0 %v3510
    %3925 = vmatprep.subr.mxu0 %v3527
    %3926 = vmatpush1.msra.mxu0 %v3526
    %3927 = vmatprep.subr.mxu0 %v3543
    %3928 = vmatpush1.msra.mxu0 %v3542
    %3929 = vmatprep.subr.mxu0 %v3559
    %3930 = vmatpush1.msra.mxu0 %v3558
    %3931 = vmatprep.subr.mxu0 %v3575
    %3932 = vmatpush1.msra.mxu0 %v3574
    %3933 = vmatprep.subr.mxu0 %v3591
    %3934 = vmatpush1.msra.mxu0 %v3590
    %3935 = vmatprep.subr.mxu0 %v3607
    %3936 = vmatpush1.msra.mxu0 %v3606
    %3937 = vmatprep.subr.mxu0 %v3623
    %3938 = vmatpush1.msra.mxu0 %v3622
    %3939 = vmatprep.subr.mxu0 %v3639
    %3940 = vmatpush1.msra.mxu0 %v3638
    %3941 = vmatprep.subr.mxu0 %v3655
    %3942 = vmatpush1.msra.mxu0 %v3654
    %3943 = vmatprep.subr.mxu0 %v3671
    %3944 = vmatpush1.msra.mxu0 %v3670
    %3945 = vmatprep.subr.mxu0 %v3687
    %3946 = vmatpush1.msra.mxu0 %v3686
    %3947 = vmatprep.subr.mxu0 %v3703
    %3948 = vmatpush1.msra.mxu0 %v3702
    %3949 = vmatprep.subr.mxu0 %v3719
    %3950 = vmatpush1.msra.mxu0 %v3718
    %3951 = vmatprep.subr.mxu0 %v3735
    %3952 = vmatpush1.msra.mxu0 %v3734
    %3953 = vmatprep.subr.mxu0 0.0
    %3954 = vmatpush1.msra.mxu0 0.0
    %3955 = vmatprep.subr.mxu0 0.0
    %3956 = vmatpush1.msra.mxu0 0.0
    %3957 = vmatprep.subr.mxu0 0.0
    %3958 = vmatpush1.msra.mxu0 0.0
    %3959 = vmatprep.subr.mxu0 0.0
    %3960 = vmatpush1.msra.mxu0 0.0
    %3961 = vmatprep.subr.mxu0 0.0
    %3962 = vmatpush1.msra.mxu0 0.0
    %3963 = vmatprep.subr.mxu0 0.0
    %3964 = vmatpush1.msra.mxu0 0.0
    %3965 = vmatprep.subr.mxu0 0.0
    %3966 = vmatpush1.msra.mxu0 0.0
    %3967 = vmatprep.subr.mxu0 0.0
    %3968 = vmatpush1.msra.mxu0 0.0
    %3969 = vmatprep.subr.mxu0 0.0
    %3970 = vmatpush1.msra.mxu0 0.0
    %3971 = vmatprep.subr.mxu0 0.0
    %3972 = vmatpush1.msra.mxu0 0.0
    %3973 = vmatprep.subr.mxu0 0.0
    %3974 = vmatpush1.msra.mxu0 0.0
    %3975 = vmatprep.subr.mxu0 0.0
    %3976 = vmatpush1.msra.mxu0 0.0
    %3977 = vmatprep.subr.mxu0 0.0
    %3978 = vmatpush1.msra.mxu0 0.0
    %3979 = vmatprep.subr.mxu0 0.0
    %3980 = vmatpush1.msra.mxu0 0.0
    %3981 = vmatprep.subr.mxu0 0.0
    %3982 = vmatpush1.msra.mxu0 0.0
    %3983 = vmatprep.subr.mxu0 0.0
    %3984 = vmatpush1.msra.mxu0 0.0
    %3985 = vmatprep.mubr.f32.mxu0 0.0
    %3986 = vmatmul.mubr.f32.gmra.mrb[0].mxu0 %v3474
    %v3987 = vpop.f32.mrb[0].mxu0
    %v3988 = vadd.f32 %v3763, %v3987
    %v3989 = vpop.f32.mrb[0].mxu0
    %v3990 = vadd.f32 %v3767, %v3989
    %3991 = vmatprep.mubr.f32.mxu0 0.0
    %3992 = vmatmul.mubr.f32.gmra.mrb[0].mxu0 %v3479
    %v3993 = vpop.f32.mrb[0].mxu0
    %v3994 = vadd.f32 %v3763, %v3993
    %v3995 = vpop.f32.mrb[0].mxu0
    %v3996 = vadd.f32 %v3767, %v3995
    %3997 = vmatprep.mubr.f32.mxu0 0.0
    %3998 = vmatmul.mubr.f32.gmra.mrb[0].mxu0 %v3484
    %v3999 = vpop.f32.mrb[0].mxu0
    %v4000 = vadd.f32 %v3763, %v3999
    %v4001 = vpop.f32.mrb[0].mxu0
    %v4002 = vadd.f32 %v3767, %v4001
    %4003 = vmatprep.mubr.f32.mxu0 0.0
    %4004 = vmatmul.mubr.f32.gmra.mrb[0].mxu0 %v3489
    %v4005 = vpop.f32.mrb[0].mxu0
    %v4006 = vadd.f32 %v3763, %v4005
    %v4007 = vpop.f32.mrb[0].mxu0
    %v4008 = vadd.f32 %v3767, %v4007
    %4009 = vdwg.mxu0
    %4010 = vmatprep.subr.mxu0 %v3497
    %4011 = vmatpush1.msra.mxu0 %v3496
    %4012 = vmatprep.subr.mxu0 %v3513
    %4013 = vmatpush1.msra.mxu0 %v3512
    %4014 = vmatprep.subr.mxu0 %v3529
    %4015 = vmatpush1.msra.mxu0 %v3528
    %4016 = vmatprep.subr.mxu0 %v3545
    %4017 = vmatpush1.msra.mxu0 %v3544
    %4018 = vmatprep.subr.mxu0 %v3561
    %4019 = vmatpush1.msra.mxu0 %v3560
    %4020 = vmatprep.subr.mxu0 %v3577
    %4021 = vmatpush1.msra.mxu0 %v3576
    %4022 = vmatprep.subr.mxu0 %v3593
    %4023 = vmatpush1.msra.mxu0 %v3592
    %4024 = vmatprep.subr.mxu0 %v3609
    %4025 = vmatpush1.msra.mxu0 %v3608
    %4026 = vmatprep.subr.mxu0 %v3625
    %4027 = vmatpush1.msra.mxu0 %v3624
    %4028 = vmatprep.subr.mxu0 %v3641
    %4029 = vmatpush1.msra.mxu0 %v3640
    %4030 = vmatprep.subr.mxu0 %v3657
    %4031 = vmatpush1.msra.mxu0 %v3656
    %4032 = vmatprep.subr.mxu0 %v3673
    %4033 = vmatpush1.msra.mxu0 %v3672
    %4034 = vmatprep.subr.mxu0 %v3689
    %4035 = vmatpush1.msra.mxu0 %v3688
    %4036 = vmatprep.subr.mxu0 %v3705
    %4037 = vmatpush1.msra.mxu0 %v3704
    %4038 = vmatprep.subr.mxu0 %v3721
    %4039 = vmatpush1.msra.mxu0 %v3720
    %4040 = vmatprep.subr.mxu0 %v3737
    %4041 = vmatpush1.msra.mxu0 %v3736
    %4042 = vmatprep.subr.mxu0 0.0
    %4043 = vmatpush1.msra.mxu0 0.0
    %4044 = vmatprep.subr.mxu0 0.0
    %4045 = vmatpush1.msra.mxu0 0.0
    %4046 = vmatprep.subr.mxu0 0.0
    %4047 = vmatpush1.msra.mxu0 0.0
    %4048 = vmatprep.subr.mxu0 0.0
    %4049 = vmatpush1.msra.mxu0 0.0
    %4050 = vmatprep.subr.mxu0 0.0
    %4051 = vmatpush1.msra.mxu0 0.0
    %4052 = vmatprep.subr.mxu0 0.0
    %4053 = vmatpush1.msra.mxu0 0.0
    %4054 = vmatprep.subr.mxu0 0.0
    %4055 = vmatpush1.msra.mxu0 0.0
    %4056 = vmatprep.subr.mxu0 0.0
    %4057 = vmatpush1.msra.mxu0 0.0
    %4058 = vmatprep.subr.mxu0 0.0
    %4059 = vmatpush1.msra.mxu0 0.0
    %4060 = vmatprep.subr.mxu0 0.0
    %4061 = vmatpush1.msra.mxu0 0.0
    %4062 = vmatprep.subr.mxu0 0.0
    %4063 = vmatpush1.msra.mxu0 0.0
    %4064 = vmatprep.subr.mxu0 0.0
    %4065 = vmatpush1.msra.mxu0 0.0
    %4066 = vmatprep.subr.mxu0 0.0
    %4067 = vmatpush1.msra.mxu0 0.0
    %4068 = vmatprep.subr.mxu0 0.0
    %4069 = vmatpush1.msra.mxu0 0.0
    %4070 = vmatprep.subr.mxu0 0.0
    %4071 = vmatpush1.msra.mxu0 0.0
    %4072 = vmatprep.subr.mxu0 0.0
    %4073 = vmatpush1.msra.mxu0 0.0
    %4074 = vmatprep.mubr.f32.mxu0 0.0
    %4075 = vmatmul.mubr.f32.gmra.mrb[0].mxu0 %v3474
    %v4076 = vpop.f32.mrb[0].mxu0
    %v4077 = vadd.f32 %v3771, %v4076
    %v4078 = vpop.f32.mrb[0].mxu0
    %v4079 = vadd.f32 %v3775, %v4078
    %4080 = vmatprep.mubr.f32.mxu0 0.0
    %4081 = vmatmul.mubr.f32.gmra.mrb[0].mxu0 %v3479
    %v4082 = vpop.f32.mrb[0].mxu0
    %v4083 = vadd.f32 %v3771, %v4082
    %v4084 = vpop.f32.mrb[0].mxu0
    %v4085 = vadd.f32 %v3775, %v4084
    %4086 = vmatprep.mubr.f32.mxu0 0.0
    %4087 = vmatmul.mubr.f32.gmra.mrb[0].mxu0 %v3484
    %v4088 = vpop.f32.mrb[0].mxu0
    %v4089 = vadd.f32 %v3771, %v4088
    %v4090 = vpop.f32.mrb[0].mxu0
    %v4091 = vadd.f32 %v3775, %v4090
    %4092 = vmatprep.mubr.f32.mxu0 0.0
    %4093 = vmatmul.mubr.f32.gmra.mrb[0].mxu0 %v3489
    %v4094 = vpop.f32.mrb[0].mxu0
    %v4095 = vadd.f32 %v3771, %v4094
    %v4096 = vpop.f32.mrb[0].mxu0
    %v4097 = vadd.f32 %v3775, %v4096
    %4098 = vdwg.mxu0
    %4099 = vmatprep.subr.mxu0 %v3499
    %4100 = vmatpush1.msra.mxu0 %v3498
    %4101 = vmatprep.subr.mxu0 %v3515
    %4102 = vmatpush1.msra.mxu0 %v3514
    %4103 = vmatprep.subr.mxu0 %v3531
    %4104 = vmatpush1.msra.mxu0 %v3530
    %4105 = vmatprep.subr.mxu0 %v3547
    %4106 = vmatpush1.msra.mxu0 %v3546
    %4107 = vmatprep.subr.mxu0 %v3563
    %4108 = vmatpush1.msra.mxu0 %v3562
    %4109 = vmatprep.subr.mxu0 %v3579
    %4110 = vmatpush1.msra.mxu0 %v3578
    %4111 = vmatprep.subr.mxu0 %v3595
    %4112 = vmatpush1.msra.mxu0 %v3594
    %4113 = vmatprep.subr.mxu0 %v3611
    %4114 = vmatpush1.msra.mxu0 %v3610
    %4115 = vmatprep.subr.mxu0 %v3627
    %4116 = vmatpush1.msra.mxu0 %v3626
    %4117 = vmatprep.subr.mxu0 %v3643
    %4118 = vmatpush1.msra.mxu0 %v3642
    %4119 = vmatprep.subr.mxu0 %v3659
    %4120 = vmatpush1.msra.mxu0 %v3658
    %4121 = vmatprep.subr.mxu0 %v3675
    %4122 = vmatpush1.msra.mxu0 %v3674
    %4123 = vmatprep.subr.mxu0 %v3691
    %4124 = vmatpush1.msra.mxu0 %v3690
    %4125 = vmatprep.subr.mxu0 %v3707
    %4126 = vmatpush1.msra.mxu0 %v3706
    %4127 = vmatprep.subr.mxu0 %v3723
    %4128 = vmatpush1.msra.mxu0 %v3722
    %4129 = vmatprep.subr.mxu0 %v3739
    %4130 = vmatpush1.msra.mxu0 %v3738
    %4131 = vmatprep.subr.mxu0 0.0
    %4132 = vmatpush1.msra.mxu0 0.0
    %4133 = vmatprep.subr.mxu0 0.0
    %4134 = vmatpush1.msra.mxu0 0.0
    %4135 = vmatprep.subr.mxu0 0.0
    %4136 = vmatpush1.msra.mxu0 0.0
    %4137 = vmatprep.subr.mxu0 0.0
    %4138 = vmatpush1.msra.mxu0 0.0
    %4139 = vmatprep.subr.mxu0 0.0
    %4140 = vmatpush1.msra.mxu0 0.0
    %4141 = vmatprep.subr.mxu0 0.0
    %4142 = vmatpush1.msra.mxu0 0.0
    %4143 = vmatprep.subr.mxu0 0.0
    %4144 = vmatpush1.msra.mxu0 0.0
    %4145 = vmatprep.subr.mxu0 0.0
    %4146 = vmatpush1.msra.mxu0 0.0
    %4147 = vmatprep.subr.mxu0 0.0
    %4148 = vmatpush1.msra.mxu0 0.0
    %4149 = vmatprep.subr.mxu0 0.0
    %4150 = vmatpush1.msra.mxu0 0.0
    %4151 = vmatprep.subr.mxu0 0.0
    %4152 = vmatpush1.msra.mxu0 0.0
    %4153 = vmatprep.subr.mxu0 0.0
    %4154 = vmatpush1.msra.mxu0 0.0
    %4155 = vmatprep.subr.mxu0 0.0
    %4156 = vmatpush1.msra.mxu0 0.0
    %4157 = vmatprep.subr.mxu0 0.0
    %4158 = vmatpush1.msra.mxu0 0.0
    %4159 = vmatprep.subr.mxu0 0.0
    %4160 = vmatpush1.msra.mxu0 0.0
    %4161 = vmatprep.subr.mxu0 0.0
    %4162 = vmatpush1.msra.mxu0 0.0
    %4163 = vmatprep.mubr.f32.mxu0 0.0
    %4164 = vmatmul.mubr.f32.gmra.mrb[0].mxu0 %v3474
    %v4165 = vpop.f32.mrb[0].mxu0
    %v4166 = vadd.f32 %v3779, %v4165
    %v4167 = vpop.f32.mrb[0].mxu0
    %v4168 = vadd.f32 %v3783, %v4167
    %4169 = vmatprep.mubr.f32.mxu0 0.0
    %4170 = vmatmul.mubr.f32.gmra.mrb[0].mxu0 %v3479
    %v4171 = vpop.f32.mrb[0].mxu0
    %v4172 = vadd.f32 %v3779, %v4171
    %v4173 = vpop.f32.mrb[0].mxu0
    %v4174 = vadd.f32 %v3783, %v4173
    %4175 = vmatprep.mubr.f32.mxu0 0.0
    %4176 = vmatmul.mubr.f32.gmra.mrb[0].mxu0 %v3484
    %v4177 = vpop.f32.mrb[0].mxu0
    %v4178 = vadd.f32 %v3779, %v4177
    %v4179 = vpop.f32.mrb[0].mxu0
    %v4180 = vadd.f32 %v3783, %v4179
    %4181 = vmatprep.mubr.f32.mxu0 0.0
    %4182 = vmatmul.mubr.f32.gmra.mrb[0].mxu0 %v3489
    %v4183 = vpop.f32.mrb[0].mxu0
    %v4184 = vadd.f32 %v3779, %v4183
    %v4185 = vpop.f32.mrb[0].mxu0
    %v4186 = vadd.f32 %v3783, %v4185
    %4187 = vdwg.mxu0
    %4188 = vmatprep.subr.mxu0 %v3501
    %4189 = vmatpush1.msra.mxu0 %v3500
    %4190 = vmatprep.subr.mxu0 %v3517
    %4191 = vmatpush1.msra.mxu0 %v3516
    %4192 = vmatprep.subr.mxu0 %v3533
    %4193 = vmatpush1.msra.mxu0 %v3532
    %4194 = vmatprep.subr.mxu0 %v3549
    %4195 = vmatpush1.msra.mxu0 %v3548
    %4196 = vmatprep.subr.mxu0 %v3565
    %4197 = vmatpush1.msra.mxu0 %v3564
    %4198 = vmatprep.subr.mxu0 %v3581
    %4199 = vmatpush1.msra.mxu0 %v3580
    %4200 = vmatprep.subr.mxu0 %v3597
    %4201 = vmatpush1.msra.mxu0 %v3596
    %4202 = vmatprep.subr.mxu0 %v3613
    %4203 = vmatpush1.msra.mxu0 %v3612
    %4204 = vmatprep.subr.mxu0 %v3629
    %4205 = vmatpush1.msra.mxu0 %v3628
    %4206 = vmatprep.subr.mxu0 %v3645
    %4207 = vmatpush1.msra.mxu0 %v3644
    %4208 = vmatprep.subr.mxu0 %v3661
    %4209 = vmatpush1.msra.mxu0 %v3660
    %4210 = vmatprep.subr.mxu0 %v3677
    %4211 = vmatpush1.msra.mxu0 %v3676
    %4212 = vmatprep.subr.mxu0 %v3693
    %4213 = vmatpush1.msra.mxu0 %v3692
    %4214 = vmatprep.subr.mxu0 %v3709
    %4215 = vmatpush1.msra.mxu0 %v3708
    %4216 = vmatprep.subr.mxu0 %v3725
    %4217 = vmatpush1.msra.mxu0 %v3724
    %4218 = vmatprep.subr.mxu0 %v3741
    %4219 = vmatpush1.msra.mxu0 %v3740
    %4220 = vmatprep.subr.mxu0 0.0
    %4221 = vmatpush1.msra.mxu0 0.0
    %4222 = vmatprep.subr.mxu0 0.0
    %4223 = vmatpush1.msra.mxu0 0.0
    %4224 = vmatprep.subr.mxu0 0.0
    %4225 = vmatpush1.msra.mxu0 0.0
    %4226 = vmatprep.subr.mxu0 0.0
    %4227 = vmatpush1.msra.mxu0 0.0
    %4228 = vmatprep.subr.mxu0 0.0
    %4229 = vmatpush1.msra.mxu0 0.0
    %4230 = vmatprep.subr.mxu0 0.0
    %4231 = vmatpush1.msra.mxu0 0.0
    %4232 = vmatprep.subr.mxu0 0.0
    %4233 = vmatpush1.msra.mxu0 0.0
    %4234 = vmatprep.subr.mxu0 0.0
    %4235 = vmatpush1.msra.mxu0 0.0
    %4236 = vmatprep.subr.mxu0 0.0
    %4237 = vmatpush1.msra.mxu0 0.0
    %4238 = vmatprep.subr.mxu0 0.0
    %4239 = vmatpush1.msra.mxu0 0.0
    %4240 = vmatprep.subr.mxu0 0.0
    %4241 = vmatpush1.msra.mxu0 0.0
    %4242 = vmatprep.subr.mxu0 0.0
    %4243 = vmatpush1.msra.mxu0 0.0
    %4244 = vmatprep.subr.mxu0 0.0
    %4245 = vmatpush1.msra.mxu0 0.0
    %4246 = vmatprep.subr.mxu0 0.0
    %4247 = vmatpush1.msra.mxu0 0.0
    %4248 = vmatprep.subr.mxu0 0.0
    %4249 = vmatpush1.msra.mxu0 0.0
    %4250 = vmatprep.subr.mxu0 0.0
    %4251 = vmatpush1.msra.mxu0 0.0
    %4252 = vmatprep.mubr.f32.mxu0 0.0
    %4253 = vmatmul.mubr.f32.gmra.mrb[0].mxu0 %v3474
    %v4254 = vpop.f32.mrb[0].mxu0
    %v4255 = vadd.f32 %v3787, %v4254
    %v4256 = vpop.f32.mrb[0].mxu0
    %v4257 = vadd.f32 %v3791, %v4256
    %4258 = vmatprep.mubr.f32.mxu0 0.0
    %4259 = vmatmul.mubr.f32.gmra.mrb[0].mxu0 %v3479
    %v4260 = vpop.f32.mrb[0].mxu0
    %v4261 = vadd.f32 %v3787, %v4260
    %v4262 = vpop.f32.mrb[0].mxu0
    %v4263 = vadd.f32 %v3791, %v4262
    %4264 = vmatprep.mubr.f32.mxu0 0.0
    %4265 = vmatmul.mubr.f32.gmra.mrb[0].mxu0 %v3484
    %v4266 = vpop.f32.mrb[0].mxu0
    %v4267 = vadd.f32 %v3787, %v4266
    %v4268 = vpop.f32.mrb[0].mxu0
    %v4269 = vadd.f32 %v3791, %v4268
    %4270 = vmatprep.mubr.f32.mxu0 0.0
    %4271 = vmatmul.mubr.f32.gmra.mrb[0].mxu0 %v3489
    %v4272 = vpop.f32.mrb[0].mxu0
    %v4273 = vadd.f32 %v3787, %v4272
    %v4274 = vpop.f32.mrb[0].mxu0
    %v4275 = vadd.f32 %v3791, %v4274
    %4276 = vdwg.mxu0
    %4277 = vmatprep.subr.mxu0 %v3503
    %4278 = vmatpush1.msra.mxu0 %v3502
    %4279 = vmatprep.subr.mxu0 %v3519
    %4280 = vmatpush1.msra.mxu0 %v3518
    %4281 = vmatprep.subr.mxu0 %v3535
    %4282 = vmatpush1.msra.mxu0 %v3534
    %4283 = vmatprep.subr.mxu0 %v3551
    %4284 = vmatpush1.msra.mxu0 %v3550
    %4285 = vmatprep.subr.mxu0 %v3567
    %4286 = vmatpush1.msra.mxu0 %v3566
    %4287 = vmatprep.subr.mxu0 %v3583
    %4288 = vmatpush1.msra.mxu0 %v3582
    %4289 = vmatprep.subr.mxu0 %v3599
    %4290 = vmatpush1.msra.mxu0 %v3598
    %4291 = vmatprep.subr.mxu0 %v3615
    %4292 = vmatpush1.msra.mxu0 %v3614
    %4293 = vmatprep.subr.mxu0 %v3631
    %4294 = vmatpush1.msra.mxu0 %v3630
    %4295 = vmatprep.subr.mxu0 %v3647
    %4296 = vmatpush1.msra.mxu0 %v3646
    %4297 = vmatprep.subr.mxu0 %v3663
    %4298 = vmatpush1.msra.mxu0 %v3662
    %4299 = vmatprep.subr.mxu0 %v3679
    %4300 = vmatpush1.msra.mxu0 %v3678
    %4301 = vmatprep.subr.mxu0 %v3695
    %4302 = vmatpush1.msra.mxu0 %v3694
    %4303 = vmatprep.subr.mxu0 %v3711
    %4304 = vmatpush1.msra.mxu0 %v3710
    %4305 = vmatprep.subr.mxu0 %v3727
    %4306 = vmatpush1.msra.mxu0 %v3726
    %4307 = vmatprep.subr.mxu0 %v3743
    %4308 = vmatpush1.msra.mxu0 %v3742
    %4309 = vmatprep.subr.mxu0 0.0
    %4310 = vmatpush1.msra.mxu0 0.0
    %4311 = vmatprep.subr.mxu0 0.0
    %4312 = vmatpush1.msra.mxu0 0.0
    %4313 = vmatprep.subr.mxu0 0.0
    %4314 = vmatpush1.msra.mxu0 0.0
    %4315 = vmatprep.subr.mxu0 0.0
    %4316 = vmatpush1.msra.mxu0 0.0
    %4317 = vmatprep.subr.mxu0 0.0
    %4318 = vmatpush1.msra.mxu0 0.0
    %4319 = vmatprep.subr.mxu0 0.0
    %4320 = vmatpush1.msra.mxu0 0.0
    %4321 = vmatprep.subr.mxu0 0.0
    %4322 = vmatpush1.msra.mxu0 0.0
    %4323 = vmatprep.subr.mxu0 0.0
    %4324 = vmatpush1.msra.mxu0 0.0
    %4325 = vmatprep.subr.mxu0 0.0
    %4326 = vmatpush1.msra.mxu0 0.0
    %4327 = vmatprep.subr.mxu0 0.0
    %4328 = vmatpush1.msra.mxu0 0.0
    %4329 = vmatprep.subr.mxu0 0.0
    %4330 = vmatpush1.msra.mxu0 0.0
    %4331 = vmatprep.subr.mxu0 0.0
    %4332 = vmatpush1.msra.mxu0 0.0
    %4333 = vmatprep.subr.mxu0 0.0
    %4334 = vmatpush1.msra.mxu0 0.0
    %4335 = vmatprep.subr.mxu0 0.0
    %4336 = vmatpush1.msra.mxu0 0.0
    %4337 = vmatprep.subr.mxu0 0.0
    %4338 = vmatpush1.msra.mxu0 0.0
    %4339 = vmatprep.subr.mxu0 0.0
    %4340 = vmatpush1.msra.mxu0 0.0
    %4341 = vmatprep.mubr.f32.mxu0 0.0
    %4342 = vmatmul.mubr.f32.gmra.mrb[0].mxu0 %v3474
    %v4343 = vpop.f32.mrb[0].mxu0
    %v4344 = vadd.f32 %v3795, %v4343
    %v4345 = vpop.f32.mrb[0].mxu0
    %v4346 = vadd.f32 %v3799, %v4345
    %4347 = vmatprep.mubr.f32.mxu0 0.0
    %4348 = vmatmul.mubr.f32.gmra.mrb[0].mxu0 %v3479
    %v4349 = vpop.f32.mrb[0].mxu0
    %v4350 = vadd.f32 %v3795, %v4349
    %v4351 = vpop.f32.mrb[0].mxu0
    %v4352 = vadd.f32 %v3799, %v4351
    %4353 = vmatprep.mubr.f32.mxu0 0.0
    %4354 = vmatmul.mubr.f32.gmra.mrb[0].mxu0 %v3484
    %v4355 = vpop.f32.mrb[0].mxu0
    %v4356 = vadd.f32 %v3795, %v4355
    %v4357 = vpop.f32.mrb[0].mxu0
    %v4358 = vadd.f32 %v3799, %v4357
    %4359 = vmatprep.mubr.f32.mxu0 0.0
    %4360 = vmatmul.mubr.f32.gmra.mrb[0].mxu0 %v3489
    %v4361 = vpop.f32.mrb[0].mxu0
    %v4362 = vadd.f32 %v3795, %v4361
    %v4363 = vpop.f32.mrb[0].mxu0
    %v4364 = vadd.f32 %v3799, %v4363
    %4365 = vdwg.mxu0
    %4366 = vmatprep.subr.mxu0 %v3505
    %4367 = vmatpush1.msra.mxu0 %v3504
    %4368 = vmatprep.subr.mxu0 %v3521
    %4369 = vmatpush1.msra.mxu0 %v3520
    %4370 = vmatprep.subr.mxu0 %v3537
    %4371 = vmatpush1.msra.mxu0 %v3536
    %4372 = vmatprep.subr.mxu0 %v3553
    %4373 = vmatpush1.msra.mxu0 %v3552
    %4374 = vmatprep.subr.mxu0 %v3569
    %4375 = vmatpush1.msra.mxu0 %v3568
    %4376 = vmatprep.subr.mxu0 %v3585
    %4377 = vmatpush1.msra.mxu0 %v3584
    %4378 = vmatprep.subr.mxu0 %v3601
    %4379 = vmatpush1.msra.mxu0 %v3600
    %4380 = vmatprep.subr.mxu0 %v3617
    %4381 = vmatpush1.msra.mxu0 %v3616
    %4382 = vmatprep.subr.mxu0 %v3633
    %4383 = vmatpush1.msra.mxu0 %v3632
    %4384 = vmatprep.subr.mxu0 %v3649
    %4385 = vmatpush1.msra.mxu0 %v3648
    %4386 = vmatprep.subr.mxu0 %v3665
    %4387 = vmatpush1.msra.mxu0 %v3664
    %4388 = vmatprep.subr.mxu0 %v3681
    %4389 = vmatpush1.msra.mxu0 %v3680
    %4390 = vmatprep.subr.mxu0 %v3697
    %4391 = vmatpush1.msra.mxu0 %v3696
    %4392 = vmatprep.subr.mxu0 %v3713
    %4393 = vmatpush1.msra.mxu0 %v3712
    %4394 = vmatprep.subr.mxu0 %v3729
    %4395 = vmatpush1.msra.mxu0 %v3728
    %4396 = vmatprep.subr.mxu0 %v3745
    %4397 = vmatpush1.msra.mxu0 %v3744
    %4398 = vmatprep.subr.mxu0 0.0
    %4399 = vmatpush1.msra.mxu0 0.0
    %4400 = vmatprep.subr.mxu0 0.0
    %4401 = vmatpush1.msra.mxu0 0.0
    %4402 = vmatprep.subr.mxu0 0.0
    %4403 = vmatpush1.msra.mxu0 0.0
    %4404 = vmatprep.subr.mxu0 0.0
    %4405 = vmatpush1.msra.mxu0 0.0
    %4406 = vmatprep.subr.mxu0 0.0
    %4407 = vmatpush1.msra.mxu0 0.0
    %4408 = vmatprep.subr.mxu0 0.0
    %4409 = vmatpush1.msra.mxu0 0.0
    %4410 = vmatprep.subr.mxu0 0.0
    %4411 = vmatpush1.msra.mxu0 0.0
    %4412 = vmatprep.subr.mxu0 0.0
    %4413 = vmatpush1.msra.mxu0 0.0
    %4414 = vmatprep.subr.mxu0 0.0
    %4415 = vmatpush1.msra.mxu0 0.0
    %4416 = vmatprep.subr.mxu0 0.0
    %4417 = vmatpush1.msra.mxu0 0.0
    %4418 = vmatprep.subr.mxu0 0.0
    %4419 = vmatpush1.msra.mxu0 0.0
    %4420 = vmatprep.subr.mxu0 0.0
    %4421 = vmatpush1.msra.mxu0 0.0
    %4422 = vmatprep.subr.mxu0 0.0
    %4423 = vmatpush1.msra.mxu0 0.0
    %4424 = vmatprep.subr.mxu0 0.0
    %4425 = vmatpush1.msra.mxu0 0.0
    %4426 = vmatprep.subr.mxu0 0.0
    %4427 = vmatpush1.msra.mxu0 0.0
    %4428 = vmatprep.subr.mxu0 0.0
    %4429 = vmatpush1.msra.mxu0 0.0
    %4430 = vmatprep.mubr.f32.mxu0 0.0
    %4431 = vmatmul.mubr.f32.gmra.mrb[0].mxu0 %v3474
    %v4432 = vpop.f32.mrb[0].mxu0
    %v4433 = vadd.f32 %v3803, %v4432
    %v4434 = vpop.f32.mrb[0].mxu0
    %v4435 = vadd.f32 %v3807, %v4434
    %4436 = vmatprep.mubr.f32.mxu0 0.0
    %4437 = vmatmul.mubr.f32.gmra.mrb[0].mxu0 %v3479
    %v4438 = vpop.f32.mrb[0].mxu0
    %v4439 = vadd.f32 %v3803, %v4438
    %v4440 = vpop.f32.mrb[0].mxu0
    %v4441 = vadd.f32 %v3807, %v4440
    %4442 = vmatprep.mubr.f32.mxu0 0.0
    %4443 = vmatmul.mubr.f32.gmra.mrb[0].mxu0 %v3484
    %v4444 = vpop.f32.mrb[0].mxu0
    %v4445 = vadd.f32 %v3803, %v4444
    %v4446 = vpop.f32.mrb[0].mxu0
    %v4447 = vadd.f32 %v3807, %v4446
    %4448 = vmatprep.mubr.f32.mxu0 0.0
    %4449 = vmatmul.mubr.f32.gmra.mrb[0].mxu0 %v3489
    %v4450 = vpop.f32.mrb[0].mxu0
    %v4451 = vadd.f32 %v3803, %v4450
    %v4452 = vpop.f32.mrb[0].mxu0
    %v4453 = vadd.f32 %v3807, %v4452
    %4454 = vdwg.mxu0
    %4455 = vmatprep.subr.mxu0 %v3507
    %4456 = vmatpush1.msra.mxu0 %v3506
    %4457 = vmatprep.subr.mxu0 %v3523
    %4458 = vmatpush1.msra.mxu0 %v3522
    %4459 = vmatprep.subr.mxu0 %v3539
    %4460 = vmatpush1.msra.mxu0 %v3538
    %4461 = vmatprep.subr.mxu0 %v3555
    %4462 = vmatpush1.msra.mxu0 %v3554
    %4463 = vmatprep.subr.mxu0 %v3571
    %4464 = vmatpush1.msra.mxu0 %v3570
    %4465 = vmatprep.subr.mxu0 %v3587
    %4466 = vmatpush1.msra.mxu0 %v3586
    %4467 = vmatprep.subr.mxu0 %v3603
    %4468 = vmatpush1.msra.mxu0 %v3602
    %4469 = vmatprep.subr.mxu0 %v3619
    %4470 = vmatpush1.msra.mxu0 %v3618
    %4471 = vmatprep.subr.mxu0 %v3635
    %4472 = vmatpush1.msra.mxu0 %v3634
    %4473 = vmatprep.subr.mxu0 %v3651
    %4474 = vmatpush1.msra.mxu0 %v3650
    %4475 = vmatprep.subr.mxu0 %v3667
    %4476 = vmatpush1.msra.mxu0 %v3666
    %4477 = vmatprep.subr.mxu0 %v3683
    %4478 = vmatpush1.msra.mxu0 %v3682
    %4479 = vmatprep.subr.mxu0 %v3699
    %4480 = vmatpush1.msra.mxu0 %v3698
    %4481 = vmatprep.subr.mxu0 %v3715
    %4482 = vmatpush1.msra.mxu0 %v3714
    %4483 = vmatprep.subr.mxu0 %v3731
    %4484 = vmatpush1.msra.mxu0 %v3730
    %4485 = vmatprep.subr.mxu0 %v3747
    %4486 = vmatpush1.msra.mxu0 %v3746
    %4487 = vmatprep.subr.mxu0 0.0
    %4488 = vmatpush1.msra.mxu0 0.0
    %4489 = vmatprep.subr.mxu0 0.0
    %4490 = vmatpush1.msra.mxu0 0.0
    %4491 = vmatprep.subr.mxu0 0.0
    %4492 = vmatpush1.msra.mxu0 0.0
    %4493 = vmatprep.subr.mxu0 0.0
    %4494 = vmatpush1.msra.mxu0 0.0
    %4495 = vmatprep.subr.mxu0 0.0
    %4496 = vmatpush1.msra.mxu0 0.0
    %4497 = vmatprep.subr.mxu0 0.0
    %4498 = vmatpush1.msra.mxu0 0.0
    %4499 = vmatprep.subr.mxu0 0.0
    %4500 = vmatpush1.msra.mxu0 0.0
    %4501 = vmatprep.subr.mxu0 0.0
    %4502 = vmatpush1.msra.mxu0 0.0
    %4503 = vmatprep.subr.mxu0 0.0
    %4504 = vmatpush1.msra.mxu0 0.0
    %4505 = vmatprep.subr.mxu0 0.0
    %4506 = vmatpush1.msra.mxu0 0.0
    %4507 = vmatprep.subr.mxu0 0.0
    %4508 = vmatpush1.msra.mxu0 0.0
    %4509 = vmatprep.subr.mxu0 0.0
    %4510 = vmatpush1.msra.mxu0 0.0
    %4511 = vmatprep.subr.mxu0 0.0
    %4512 = vmatpush1.msra.mxu0 0.0
    %4513 = vmatprep.subr.mxu0 0.0
    %4514 = vmatpush1.msra.mxu0 0.0
    %4515 = vmatprep.subr.mxu0 0.0
    %4516 = vmatpush1.msra.mxu0 0.0
    %4517 = vmatprep.subr.mxu0 0.0
    %4518 = vmatpush1.msra.mxu0 0.0
    %4519 = vmatprep.mubr.f32.mxu0 0.0
    %4520 = vmatmul.mubr.f32.gmra.mrb[0].mxu0 %v3474
    %v4521 = vpop.f32.mrb[0].mxu0
    %v4522 = vadd.f32 %v3811, %v4521
    %v4523 = vpop.f32.mrb[0].mxu0
    %v4524 = vadd.f32 %v3815, %v4523
    %4525 = vmatprep.mubr.f32.mxu0 0.0
    %4526 = vmatmul.mubr.f32.gmra.mrb[0].mxu0 %v3479
    %v4527 = vpop.f32.mrb[0].mxu0
    %v4528 = vadd.f32 %v3811, %v4527
    %v4529 = vpop.f32.mrb[0].mxu0
    %v4530 = vadd.f32 %v3815, %v4529
    %4531 = vmatprep.mubr.f32.mxu0 0.0
    %4532 = vmatmul.mubr.f32.gmra.mrb[0].mxu0 %v3484
    %v4533 = vpop.f32.mrb[0].mxu0
    %v4534 = vadd.f32 %v3811, %v4533
    %v4535 = vpop.f32.mrb[0].mxu0
    %v4536 = vadd.f32 %v3815, %v4535
    %4537 = vmatprep.mubr.f32.mxu0 0.0
    %4538 = vmatmul.mubr.f32.gmra.mrb[0].mxu0 %v3489
    %v4539 = vpop.f32.mrb[0].mxu0
    %v4540 = vadd.f32 %v3811, %v4539
    %v4541 = vpop.f32.mrb[0].mxu0
    %v4542 = vadd.f32 %v3815, %v4541
    %4543 = vdwg.mxu0
    %v4544 = vld [vmem:[%s12] sm:$0xff]
    %v4545 = vld [vmem:[%s12 + $0x8] sm:$0xff]
    %v4546 = vld [vmem:[%s12 + $0x10] sm:$0xff]
    %v4547 = vld [vmem:[%s12 + $0x18] sm:$0xff]
    %v4548 = vld [vmem:[%s12 + $0x20] sm:$0xff]
    %v4549 = vld [vmem:[%s12 + $0x28] sm:$0xff]
    %v4550 = vld [vmem:[%s12 + $0x30] sm:$0xff]
    %v4551 = vld [vmem:[%s12 + $0x38] sm:$0xff]
    %v4552 = vld [vmem:[%s12 + $0x40] sm:$0xff]
    %v4553 = vld [vmem:[%s12 + $0x48] sm:$0xff]
    %v4554 = vld [vmem:[%s12 + $0x50] sm:$0xff]
    %v4555 = vld [vmem:[%s12 + $0x58] sm:$0xff]
    %v4556 = vld [vmem:[%s12 + $0x60] sm:$0xff]
    %v4557 = vld [vmem:[%s12 + $0x68] sm:$0xff]
    %v4558 = vld [vmem:[%s12 + $0x70] sm:$0xff]
    %v4559 = vld [vmem:[%s12 + $0x78] sm:$0xff]
    %v4560 = vld [vmem:[%s12 + $0x80] sm:$0xff]
    %v4561 = vld [vmem:[%s12 + $0x88] sm:$0xff]
    %v4562 = vld [vmem:[%s12 + $0x90] sm:$0xff]
    %v4563 = vld [vmem:[%s12 + $0x98] sm:$0xff]
    %v4564 = vld [vmem:[%s12 + $0xa0] sm:$0xff]
    %v4565 = vld [vmem:[%s12 + $0xa8] sm:$0xff]
    %v4566 = vld [vmem:[%s12 + $0xb0] sm:$0xff]
    %v4567 = vld [vmem:[%s12 + $0xb8] sm:$0xff]
    %v4568 = vld [vmem:[%s12 + $0xc0] sm:$0xff]
    %v4569 = vld [vmem:[%s12 + $0xc8] sm:$0xff]
    %v4570 = vld [vmem:[%s12 + $0xd0] sm:$0xff]
    %v4571 = vld [vmem:[%s12 + $0xd8] sm:$0xff]
    %v4572 = vld [vmem:[%s12 + $0xe0] sm:$0xff]
    %v4573 = vld [vmem:[%s12 + $0xe8] sm:$0xff]
    %v4574 = vld [vmem:[%s12 + $0xf0] sm:$0xff]
    %v4575 = vld [vmem:[%s12 + $0xf8] sm:$0xff]
    %v4576 = vld [vmem:[%s12 + $0x100] sm:$0xff]
    %v4577 = vld [vmem:[%s12 + $0x108] sm:$0xff]
    %v4578 = vld [vmem:[%s12 + $0x110] sm:$0xff]
    %v4579 = vld [vmem:[%s12 + $0x118] sm:$0xff]
    %v4580 = vld [vmem:[%s12 + $0x120] sm:$0xff]
    %v4581 = vld [vmem:[%s12 + $0x128] sm:$0xff]
    %v4582 = vld [vmem:[%s12 + $0x130] sm:$0xff]
    %v4583 = vld [vmem:[%s12 + $0x138] sm:$0xff]
    %v4584 = vld [vmem:[%s12 + $0x140] sm:$0xff]
    %v4585 = vld [vmem:[%s12 + $0x148] sm:$0xff]
    %v4586 = vld [vmem:[%s12 + $0x150] sm:$0xff]
    %v4587 = vld [vmem:[%s12 + $0x158] sm:$0xff]
    %v4588 = vld [vmem:[%s12 + $0x160] sm:$0xff]
    %v4589 = vld [vmem:[%s12 + $0x168] sm:$0xff]
    %v4590 = vld [vmem:[%s12 + $0x170] sm:$0xff]
    %v4591 = vld [vmem:[%s12 + $0x178] sm:$0xff]
    %v4592 = vld [vmem:[%s12 + $0x180] sm:$0xff]
    %v4593 = vld [vmem:[%s12 + $0x188] sm:$0xff]
    %v4594 = vld [vmem:[%s12 + $0x190] sm:$0xff]
    %v4595 = vld [vmem:[%s12 + $0x198] sm:$0xff]
    %v4596 = vld [vmem:[%s12 + $0x1a0] sm:$0xff]
    %v4597 = vld [vmem:[%s12 + $0x1a8] sm:$0xff]
    %v4598 = vld [vmem:[%s12 + $0x1b0] sm:$0xff]
    %v4599 = vld [vmem:[%s12 + $0x1b8] sm:$0xff]
    %v4600 = vld [vmem:[%s12 + $0x1c0] sm:$0xff]
    %v4601 = vld [vmem:[%s12 + $0x1c8] sm:$0xff]
    %v4602 = vld [vmem:[%s12 + $0x1d0] sm:$0xff]
    %v4603 = vld [vmem:[%s12 + $0x1d8] sm:$0xff]
    %v4604 = vld [vmem:[%s12 + $0x1e0] sm:$0xff]
    %v4605 = vld [vmem:[%s12 + $0x1e8] sm:$0xff]
    %v4606 = vld [vmem:[%s12 + $0x1f0] sm:$0xff]
    %v4607 = vld [vmem:[%s12 + $0x1f8] sm:$0xff]
    %v4608 = vld [vmem:[%s12 + $0x200] sm:$0xff]
    %v4609 = vld [vmem:[%s12 + $0x208] sm:$0xff]
    %v4610 = vld [vmem:[%s12 + $0x210] sm:$0xff]
    %v4611 = vld [vmem:[%s12 + $0x218] sm:$0xff]
    %v4612 = vld [vmem:[%s12 + $0x220] sm:$0xff]
    %v4613 = vld [vmem:[%s12 + $0x228] sm:$0xff]
    %v4614 = vld [vmem:[%s12 + $0x230] sm:$0xff]
    %v4615 = vld [vmem:[%s12 + $0x238] sm:$0xff]
    %v4616 = vld [vmem:[%s12 + $0x240] sm:$0xff]
    %v4617 = vld [vmem:[%s12 + $0x248] sm:$0xff]
    %v4618 = vld [vmem:[%s12 + $0x250] sm:$0xff]
    %v4619 = vld [vmem:[%s12 + $0x258] sm:$0xff]
    %v4620 = vld [vmem:[%s12 + $0x260] sm:$0xff]
    %v4621 = vld [vmem:[%s12 + $0x268] sm:$0xff]
    %v4622 = vld [vmem:[%s12 + $0x270] sm:$0xff]
    %v4623 = vld [vmem:[%s12 + $0x278] sm:$0xff]
    %v4624 = vld [vmem:[%s12 + $0x280] sm:$0xff]
    %v4625 = vld [vmem:[%s12 + $0x288] sm:$0xff]
    %v4626 = vld [vmem:[%s12 + $0x290] sm:$0xff]
    %v4627 = vld [vmem:[%s12 + $0x298] sm:$0xff]
    %v4628 = vld [vmem:[%s12 + $0x2a0] sm:$0xff]
    %v4629 = vld [vmem:[%s12 + $0x2a8] sm:$0xff]
    %v4630 = vld [vmem:[%s12 + $0x2b0] sm:$0xff]
    %v4631 = vld [vmem:[%s12 + $0x2b8] sm:$0xff]
    %v4632 = vld [vmem:[%s12 + $0x2c0] sm:$0xff]
    %v4633 = vld [vmem:[%s12 + $0x2c8] sm:$0xff]
    %v4634 = vld [vmem:[%s12 + $0x2d0] sm:$0xff]
    %v4635 = vld [vmem:[%s12 + $0x2d8] sm:$0xff]
    %v4636 = vld [vmem:[%s12 + $0x2e0] sm:$0xff]
    %v4637 = vld [vmem:[%s12 + $0x2e8] sm:$0xff]
    %v4638 = vld [vmem:[%s12 + $0x2f0] sm:$0xff]
    %v4639 = vld [vmem:[%s12 + $0x2f8] sm:$0xff]
    %v4640 = vld [vmem:[%s12 + $0x300] sm:$0xff]
    %v4641 = vld [vmem:[%s12 + $0x308] sm:$0xff]
    %v4642 = vld [vmem:[%s12 + $0x310] sm:$0xff]
    %v4643 = vld [vmem:[%s12 + $0x318] sm:$0xff]
    %v4644 = vld [vmem:[%s12 + $0x320] sm:$0xff]
    %v4645 = vld [vmem:[%s12 + $0x328] sm:$0xff]
    %v4646 = vld [vmem:[%s12 + $0x330] sm:$0xff]
    %v4647 = vld [vmem:[%s12 + $0x338] sm:$0xff]
    %v4648 = vld [vmem:[%s12 + $0x340] sm:$0xff]
    %v4649 = vld [vmem:[%s12 + $0x348] sm:$0xff]
    %v4650 = vld [vmem:[%s12 + $0x350] sm:$0xff]
    %v4651 = vld [vmem:[%s12 + $0x358] sm:$0xff]
    %v4652 = vld [vmem:[%s12 + $0x360] sm:$0xff]
    %v4653 = vld [vmem:[%s12 + $0x368] sm:$0xff]
    %v4654 = vld [vmem:[%s12 + $0x370] sm:$0xff]
    %v4655 = vld [vmem:[%s12 + $0x378] sm:$0xff]
    %v4656 = vld [vmem:[%s12 + $0x380] sm:$0xff]
    %v4657 = vld [vmem:[%s12 + $0x388] sm:$0xff]
    %v4658 = vld [vmem:[%s12 + $0x390] sm:$0xff]
    %v4659 = vld [vmem:[%s12 + $0x398] sm:$0xff]
    %v4660 = vld [vmem:[%s12 + $0x3a0] sm:$0xff]
    %v4661 = vld [vmem:[%s12 + $0x3a8] sm:$0xff]
    %v4662 = vld [vmem:[%s12 + $0x3b0] sm:$0xff]
    %v4663 = vld [vmem:[%s12 + $0x3b8] sm:$0xff]
    %v4664 = vld [vmem:[%s12 + $0x3c0] sm:$0xff]
    %v4665 = vld [vmem:[%s12 + $0x3c8] sm:$0xff]
    %v4666 = vld [vmem:[%s12 + $0x3d0] sm:$0xff]
    %v4667 = vld [vmem:[%s12 + $0x3d8] sm:$0xff]
    %v4668 = vld [vmem:[%s12 + $0x3e0] sm:$0xff]
    %v4669 = vld [vmem:[%s12 + $0x3e8] sm:$0xff]
    %v4670 = vld [vmem:[%s12 + $0x3f0] sm:$0xff]
    %v4671 = vld [vmem:[%s12 + $0x3f8] sm:$0xff]
    %v4672 = vld [vmem:[%s12 + $0x400] sm:$0xff]
    %v4673 = vld [vmem:[%s12 + $0x408] sm:$0xff]
    %v4674 = vld [vmem:[%s12 + $0x410] sm:$0xff]
    %v4675 = vld [vmem:[%s12 + $0x418] sm:$0xff]
    %v4676 = vld [vmem:[%s12 + $0x420] sm:$0xff]
    %v4677 = vld [vmem:[%s12 + $0x428] sm:$0xff]
    %v4678 = vld [vmem:[%s12 + $0x430] sm:$0xff]
    %v4679 = vld [vmem:[%s12 + $0x438] sm:$0xff]
    %v4680 = vld [vmem:[%s12 + $0x440] sm:$0xff]
    %v4681 = vld [vmem:[%s12 + $0x448] sm:$0xff]
    %v4682 = vld [vmem:[%s12 + $0x450] sm:$0xff]
    %v4683 = vld [vmem:[%s12 + $0x458] sm:$0xff]
    %v4684 = vld [vmem:[%s12 + $0x460] sm:$0xff]
    %v4685 = vld [vmem:[%s12 + $0x468] sm:$0xff]
    %v4686 = vld [vmem:[%s12 + $0x470] sm:$0xff]
    %v4687 = vld [vmem:[%s12 + $0x478] sm:$0xff]
    %v4688 = vld [vmem:[%s12 + $0x480] sm:$0xff]
    %v4689 = vld [vmem:[%s12 + $0x488] sm:$0xff]
    %v4690 = vld [vmem:[%s12 + $0x490] sm:$0xff]
    %v4691 = vld [vmem:[%s12 + $0x498] sm:$0xff]
    %v4692 = vld [vmem:[%s12 + $0x4a0] sm:$0xff]
    %v4693 = vld [vmem:[%s12 + $0x4a8] sm:$0xff]
    %v4694 = vld [vmem:[%s12 + $0x4b0] sm:$0xff]
    %v4695 = vld [vmem:[%s12 + $0x4b8] sm:$0xff]
    %v4696 = vld [vmem:[%s12 + $0x4c0] sm:$0xff]
    %v4697 = vld [vmem:[%s12 + $0x4c8] sm:$0xff]
    %v4698 = vld [vmem:[%s12 + $0x4d0] sm:$0xff]
    %v4699 = vld [vmem:[%s12 + $0x4d8] sm:$0xff]
    %v4700 = vld [vmem:[%s12 + $0x4e0] sm:$0xff]
    %v4701 = vld [vmem:[%s12 + $0x4e8] sm:$0xff]
    %v4702 = vld [vmem:[%s12 + $0x4f0] sm:$0xff]
    %v4703 = vld [vmem:[%s12 + $0x4f8] sm:$0xff]
    %v4704 = vld [vmem:[%s12 + $0x500] sm:$0xff]
    %v4705 = vld [vmem:[%s12 + $0x508] sm:$0xff]
    %v4706 = vld [vmem:[%s12 + $0x510] sm:$0xff]
    %v4707 = vld [vmem:[%s12 + $0x518] sm:$0xff]
    %v4708 = vld [vmem:[%s12 + $0x520] sm:$0xff]
    %v4709 = vld [vmem:[%s12 + $0x528] sm:$0xff]
    %v4710 = vld [vmem:[%s12 + $0x530] sm:$0xff]
    %v4711 = vld [vmem:[%s12 + $0x538] sm:$0xff]
    %v4712 = vld [vmem:[%s12 + $0x540] sm:$0xff]
    %v4713 = vld [vmem:[%s12 + $0x548] sm:$0xff]
    %v4714 = vld [vmem:[%s12 + $0x550] sm:$0xff]
    %v4715 = vld [vmem:[%s12 + $0x558] sm:$0xff]
    %v4716 = vld [vmem:[%s12 + $0x560] sm:$0xff]
    %v4717 = vld [vmem:[%s12 + $0x568] sm:$0xff]
    %v4718 = vld [vmem:[%s12 + $0x570] sm:$0xff]
    %v4719 = vld [vmem:[%s12 + $0x578] sm:$0xff]
    %v4720 = vld [vmem:[%s12 + $0x580] sm:$0xff]
    %v4721 = vld [vmem:[%s12 + $0x588] sm:$0xff]
    %v4722 = vld [vmem:[%s12 + $0x590] sm:$0xff]
    %v4723 = vld [vmem:[%s12 + $0x598] sm:$0xff]
    %v4724 = vld [vmem:[%s12 + $0x5a0] sm:$0xff]
    %v4725 = vld [vmem:[%s12 + $0x5a8] sm:$0xff]
    %v4726 = vld [vmem:[%s12 + $0x5b0] sm:$0xff]
    %v4727 = vld [vmem:[%s12 + $0x5b8] sm:$0xff]
    %v4728 = vld [vmem:[%s12 + $0x5c0] sm:$0xff]
    %v4729 = vld [vmem:[%s12 + $0x5c8] sm:$0xff]
    %v4730 = vld [vmem:[%s12 + $0x5d0] sm:$0xff]
    %v4731 = vld [vmem:[%s12 + $0x5d8] sm:$0xff]
    %v4732 = vld [vmem:[%s12 + $0x5e0] sm:$0xff]
    %v4733 = vld [vmem:[%s12 + $0x5e8] sm:$0xff]
    %v4734 = vld [vmem:[%s12 + $0x5f0] sm:$0xff]
    %v4735 = vld [vmem:[%s12 + $0x5f8] sm:$0xff]
    %v4736 = vld [vmem:[%s12 + $0x600] sm:$0xff]
    %v4737 = vld [vmem:[%s12 + $0x608] sm:$0xff]
    %v4738 = vld [vmem:[%s12 + $0x610] sm:$0xff]
    %v4739 = vld [vmem:[%s12 + $0x618] sm:$0xff]
    %v4740 = vld [vmem:[%s12 + $0x620] sm:$0xff]
    %v4741 = vld [vmem:[%s12 + $0x628] sm:$0xff]
    %v4742 = vld [vmem:[%s12 + $0x630] sm:$0xff]
    %v4743 = vld [vmem:[%s12 + $0x638] sm:$0xff]
    %v4744 = vld [vmem:[%s12 + $0x640] sm:$0xff]
    %v4745 = vld [vmem:[%s12 + $0x648] sm:$0xff]
    %v4746 = vld [vmem:[%s12 + $0x650] sm:$0xff]
    %v4747 = vld [vmem:[%s12 + $0x658] sm:$0xff]
    %v4748 = vld [vmem:[%s12 + $0x660] sm:$0xff]
    %v4749 = vld [vmem:[%s12 + $0x668] sm:$0xff]
    %v4750 = vld [vmem:[%s12 + $0x670] sm:$0xff]
    %v4751 = vld [vmem:[%s12 + $0x678] sm:$0xff]
    %v4752 = vld [vmem:[%s12 + $0x680] sm:$0xff]
    %v4753 = vld [vmem:[%s12 + $0x688] sm:$0xff]
    %v4754 = vld [vmem:[%s12 + $0x690] sm:$0xff]
    %v4755 = vld [vmem:[%s12 + $0x698] sm:$0xff]
    %v4756 = vld [vmem:[%s12 + $0x6a0] sm:$0xff]
    %v4757 = vld [vmem:[%s12 + $0x6a8] sm:$0xff]
    %v4758 = vld [vmem:[%s12 + $0x6b0] sm:$0xff]
    %v4759 = vld [vmem:[%s12 + $0x6b8] sm:$0xff]
    %v4760 = vld [vmem:[%s12 + $0x6c0] sm:$0xff]
    %v4761 = vld [vmem:[%s12 + $0x6c8] sm:$0xff]
    %v4762 = vld [vmem:[%s12 + $0x6d0] sm:$0xff]
    %v4763 = vld [vmem:[%s12 + $0x6d8] sm:$0xff]
    %v4764 = vld [vmem:[%s12 + $0x6e0] sm:$0xff]
    %v4765 = vld [vmem:[%s12 + $0x6e8] sm:$0xff]
    %v4766 = vld [vmem:[%s12 + $0x6f0] sm:$0xff]
    %v4767 = vld [vmem:[%s12 + $0x6f8] sm:$0xff]
    %v4768 = vld [vmem:[%s12 + $0x700] sm:$0xff]
    %v4769 = vld [vmem:[%s12 + $0x708] sm:$0xff]
    %v4770 = vld [vmem:[%s12 + $0x710] sm:$0xff]
    %v4771 = vld [vmem:[%s12 + $0x718] sm:$0xff]
    %v4772 = vld [vmem:[%s12 + $0x720] sm:$0xff]
    %v4773 = vld [vmem:[%s12 + $0x728] sm:$0xff]
    %v4774 = vld [vmem:[%s12 + $0x730] sm:$0xff]
    %v4775 = vld [vmem:[%s12 + $0x738] sm:$0xff]
    %v4776 = vld [vmem:[%s12 + $0x740] sm:$0xff]
    %v4777 = vld [vmem:[%s12 + $0x748] sm:$0xff]
    %v4778 = vld [vmem:[%s12 + $0x750] sm:$0xff]
    %v4779 = vld [vmem:[%s12 + $0x758] sm:$0xff]
    %v4780 = vld [vmem:[%s12 + $0x760] sm:$0xff]
    %v4781 = vld [vmem:[%s12 + $0x768] sm:$0xff]
    %v4782 = vld [vmem:[%s12 + $0x770] sm:$0xff]
    %v4783 = vld [vmem:[%s12 + $0x778] sm:$0xff]
    %v4784 = vld [vmem:[%s12 + $0x780] sm:$0xff]
    %v4785 = vld [vmem:[%s12 + $0x788] sm:$0xff]
    %v4786 = vld [vmem:[%s12 + $0x790] sm:$0xff]
    %v4787 = vld [vmem:[%s12 + $0x798] sm:$0xff]
    %v4788 = vld [vmem:[%s12 + $0x7a0] sm:$0xff]
    %v4789 = vld [vmem:[%s12 + $0x7a8] sm:$0xff]
    %v4790 = vld [vmem:[%s12 + $0x7b0] sm:$0xff]
    %v4791 = vld [vmem:[%s12 + $0x7b8] sm:$0xff]
    %v4792 = vld [vmem:[%s12 + $0x7c0] sm:$0xff]
    %v4793 = vld [vmem:[%s12 + $0x7c8] sm:$0xff]
    %v4794 = vld [vmem:[%s12 + $0x7d0] sm:$0xff]
    %v4795 = vld [vmem:[%s12 + $0x7d8] sm:$0xff]
    %v4796 = vld [vmem:[%s12 + $0x7e0] sm:$0xff]
    %v4797 = vld [vmem:[%s12 + $0x7e8] sm:$0xff]
    %v4798 = vld [vmem:[%s12 + $0x7f0] sm:$0xff]
    %v4799 = vld [vmem:[%s12 + $0x7f8] sm:$0xff]
    %v4800 = vld [vmem:[%s13] sm:$0x1]
    %v4802 = vlaneseq
    %v4803 = vshrl.u32 %v4802, 7
    %v4804 = vsub.s32 0, %v4803
    %v4805 = vrot.slane %v4800, %v4804
    %4807 = vmatprep.subr.mxu0 0.0
    %4808 = vmatpush1.msra.mxu0 %v4544
    %4809 = vmatprep.subr.mxu0 0.0
    %4810 = vmatpush1.msra.mxu0 %v4545
    %4811 = vmatprep.subr.mxu0 0.0
    %4812 = vmatpush1.msra.mxu0 %v4546
    %4813 = vmatprep.subr.mxu0 0.0
    %4814 = vmatpush1.msra.mxu0 %v4547
    %4815 = vmatprep.subr.mxu0 0.0
    %4816 = vmatpush1.msra.mxu0 %v4548
    %4817 = vmatprep.subr.mxu0 0.0
    %4818 = vmatpush1.msra.mxu0 %v4549
    %4819 = vmatprep.subr.mxu0 0.0
    %4820 = vmatpush1.msra.mxu0 %v4550
    %4821 = vmatprep.subr.mxu0 0.0
    %4822 = vmatpush1.msra.mxu0 %v4551
    %4823 = vmatprep.subr.mxu0 0.0
    %4824 = vmatpush1.msra.mxu0 %v4552
    %4825 = vmatprep.subr.mxu0 0.0
    %4826 = vmatpush1.msra.mxu0 %v4553
    %4827 = vmatprep.subr.mxu0 0.0
    %4828 = vmatpush1.msra.mxu0 %v4554
    %4829 = vmatprep.subr.mxu0 0.0
    %4830 = vmatpush1.msra.mxu0 %v4555
    %4831 = vmatprep.subr.mxu0 0.0
    %4832 = vmatpush1.msra.mxu0 %v4556
    %4833 = vmatprep.subr.mxu0 0.0
    %4834 = vmatpush1.msra.mxu0 %v4557
    %4835 = vmatprep.subr.mxu0 0.0
    %4836 = vmatpush1.msra.mxu0 %v4558
    %4837 = vmatprep.subr.mxu0 0.0
    %4838 = vmatpush1.msra.mxu0 %v4559
    %4839 = vmatprep.subr.mxu0 0.0
    %4840 = vmatpush1.msra.mxu0 %v4560
    %4841 = vmatprep.subr.mxu0 0.0
    %4842 = vmatpush1.msra.mxu0 %v4561
    %4843 = vmatprep.subr.mxu0 0.0
    %4844 = vmatpush1.msra.mxu0 %v4562
    %4845 = vmatprep.subr.mxu0 0.0
    %4846 = vmatpush1.msra.mxu0 %v4563
    %4847 = vmatprep.subr.mxu0 0.0
    %4848 = vmatpush1.msra.mxu0 %v4564
    %4849 = vmatprep.subr.mxu0 0.0
    %4850 = vmatpush1.msra.mxu0 %v4565
    %4851 = vmatprep.subr.mxu0 0.0
    %4852 = vmatpush1.msra.mxu0 %v4566
    %4853 = vmatprep.subr.mxu0 0.0
    %4854 = vmatpush1.msra.mxu0 %v4567
    %4855 = vmatprep.subr.mxu0 0.0
    %4856 = vmatpush1.msra.mxu0 %v4568
    %4857 = vmatprep.subr.mxu0 0.0
    %4858 = vmatpush1.msra.mxu0 %v4569
    %4859 = vmatprep.subr.mxu0 0.0
    %4860 = vmatpush1.msra.mxu0 %v4570
    %4861 = vmatprep.subr.mxu0 0.0
    %4862 = vmatpush1.msra.mxu0 %v4571
    %4863 = vmatprep.subr.mxu0 0.0
    %4864 = vmatpush1.msra.mxu0 %v4572
    %4865 = vmatprep.subr.mxu0 0.0
    %4866 = vmatpush1.msra.mxu0 %v4573
    %4867 = vmatprep.subr.mxu0 0.0
    %4868 = vmatpush1.msra.mxu0 %v4574
    %4869 = vmatprep.subr.mxu0 0.0
    %4870 = vmatpush1.msra.mxu0 %v4575
    %4871 = vmatprep.mubr.f32.mxu0 %v3901
    %4872 = vmatmul.mubr.f32.gmra.mrb[0].mxu0 %v3899
    %v4873 = vpop.f32.mrb[0].mxu0
    %v4874 = vadd.f32 %v4805, %v4873
    %v4875 = vpop.f32.mrb[0].mxu0
    %4876 = vmatprep.mubr.f32.mxu0 %v3907
    %4877 = vmatmul.mubr.f32.gmra.mrb[0].mxu0 %v3905
    %v4878 = vpop.f32.mrb[0].mxu0
    %v4879 = vadd.f32 %v4805, %v4878
    %v4880 = vpop.f32.mrb[0].mxu0
    %4881 = vmatprep.mubr.f32.mxu0 %v3913
    %4882 = vmatmul.mubr.f32.gmra.mrb[0].mxu0 %v3911
    %v4883 = vpop.f32.mrb[0].mxu0
    %v4884 = vadd.f32 %v4805, %v4883
    %v4885 = vpop.f32.mrb[0].mxu0
    %4886 = vmatprep.mubr.f32.mxu0 %v3919
    %4887 = vmatmul.mubr.f32.gmra.mrb[0].mxu0 %v3917
    %v4888 = vpop.f32.mrb[0].mxu0
    %v4889 = vadd.f32 %v4805, %v4888
    %v4890 = vpop.f32.mrb[0].mxu0
    %4891 = vdwg.mxu0
    %4892 = vmatprep.subr.mxu0 0.0
    %4893 = vmatpush1.msra.mxu0 %v4576
    %4894 = vmatprep.subr.mxu0 0.0
    %4895 = vmatpush1.msra.mxu0 %v4577
    %4896 = vmatprep.subr.mxu0 0.0
    %4897 = vmatpush1.msra.mxu0 %v4578
    %4898 = vmatprep.subr.mxu0 0.0
    %4899 = vmatpush1.msra.mxu0 %v4579
    %4900 = vmatprep.subr.mxu0 0.0
    %4901 = vmatpush1.msra.mxu0 %v4580
    %4902 = vmatprep.subr.mxu0 0.0
    %4903 = vmatpush1.msra.mxu0 %v4581
    %4904 = vmatprep.subr.mxu0 0.0
    %4905 = vmatpush1.msra.mxu0 %v4582
    %4906 = vmatprep.subr.mxu0 0.0
    %4907 = vmatpush1.msra.mxu0 %v4583
    %4908 = vmatprep.subr.mxu0 0.0
    %4909 = vmatpush1.msra.mxu0 %v4584
    %4910 = vmatprep.subr.mxu0 0.0
    %4911 = vmatpush1.msra.mxu0 %v4585
    %4912 = vmatprep.subr.mxu0 0.0
    %4913 = vmatpush1.msra.mxu0 %v4586
    %4914 = vmatprep.subr.mxu0 0.0
    %4915 = vmatpush1.msra.mxu0 %v4587
    %4916 = vmatprep.subr.mxu0 0.0
    %4917 = vmatpush1.msra.mxu0 %v4588
    %4918 = vmatprep.subr.mxu0 0.0
    %4919 = vmatpush1.msra.mxu0 %v4589
    %4920 = vmatprep.subr.mxu0 0.0
    %4921 = vmatpush1.msra.mxu0 %v4590
    %4922 = vmatprep.subr.mxu0 0.0
    %4923 = vmatpush1.msra.mxu0 %v4591
    %4924 = vmatprep.subr.mxu0 0.0
    %4925 = vmatpush1.msra.mxu0 %v4592
    %4926 = vmatprep.subr.mxu0 0.0
    %4927 = vmatpush1.msra.mxu0 %v4593
    %4928 = vmatprep.subr.mxu0 0.0
    %4929 = vmatpush1.msra.mxu0 %v4594
    %4930 = vmatprep.subr.mxu0 0.0
    %4931 = vmatpush1.msra.mxu0 %v4595
    %4932 = vmatprep.subr.mxu0 0.0
    %4933 = vmatpush1.msra.mxu0 %v4596
    %4934 = vmatprep.subr.mxu0 0.0
    %4935 = vmatpush1.msra.mxu0 %v4597
    %4936 = vmatprep.subr.mxu0 0.0
    %4937 = vmatpush1.msra.mxu0 %v4598
    %4938 = vmatprep.subr.mxu0 0.0
    %4939 = vmatpush1.msra.mxu0 %v4599
    %4940 = vmatprep.subr.mxu0 0.0
    %4941 = vmatpush1.msra.mxu0 %v4600
    %4942 = vmatprep.subr.mxu0 0.0
    %4943 = vmatpush1.msra.mxu0 %v4601
    %4944 = vmatprep.subr.mxu0 0.0
    %4945 = vmatpush1.msra.mxu0 %v4602
    %4946 = vmatprep.subr.mxu0 0.0
    %4947 = vmatpush1.msra.mxu0 %v4603
    %4948 = vmatprep.subr.mxu0 0.0
    %4949 = vmatpush1.msra.mxu0 %v4604
    %4950 = vmatprep.subr.mxu0 0.0
    %4951 = vmatpush1.msra.mxu0 %v4605
    %4952 = vmatprep.subr.mxu0 0.0
    %4953 = vmatpush1.msra.mxu0 %v4606
    %4954 = vmatprep.subr.mxu0 0.0
    %4955 = vmatpush1.msra.mxu0 %v4607
    %4956 = vmatprep.mubr.f32.mxu0 %v3990
    %4957 = vmatmul.mubr.f32.gmra.mrb[0].mxu0 %v3988
    %v4958 = vpop.f32.mrb[0].mxu0
    %v4959 = vadd.f32 %v4874, %v4958
    %v4960 = vpop.f32.mrb[0].mxu0
    %4961 = vmatprep.mubr.f32.mxu0 %v3996
    %4962 = vmatmul.mubr.f32.gmra.mrb[0].mxu0 %v3994
    %v4963 = vpop.f32.mrb[0].mxu0
    %v4964 = vadd.f32 %v4879, %v4963
    %v4965 = vpop.f32.mrb[0].mxu0
    %4966 = vmatprep.mubr.f32.mxu0 %v4002
    %4967 = vmatmul.mubr.f32.gmra.mrb[0].mxu0 %v4000
    %v4968 = vpop.f32.mrb[0].mxu0
    %v4969 = vadd.f32 %v4884, %v4968
    %v4970 = vpop.f32.mrb[0].mxu0
    %4971 = vmatprep.mubr.f32.mxu0 %v4008
    %4972 = vmatmul.mubr.f32.gmra.mrb[0].mxu0 %v4006
    %v4973 = vpop.f32.mrb[0].mxu0
    %v4974 = vadd.f32 %v4889, %v4973
    %v4975 = vpop.f32.mrb[0].mxu0
    %4976 = vdwg.mxu0
    %4977 = vmatprep.subr.mxu0 0.0
    %4978 = vmatpush1.msra.mxu0 %v4608
    %4979 = vmatprep.subr.mxu0 0.0
    %4980 = vmatpush1.msra.mxu0 %v4609
    %4981 = vmatprep.subr.mxu0 0.0
    %4982 = vmatpush1.msra.mxu0 %v4610
    %4983 = vmatprep.subr.mxu0 0.0
    %4984 = vmatpush1.msra.mxu0 %v4611
    %4985 = vmatprep.subr.mxu0 0.0
    %4986 = vmatpush1.msra.mxu0 %v4612
    %4987 = vmatprep.subr.mxu0 0.0
    %4988 = vmatpush1.msra.mxu0 %v4613
    %4989 = vmatprep.subr.mxu0 0.0
    %4990 = vmatpush1.msra.mxu0 %v4614
    %4991 = vmatprep.subr.mxu0 0.0
    %4992 = vmatpush1.msra.mxu0 %v4615
    %4993 = vmatprep.subr.mxu0 0.0
    %4994 = vmatpush1.msra.mxu0 %v4616
    %4995 = vmatprep.subr.mxu0 0.0
    %4996 = vmatpush1.msra.mxu0 %v4617
    %4997 = vmatprep.subr.mxu0 0.0
    %4998 = vmatpush1.msra.mxu0 %v4618
    %4999 = vmatprep.subr.mxu0 0.0
    %5000 = vmatpush1.msra.mxu0 %v4619
    %5001 = vmatprep.subr.mxu0 0.0
    %5002 = vmatpush1.msra.mxu0 %v4620
    %5003 = vmatprep.subr.mxu0 0.0
    %5004 = vmatpush1.msra.mxu0 %v4621
    %5005 = vmatprep.subr.mxu0 0.0
    %5006 = vmatpush1.msra.mxu0 %v4622
    %5007 = vmatprep.subr.mxu0 0.0
    %5008 = vmatpush1.msra.mxu0 %v4623
    %5009 = vmatprep.subr.mxu0 0.0
    %5010 = vmatpush1.msra.mxu0 %v4624
    %5011 = vmatprep.subr.mxu0 0.0
    %5012 = vmatpush1.msra.mxu0 %v4625
    %5013 = vmatprep.subr.mxu0 0.0
    %5014 = vmatpush1.msra.mxu0 %v4626
    %5015 = vmatprep.subr.mxu0 0.0
    %5016 = vmatpush1.msra.mxu0 %v4627
    %5017 = vmatprep.subr.mxu0 0.0
    %5018 = vmatpush1.msra.mxu0 %v4628
    %5019 = vmatprep.subr.mxu0 0.0
    %5020 = vmatpush1.msra.mxu0 %v4629
    %5021 = vmatprep.subr.mxu0 0.0
    %5022 = vmatpush1.msra.mxu0 %v4630
    %5023 = vmatprep.subr.mxu0 0.0
    %5024 = vmatpush1.msra.mxu0 %v4631
    %5025 = vmatprep.subr.mxu0 0.0
    %5026 = vmatpush1.msra.mxu0 %v4632
    %5027 = vmatprep.subr.mxu0 0.0
    %5028 = vmatpush1.msra.mxu0 %v4633
    %5029 = vmatprep.subr.mxu0 0.0
    %5030 = vmatpush1.msra.mxu0 %v4634
    %5031 = vmatprep.subr.mxu0 0.0
    %5032 = vmatpush1.msra.mxu0 %v4635
    %5033 = vmatprep.subr.mxu0 0.0
    %5034 = vmatpush1.msra.mxu0 %v4636
    %5035 = vmatprep.subr.mxu0 0.0
    %5036 = vmatpush1.msra.mxu0 %v4637
    %5037 = vmatprep.subr.mxu0 0.0
    %5038 = vmatpush1.msra.mxu0 %v4638
    %5039 = vmatprep.subr.mxu0 0.0
    %5040 = vmatpush1.msra.mxu0 %v4639
    %5041 = vmatprep.mubr.f32.mxu0 %v4079
    %5042 = vmatmul.mubr.f32.gmra.mrb[0].mxu0 %v4077
    %v5043 = vpop.f32.mrb[0].mxu0
    %v5044 = vadd.f32 %v4959, %v5043
    %v5045 = vpop.f32.mrb[0].mxu0
    %5046 = vmatprep.mubr.f32.mxu0 %v4085
    %5047 = vmatmul.mubr.f32.gmra.mrb[0].mxu0 %v4083
    %v5048 = vpop.f32.mrb[0].mxu0
    %v5049 = vadd.f32 %v4964, %v5048
    %v5050 = vpop.f32.mrb[0].mxu0
    %5051 = vmatprep.mubr.f32.mxu0 %v4091
    %5052 = vmatmul.mubr.f32.gmra.mrb[0].mxu0 %v4089
    %v5053 = vpop.f32.mrb[0].mxu0
    %v5054 = vadd.f32 %v4969, %v5053
    %v5055 = vpop.f32.mrb[0].mxu0
    %5056 = vmatprep.mubr.f32.mxu0 %v4097
    %5057 = vmatmul.mubr.f32.gmra.mrb[0].mxu0 %v4095
    %v5058 = vpop.f32.mrb[0].mxu0
    %v5059 = vadd.f32 %v4974, %v5058
    %v5060 = vpop.f32.mrb[0].mxu0
    %5061 = vdwg.mxu0
    %5062 = vmatprep.subr.mxu0 0.0
    %5063 = vmatpush1.msra.mxu0 %v4640
    %5064 = vmatprep.subr.mxu0 0.0
    %5065 = vmatpush1.msra.mxu0 %v4641
    %5066 = vmatprep.subr.mxu0 0.0
    %5067 = vmatpush1.msra.mxu0 %v4642
    %5068 = vmatprep.subr.mxu0 0.0
    %5069 = vmatpush1.msra.mxu0 %v4643
    %5070 = vmatprep.subr.mxu0 0.0
    %5071 = vmatpush1.msra.mxu0 %v4644
    %5072 = vmatprep.subr.mxu0 0.0
    %5073 = vmatpush1.msra.mxu0 %v4645
    %5074 = vmatprep.subr.mxu0 0.0
    %5075 = vmatpush1.msra.mxu0 %v4646
    %5076 = vmatprep.subr.mxu0 0.0
    %5077 = vmatpush1.msra.mxu0 %v4647
    %5078 = vmatprep.subr.mxu0 0.0
    %5079 = vmatpush1.msra.mxu0 %v4648
    %5080 = vmatprep.subr.mxu0 0.0
    %5081 = vmatpush1.msra.mxu0 %v4649
    %5082 = vmatprep.subr.mxu0 0.0
    %5083 = vmatpush1.msra.mxu0 %v4650
    %5084 = vmatprep.subr.mxu0 0.0
    %5085 = vmatpush1.msra.mxu0 %v4651
    %5086 = vmatprep.subr.mxu0 0.0
    %5087 = vmatpush1.msra.mxu0 %v4652
    %5088 = vmatprep.subr.mxu0 0.0
    %5089 = vmatpush1.msra.mxu0 %v4653
    %5090 = vmatprep.subr.mxu0 0.0
    %5091 = vmatpush1.msra.mxu0 %v4654
    %5092 = vmatprep.subr.mxu0 0.0
    %5093 = vmatpush1.msra.mxu0 %v4655
    %5094 = vmatprep.subr.mxu0 0.0
    %5095 = vmatpush1.msra.mxu0 %v4656
    %5096 = vmatprep.subr.mxu0 0.0
    %5097 = vmatpush1.msra.mxu0 %v4657
    %5098 = vmatprep.subr.mxu0 0.0
    %5099 = vmatpush1.msra.mxu0 %v4658
    %5100 = vmatprep.subr.mxu0 0.0
    %5101 = vmatpush1.msra.mxu0 %v4659
    %5102 = vmatprep.subr.mxu0 0.0
    %5103 = vmatpush1.msra.mxu0 %v4660
    %5104 = vmatprep.subr.mxu0 0.0
    %5105 = vmatpush1.msra.mxu0 %v4661
    %5106 = vmatprep.subr.mxu0 0.0
    %5107 = vmatpush1.msra.mxu0 %v4662
    %5108 = vmatprep.subr.mxu0 0.0
    %5109 = vmatpush1.msra.mxu0 %v4663
    %5110 = vmatprep.subr.mxu0 0.0
    %5111 = vmatpush1.msra.mxu0 %v4664
    %5112 = vmatprep.subr.mxu0 0.0
    %5113 = vmatpush1.msra.mxu0 %v4665
    %5114 = vmatprep.subr.mxu0 0.0
    %5115 = vmatpush1.msra.mxu0 %v4666
    %5116 = vmatprep.subr.mxu0 0.0
    %5117 = vmatpush1.msra.mxu0 %v4667
    %5118 = vmatprep.subr.mxu0 0.0
    %5119 = vmatpush1.msra.mxu0 %v4668
    %5120 = vmatprep.subr.mxu0 0.0
    %5121 = vmatpush1.msra.mxu0 %v4669
    %5122 = vmatprep.subr.mxu0 0.0
    %5123 = vmatpush1.msra.mxu0 %v4670
    %5124 = vmatprep.subr.mxu0 0.0
    %5125 = vmatpush1.msra.mxu0 %v4671
    %5126 = vmatprep.mubr.f32.mxu0 %v4168
    %5127 = vmatmul.mubr.f32.gmra.mrb[0].mxu0 %v4166
    %v5128 = vpop.f32.mrb[0].mxu0
    %v5129 = vadd.f32 %v5044, %v5128
    %v5130 = vpop.f32.mrb[0].mxu0
    %5131 = vmatprep.mubr.f32.mxu0 %v4174
    %5132 = vmatmul.mubr.f32.gmra.mrb[0].mxu0 %v4172
    %v5133 = vpop.f32.mrb[0].mxu0
    %v5134 = vadd.f32 %v5049, %v5133
    %v5135 = vpop.f32.mrb[0].mxu0
    %5136 = vmatprep.mubr.f32.mxu0 %v4180
    %5137 = vmatmul.mubr.f32.gmra.mrb[0].mxu0 %v4178
    %v5138 = vpop.f32.mrb[0].mxu0
    %v5139 = vadd.f32 %v5054, %v5138
    %v5140 = vpop.f32.mrb[0].mxu0
    %5141 = vmatprep.mubr.f32.mxu0 %v4186
    %5142 = vmatmul.mubr.f32.gmra.mrb[0].mxu0 %v4184
    %v5143 = vpop.f32.mrb[0].mxu0
    %v5144 = vadd.f32 %v5059, %v5143
    %v5145 = vpop.f32.mrb[0].mxu0
    %5146 = vdwg.mxu0
    %5147 = vmatprep.subr.mxu0 0.0
    %5148 = vmatpush1.msra.mxu0 %v4672
    %5149 = vmatprep.subr.mxu0 0.0
    %5150 = vmatpush1.msra.mxu0 %v4673
    %5151 = vmatprep.subr.mxu0 0.0
    %5152 = vmatpush1.msra.mxu0 %v4674
    %5153 = vmatprep.subr.mxu0 0.0
    %5154 = vmatpush1.msra.mxu0 %v4675
    %5155 = vmatprep.subr.mxu0 0.0
    %5156 = vmatpush1.msra.mxu0 %v4676
    %5157 = vmatprep.subr.mxu0 0.0
    %5158 = vmatpush1.msra.mxu0 %v4677
    %5159 = vmatprep.subr.mxu0 0.0
    %5160 = vmatpush1.msra.mxu0 %v4678
    %5161 = vmatprep.subr.mxu0 0.0
    %5162 = vmatpush1.msra.mxu0 %v4679
    %5163 = vmatprep.subr.mxu0 0.0
    %5164 = vmatpush1.msra.mxu0 %v4680
    %5165 = vmatprep.subr.mxu0 0.0
    %5166 = vmatpush1.msra.mxu0 %v4681
    %5167 = vmatprep.subr.mxu0 0.0
    %5168 = vmatpush1.msra.mxu0 %v4682
    %5169 = vmatprep.subr.mxu0 0.0
    %5170 = vmatpush1.msra.mxu0 %v4683
    %5171 = vmatprep.subr.mxu0 0.0
    %5172 = vmatpush1.msra.mxu0 %v4684
    %5173 = vmatprep.subr.mxu0 0.0
    %5174 = vmatpush1.msra.mxu0 %v4685
    %5175 = vmatprep.subr.mxu0 0.0
    %5176 = vmatpush1.msra.mxu0 %v4686
    %5177 = vmatprep.subr.mxu0 0.0
    %5178 = vmatpush1.msra.mxu0 %v4687
    %5179 = vmatprep.subr.mxu0 0.0
    %5180 = vmatpush1.msra.mxu0 %v4688
    %5181 = vmatprep.subr.mxu0 0.0
    %5182 = vmatpush1.msra.mxu0 %v4689
    %5183 = vmatprep.subr.mxu0 0.0
    %5184 = vmatpush1.msra.mxu0 %v4690
    %5185 = vmatprep.subr.mxu0 0.0
    %5186 = vmatpush1.msra.mxu0 %v4691
    %5187 = vmatprep.subr.mxu0 0.0
    %5188 = vmatpush1.msra.mxu0 %v4692
    %5189 = vmatprep.subr.mxu0 0.0
    %5190 = vmatpush1.msra.mxu0 %v4693
    %5191 = vmatprep.subr.mxu0 0.0
    %5192 = vmatpush1.msra.mxu0 %v4694
    %5193 = vmatprep.subr.mxu0 0.0
    %5194 = vmatpush1.msra.mxu0 %v4695
    %5195 = vmatprep.subr.mxu0 0.0
    %5196 = vmatpush1.msra.mxu0 %v4696
    %5197 = vmatprep.subr.mxu0 0.0
    %5198 = vmatpush1.msra.mxu0 %v4697
    %5199 = vmatprep.subr.mxu0 0.0
    %5200 = vmatpush1.msra.mxu0 %v4698
    %5201 = vmatprep.subr.mxu0 0.0
    %5202 = vmatpush1.msra.mxu0 %v4699
    %5203 = vmatprep.subr.mxu0 0.0
    %5204 = vmatpush1.msra.mxu0 %v4700
    %5205 = vmatprep.subr.mxu0 0.0
    %5206 = vmatpush1.msra.mxu0 %v4701
    %5207 = vmatprep.subr.mxu0 0.0
    %5208 = vmatpush1.msra.mxu0 %v4702
    %5209 = vmatprep.subr.mxu0 0.0
    %5210 = vmatpush1.msra.mxu0 %v4703
    %5211 = vmatprep.mubr.f32.mxu0 %v4257
    %5212 = vmatmul.mubr.f32.gmra.mrb[0].mxu0 %v4255
    %v5213 = vpop.f32.mrb[0].mxu0
    %v5214 = vadd.f32 %v5129, %v5213
    %v5215 = vpop.f32.mrb[0].mxu0
    %5216 = vmatprep.mubr.f32.mxu0 %v4263
    %5217 = vmatmul.mubr.f32.gmra.mrb[0].mxu0 %v4261
    %v5218 = vpop.f32.mrb[0].mxu0
    %v5219 = vadd.f32 %v5134, %v5218
    %v5220 = vpop.f32.mrb[0].mxu0
    %5221 = vmatprep.mubr.f32.mxu0 %v4269
    %5222 = vmatmul.mubr.f32.gmra.mrb[0].mxu0 %v4267
    %v5223 = vpop.f32.mrb[0].mxu0
    %v5224 = vadd.f32 %v5139, %v5223
    %v5225 = vpop.f32.mrb[0].mxu0
    %5226 = vmatprep.mubr.f32.mxu0 %v4275
    %5227 = vmatmul.mubr.f32.gmra.mrb[0].mxu0 %v4273
    %v5228 = vpop.f32.mrb[0].mxu0
    %v5229 = vadd.f32 %v5144, %v5228
    %v5230 = vpop.f32.mrb[0].mxu0
    %5231 = vdwg.mxu0
    %5232 = vmatprep.subr.mxu0 0.0
    %5233 = vmatpush1.msra.mxu0 %v4704
    %5234 = vmatprep.subr.mxu0 0.0
    %5235 = vmatpush1.msra.mxu0 %v4705
    %5236 = vmatprep.subr.mxu0 0.0
    %5237 = vmatpush1.msra.mxu0 %v4706
    %5238 = vmatprep.subr.mxu0 0.0
    %5239 = vmatpush1.msra.mxu0 %v4707
    %5240 = vmatprep.subr.mxu0 0.0
    %5241 = vmatpush1.msra.mxu0 %v4708
    %5242 = vmatprep.subr.mxu0 0.0
    %5243 = vmatpush1.msra.mxu0 %v4709
    %5244 = vmatprep.subr.mxu0 0.0
    %5245 = vmatpush1.msra.mxu0 %v4710
    %5246 = vmatprep.subr.mxu0 0.0
    %5247 = vmatpush1.msra.mxu0 %v4711
    %5248 = vmatprep.subr.mxu0 0.0
    %5249 = vmatpush1.msra.mxu0 %v4712
    %5250 = vmatprep.subr.mxu0 0.0
    %5251 = vmatpush1.msra.mxu0 %v4713
    %5252 = vmatprep.subr.mxu0 0.0
    %5253 = vmatpush1.msra.mxu0 %v4714
    %5254 = vmatprep.subr.mxu0 0.0
    %5255 = vmatpush1.msra.mxu0 %v4715
    %5256 = vmatprep.subr.mxu0 0.0
    %5257 = vmatpush1.msra.mxu0 %v4716
    %5258 = vmatprep.subr.mxu0 0.0
    %5259 = vmatpush1.msra.mxu0 %v4717
    %5260 = vmatprep.subr.mxu0 0.0
    %5261 = vmatpush1.msra.mxu0 %v4718
    %5262 = vmatprep.subr.mxu0 0.0
    %5263 = vmatpush1.msra.mxu0 %v4719
    %5264 = vmatprep.subr.mxu0 0.0
    %5265 = vmatpush1.msra.mxu0 %v4720
    %5266 = vmatprep.subr.mxu0 0.0
    %5267 = vmatpush1.msra.mxu0 %v4721
    %5268 = vmatprep.subr.mxu0 0.0
    %5269 = vmatpush1.msra.mxu0 %v4722
    %5270 = vmatprep.subr.mxu0 0.0
    %5271 = vmatpush1.msra.mxu0 %v4723
    %5272 = vmatprep.subr.mxu0 0.0
    %5273 = vmatpush1.msra.mxu0 %v4724
    %5274 = vmatprep.subr.mxu0 0.0
    %5275 = vmatpush1.msra.mxu0 %v4725
    %5276 = vmatprep.subr.mxu0 0.0
    %5277 = vmatpush1.msra.mxu0 %v4726
    %5278 = vmatprep.subr.mxu0 0.0
    %5279 = vmatpush1.msra.mxu0 %v4727
    %5280 = vmatprep.subr.mxu0 0.0
    %5281 = vmatpush1.msra.mxu0 %v4728
    %5282 = vmatprep.subr.mxu0 0.0
    %5283 = vmatpush1.msra.mxu0 %v4729
    %5284 = vmatprep.subr.mxu0 0.0
    %5285 = vmatpush1.msra.mxu0 %v4730
    %5286 = vmatprep.subr.mxu0 0.0
    %5287 = vmatpush1.msra.mxu0 %v4731
    %5288 = vmatprep.subr.mxu0 0.0
    %5289 = vmatpush1.msra.mxu0 %v4732
    %5290 = vmatprep.subr.mxu0 0.0
    %5291 = vmatpush1.msra.mxu0 %v4733
    %5292 = vmatprep.subr.mxu0 0.0
    %5293 = vmatpush1.msra.mxu0 %v4734
    %5294 = vmatprep.subr.mxu0 0.0
    %5295 = vmatpush1.msra.mxu0 %v4735
    %5296 = vmatprep.mubr.f32.mxu0 %v4346
    %5297 = vmatmul.mubr.f32.gmra.mrb[0].mxu0 %v4344
    %v5298 = vpop.f32.mrb[0].mxu0
    %v5299 = vadd.f32 %v5214, %v5298
    %v5300 = vpop.f32.mrb[0].mxu0
    %5301 = vmatprep.mubr.f32.mxu0 %v4352
    %5302 = vmatmul.mubr.f32.gmra.mrb[0].mxu0 %v4350
    %v5303 = vpop.f32.mrb[0].mxu0
    %v5304 = vadd.f32 %v5219, %v5303
    %v5305 = vpop.f32.mrb[0].mxu0
    %5306 = vmatprep.mubr.f32.mxu0 %v4358
    %5307 = vmatmul.mubr.f32.gmra.mrb[0].mxu0 %v4356
    %v5308 = vpop.f32.mrb[0].mxu0
    %v5309 = vadd.f32 %v5224, %v5308
    %v5310 = vpop.f32.mrb[0].mxu0
    %5311 = vmatprep.mubr.f32.mxu0 %v4364
    %5312 = vmatmul.mubr.f32.gmra.mrb[0].mxu0 %v4362
    %v5313 = vpop.f32.mrb[0].mxu0
    %v5314 = vadd.f32 %v5229, %v5313
    %v5315 = vpop.f32.mrb[0].mxu0
    %5316 = vdwg.mxu0
    %5317 = vmatprep.subr.mxu0 0.0
    %5318 = vmatpush1.msra.mxu0 %v4736
    %5319 = vmatprep.subr.mxu0 0.0
    %5320 = vmatpush1.msra.mxu0 %v4737
    %5321 = vmatprep.subr.mxu0 0.0
    %5322 = vmatpush1.msra.mxu0 %v4738
    %5323 = vmatprep.subr.mxu0 0.0
    %5324 = vmatpush1.msra.mxu0 %v4739
    %5325 = vmatprep.subr.mxu0 0.0
    %5326 = vmatpush1.msra.mxu0 %v4740
    %5327 = vmatprep.subr.mxu0 0.0
    %5328 = vmatpush1.msra.mxu0 %v4741
    %5329 = vmatprep.subr.mxu0 0.0
    %5330 = vmatpush1.msra.mxu0 %v4742
    %5331 = vmatprep.subr.mxu0 0.0
    %5332 = vmatpush1.msra.mxu0 %v4743
    %5333 = vmatprep.subr.mxu0 0.0
    %5334 = vmatpush1.msra.mxu0 %v4744
    %5335 = vmatprep.subr.mxu0 0.0
    %5336 = vmatpush1.msra.mxu0 %v4745
    %5337 = vmatprep.subr.mxu0 0.0
    %5338 = vmatpush1.msra.mxu0 %v4746
    %5339 = vmatprep.subr.mxu0 0.0
    %5340 = vmatpush1.msra.mxu0 %v4747
    %5341 = vmatprep.subr.mxu0 0.0
    %5342 = vmatpush1.msra.mxu0 %v4748
    %5343 = vmatprep.subr.mxu0 0.0
    %5344 = vmatpush1.msra.mxu0 %v4749
    %5345 = vmatprep.subr.mxu0 0.0
    %5346 = vmatpush1.msra.mxu0 %v4750
    %5347 = vmatprep.subr.mxu0 0.0
    %5348 = vmatpush1.msra.mxu0 %v4751
    %5349 = vmatprep.subr.mxu0 0.0
    %5350 = vmatpush1.msra.mxu0 %v4752
    %5351 = vmatprep.subr.mxu0 0.0
    %5352 = vmatpush1.msra.mxu0 %v4753
    %5353 = vmatprep.subr.mxu0 0.0
    %5354 = vmatpush1.msra.mxu0 %v4754
    %5355 = vmatprep.subr.mxu0 0.0
    %5356 = vmatpush1.msra.mxu0 %v4755
    %5357 = vmatprep.subr.mxu0 0.0
    %5358 = vmatpush1.msra.mxu0 %v4756
    %5359 = vmatprep.subr.mxu0 0.0
    %5360 = vmatpush1.msra.mxu0 %v4757
    %5361 = vmatprep.subr.mxu0 0.0
    %5362 = vmatpush1.msra.mxu0 %v4758
    %5363 = vmatprep.subr.mxu0 0.0
    %5364 = vmatpush1.msra.mxu0 %v4759
    %5365 = vmatprep.subr.mxu0 0.0
    %5366 = vmatpush1.msra.mxu0 %v4760
    %5367 = vmatprep.subr.mxu0 0.0
    %5368 = vmatpush1.msra.mxu0 %v4761
    %5369 = vmatprep.subr.mxu0 0.0
    %5370 = vmatpush1.msra.mxu0 %v4762
    %5371 = vmatprep.subr.mxu0 0.0
    %5372 = vmatpush1.msra.mxu0 %v4763
    %5373 = vmatprep.subr.mxu0 0.0
    %5374 = vmatpush1.msra.mxu0 %v4764
    %5375 = vmatprep.subr.mxu0 0.0
    %5376 = vmatpush1.msra.mxu0 %v4765
    %5377 = vmatprep.subr.mxu0 0.0
    %5378 = vmatpush1.msra.mxu0 %v4766
    %5379 = vmatprep.subr.mxu0 0.0
    %5380 = vmatpush1.msra.mxu0 %v4767
    %5381 = vmatprep.mubr.f32.mxu0 %v4435
    %5382 = vmatmul.mubr.f32.gmra.mrb[0].mxu0 %v4433
    %v5383 = vpop.f32.mrb[0].mxu0
    %v5384 = vadd.f32 %v5299, %v5383
    %v5385 = vpop.f32.mrb[0].mxu0
    %5386 = vmatprep.mubr.f32.mxu0 %v4441
    %5387 = vmatmul.mubr.f32.gmra.mrb[0].mxu0 %v4439
    %v5388 = vpop.f32.mrb[0].mxu0
    %v5389 = vadd.f32 %v5304, %v5388
    %v5390 = vpop.f32.mrb[0].mxu0
    %5391 = vmatprep.mubr.f32.mxu0 %v4447
    %5392 = vmatmul.mubr.f32.gmra.mrb[0].mxu0 %v4445
    %v5393 = vpop.f32.mrb[0].mxu0
    %v5394 = vadd.f32 %v5309, %v5393
    %v5395 = vpop.f32.mrb[0].mxu0
    %5396 = vmatprep.mubr.f32.mxu0 %v4453
    %5397 = vmatmul.mubr.f32.gmra.mrb[0].mxu0 %v4451
    %v5398 = vpop.f32.mrb[0].mxu0
    %v5399 = vadd.f32 %v5314, %v5398
    %v5400 = vpop.f32.mrb[0].mxu0
    %5401 = vdwg.mxu0
    %5402 = vmatprep.subr.mxu0 0.0
    %5403 = vmatpush1.msra.mxu0 %v4768
    %5404 = vmatprep.subr.mxu0 0.0
    %5405 = vmatpush1.msra.mxu0 %v4769
    %5406 = vmatprep.subr.mxu0 0.0
    %5407 = vmatpush1.msra.mxu0 %v4770
    %5408 = vmatprep.subr.mxu0 0.0
    %5409 = vmatpush1.msra.mxu0 %v4771
    %5410 = vmatprep.subr.mxu0 0.0
    %5411 = vmatpush1.msra.mxu0 %v4772
    %5412 = vmatprep.subr.mxu0 0.0
    %5413 = vmatpush1.msra.mxu0 %v4773
    %5414 = vmatprep.subr.mxu0 0.0
    %5415 = vmatpush1.msra.mxu0 %v4774
    %5416 = vmatprep.subr.mxu0 0.0
    %5417 = vmatpush1.msra.mxu0 %v4775
    %5418 = vmatprep.subr.mxu0 0.0
    %5419 = vmatpush1.msra.mxu0 %v4776
    %5420 = vmatprep.subr.mxu0 0.0
    %5421 = vmatpush1.msra.mxu0 %v4777
    %5422 = vmatprep.subr.mxu0 0.0
    %5423 = vmatpush1.msra.mxu0 %v4778
    %5424 = vmatprep.subr.mxu0 0.0
    %5425 = vmatpush1.msra.mxu0 %v4779
    %5426 = vmatprep.subr.mxu0 0.0
    %5427 = vmatpush1.msra.mxu0 %v4780
    %5428 = vmatprep.subr.mxu0 0.0
    %5429 = vmatpush1.msra.mxu0 %v4781
    %5430 = vmatprep.subr.mxu0 0.0
    %5431 = vmatpush1.msra.mxu0 %v4782
    %5432 = vmatprep.subr.mxu0 0.0
    %5433 = vmatpush1.msra.mxu0 %v4783
    %5434 = vmatprep.subr.mxu0 0.0
    %5435 = vmatpush1.msra.mxu0 %v4784
    %5436 = vmatprep.subr.mxu0 0.0
    %5437 = vmatpush1.msra.mxu0 %v4785
    %5438 = vmatprep.subr.mxu0 0.0
    %5439 = vmatpush1.msra.mxu0 %v4786
    %5440 = vmatprep.subr.mxu0 0.0
    %5441 = vmatpush1.msra.mxu0 %v4787
    %5442 = vmatprep.subr.mxu0 0.0
    %5443 = vmatpush1.msra.mxu0 %v4788
    %5444 = vmatprep.subr.mxu0 0.0
    %5445 = vmatpush1.msra.mxu0 %v4789
    %5446 = vmatprep.subr.mxu0 0.0
    %5447 = vmatpush1.msra.mxu0 %v4790
    %5448 = vmatprep.subr.mxu0 0.0
    %5449 = vmatpush1.msra.mxu0 %v4791
    %5450 = vmatprep.subr.mxu0 0.0
    %5451 = vmatpush1.msra.mxu0 %v4792
    %5452 = vmatprep.subr.mxu0 0.0
    %5453 = vmatpush1.msra.mxu0 %v4793
    %5454 = vmatprep.subr.mxu0 0.0
    %5455 = vmatpush1.msra.mxu0 %v4794
    %5456 = vmatprep.subr.mxu0 0.0
    %5457 = vmatpush1.msra.mxu0 %v4795
    %5458 = vmatprep.subr.mxu0 0.0
    %5459 = vmatpush1.msra.mxu0 %v4796
    %5460 = vmatprep.subr.mxu0 0.0
    %5461 = vmatpush1.msra.mxu0 %v4797
    %5462 = vmatprep.subr.mxu0 0.0
    %5463 = vmatpush1.msra.mxu0 %v4798
    %5464 = vmatprep.subr.mxu0 0.0
    %5465 = vmatpush1.msra.mxu0 %v4799
    %5466 = vmatprep.mubr.f32.mxu0 %v4524
    %5467 = vmatmul.mubr.f32.gmra.mrb[0].mxu0 %v4522
    %v5468 = vpop.f32.mrb[0].mxu0
    %v5469 = vadd.f32 %v5384, %v5468
    %v5470 = vpop.f32.mrb[0].mxu0
    %5471 = vmatprep.mubr.f32.mxu0 %v4530
    %5472 = vmatmul.mubr.f32.gmra.mrb[0].mxu0 %v4528
    %v5473 = vpop.f32.mrb[0].mxu0
    %v5474 = vadd.f32 %v5389, %v5473
    %v5475 = vpop.f32.mrb[0].mxu0
    %5476 = vmatprep.mubr.f32.mxu0 %v4536
    %5477 = vmatmul.mubr.f32.gmra.mrb[0].mxu0 %v4534
    %v5478 = vpop.f32.mrb[0].mxu0
    %v5479 = vadd.f32 %v5394, %v5478
    %v5480 = vpop.f32.mrb[0].mxu0
    %5481 = vmatprep.mubr.f32.mxu0 %v4542
    %5482 = vmatmul.mubr.f32.gmra.mrb[0].mxu0 %v4540
    %v5483 = vpop.f32.mrb[0].mxu0
    %v5484 = vadd.f32 %v5399, %v5483
    %v5485 = vpop.f32.mrb[0].mxu0
    %5486 = vdwg.mxu0
    %vm5487 = vcmask 523264
    %5488 = vst.msk [vmem:[%s14] sm:$0xff] %vm5487, %v5469
    %5489 = vst.msk [vmem:[%s14 + $0x8] sm:$0xff] %vm5487, %v5474
    %5490 = vst.msk [vmem:[%s14 + $0x10] sm:$0xff] %vm5487, %v5479
    %5491 = vst.msk [vmem:[%s14 + $0x18] sm:$0xff] %vm5487, %v5484
    // Predicated region
    $region82: #{ffno_forward.1} parent=1 // pred_check
      _
    $region83: #{ffno_forward.1} parent=1 // pred_check_branch
      %5493 = sbr.rel (0) target = $region85
    $region84: #{ffno_forward.1} parent=1 // pred_region
      _
    $region85: #{ffno_forward.1} parent=1 // pred_fallthru
      _
    // Predicated region
    $region86: #{ffno_forward.1} parent=1 // pred_check
      _
    $region87: #{ffno_forward.1} parent=1 // pred_check_branch
      %5495 = sbr.rel (0) target = $region89
    $region88: #{ffno_forward.1} parent=1 // pred_region
      _
    $region89: #{ffno_forward.1} parent=1 // pred_fallthru
      _
    %5496 = vsyncpa [#allocation3], 1
    %5497 = vsyncpa [#allocation5], 1
    %5498 = vsyncpa [#allocation8], 1
    %5499 = vsyncpa [#allocation11], 1

</llo_original>
